<compile_context>
chip_gen: v7x
topology: tpu7x:2x2x1
jax: 0.10.0
libtpu: 0.0.40
codegen_flags: <defaults>
</compile_context>

<pallas_src>
import functools

import jax
import jax.numpy as jnp
from jax import lax
from jax.experimental import pallas as pl
from jax.experimental.pallas import tpu as pltpu

VMEM = pltpu.MemorySpace.VMEM


# --------------------------- in-kernel helpers ---------------------------

def _lstm_cell(gates, c, H):
    # Gate columns are pre-ordered (i, f, o | g): one sigmoid + one tanh.
    sig = jax.nn.sigmoid(gates[:, :3 * H])
    g = jnp.tanh(gates[:, 3 * H:])
    i = sig[:, 0 * H:1 * H]
    f = sig[:, 1 * H:2 * H]
    o = sig[:, 2 * H:3 * H]
    c_new = f * c + i * g
    h_new = o * jnp.tanh(c_new)
    return h_new, c_new


def _lstm_cell_first(gates, H):
    # First step with c0 == 0 (forget path vanishes).
    sig = jax.nn.sigmoid(gates[:, :3 * H])
    g = jnp.tanh(gates[:, 3 * H:])
    i = sig[:, 0 * H:1 * H]
    o = sig[:, 2 * H:3 * H]
    c_new = i * g
    h_new = o * jnp.tanh(c_new)
    return h_new, c_new


def _bn_relu(x, gamma, beta, eps=1e-5):
    # BatchNorm1d (training mode: biased batch statistics) + ReLU, in f32.
    m = jnp.mean(x, axis=0, keepdims=True)
    v = jnp.mean(jnp.square(x - m), axis=0, keepdims=True)
    return jnp.maximum((x - m) * lax.rsqrt(v + eps) * gamma + beta, 0.0)


# --------------------------- fused forward kernel ---------------------------

def _fused_forward_kernel(
    obs_rel_ref, end_pos_ref,
    enc_wx_ref, enc_bc_ref, enc_whh_ref,
    pool_se_w_ref, pool_se_b_ref,
    pool_w1_ref, pool_b1_ref, pool_g1_ref, pool_be1_ref,
    pool_w2_ref, pool_b2_ref, pool_g2_ref, pool_be2_ref,
    ctx_w1_ref, ctx_b1_ref, ctx_g1_ref, ctx_be1_ref,
    ctx_w2_ref, ctx_b2_ref, ctx_g2_ref, ctx_be2_ref,
    dec_wx_ref, dec_bc_ref, dec_whh_ref, dec_whf_ref, dec_bcf_ref,
    dec_whp_ref, dec_bhp_ref,
    out_ref,
    *, obs_len, pred_len, He, Hd, seq_start_end,
):
    B = obs_rel_ref.shape[1]

    # ---------------- Encoder ----------------
    obs_rel = obs_rel_ref[...]                                             # (T, B, 2)
    enc_wx = enc_wx_ref[...]                                               # (2, 4He)
    # All input-gate contributions in one VPU broadcast FMA (no K=2 matmuls).
    gates_x = (obs_rel[:, :, 0:1] * enc_wx[0:1, :].reshape(1, 1, 4 * He)
               + obs_rel[:, :, 1:2] * enc_wx[1:2, :].reshape(1, 1, 4 * He)
               + enc_bc_ref[...].reshape(1, 1, 4 * He))                    # (T, B, 4He)
    enc_wh = enc_whh_ref[...]                                              # (He, 4He)

    h, c = _lstm_cell_first(gates_x[0], He)        # h0 = c0 = 0
    for t in range(1, obs_len):                    # static unroll
        gates = gates_x[t] + jnp.dot(h, enc_wh, preferred_element_type=jnp.float32)
        h, c = _lstm_cell(gates, c, He)
    final_h = h                                                            # (B, He)

    # ---------------- PoolHiddenNet (per static scene, broadcasts) ----------------
    end_pos = end_pos_ref[...]                                             # (B, 2)
    pool_se_w = pool_se_w_ref[...]                                         # (2, E)
    pool_se_b = pool_se_b_ref[...]                                         # (1, E)
    E = pool_se_w.shape[1]
    p_w1 = pool_w1_ref[...]; p_b1 = pool_b1_ref[...]
    p_g1 = pool_g1_ref[...]; p_be1 = pool_be1_ref[...]
    p_w2 = pool_w2_ref[...]; p_b2 = pool_b2_ref[...]
    p_g2 = pool_g2_ref[...]; p_be2 = pool_be2_ref[...]
    Bn = p_w2.shape[1]

    pool_chunks = []
    for (start, end) in seq_start_end:
        n = end - start
        cur_h = final_h[start:end]                                         # (n, He)
        cur_pos = end_pos[start:end]                                       # (n, 2)
        # spatial_embedding is linear: emb(pos_j - pos_i) = emb_j - emb_i + b_se.
        emb_pos = (cur_pos[:, 0:1] * pool_se_w[0:1, :]
                   + cur_pos[:, 1:2] * pool_se_w[1:2, :])                  # (n, E) VPU
        rel_emb = (emb_pos[None, :, :] - emb_pos[:, None, :]
                   + pool_se_b).reshape(n * n, E)                          # row i*n+j
        hid_1 = jnp.broadcast_to(cur_h[None, :, :], (n, n, He)).reshape(n * n, He)
        mlp_in = jnp.concatenate([rel_emb, hid_1], axis=1).astype(jnp.bfloat16)

        pre1 = jnp.dot(mlp_in, p_w1, preferred_element_type=jnp.float32) + p_b1
        h1 = _bn_relu(pre1, p_g1, p_be1)                                   # (n*n, 512)
        pre2 = jnp.dot(h1.astype(jnp.bfloat16), p_w2,
                       preferred_element_type=jnp.float32) + p_b2
        h2 = _bn_relu(pre2, p_g2, p_be2)                                   # (n*n, Bn)

        pooled = jnp.max(h2.reshape(n, n, Bn), axis=1)                     # (n, Bn)
        pool_chunks.append(pooled)
    pool_h = jnp.concatenate(pool_chunks, axis=0)                          # (B, Bn)

    # ---------------- mlp_decoder_context (+ identity add_noise) ----------------
    ctx_in = jnp.concatenate([final_h, pool_h], axis=1).astype(jnp.bfloat16)
    c1 = _bn_relu(jnp.dot(ctx_in, ctx_w1_ref[...],
                          preferred_element_type=jnp.float32) + ctx_b1_ref[...],
                  ctx_g1_ref[...], ctx_be1_ref[...])
    dec_h = _bn_relu(jnp.dot(c1.astype(jnp.bfloat16), ctx_w2_ref[...],
                             preferred_element_type=jnp.float32) + ctx_b2_ref[...],
                     ctx_g2_ref[...], ctx_be2_ref[...])                    # (B, Hd)

    # ---------------- Decoder (hidden2pos folded into recurrence) ----------------
    dec_wx = dec_wx_ref[...]                                               # (2, 4Hd)
    last_rel = obs_rel[obs_len - 1]                                        # (B, 2)
    x0_gates = (last_rel[:, 0:1] * dec_wx[0:1, :]
                + last_rel[:, 1:2] * dec_wx[1:2, :])                       # VPU FMA
    gates0 = (x0_gates
              + jnp.dot(dec_h, dec_whh_ref[...], preferred_element_type=jnp.float32)
              + dec_bc_ref[...])
    h, c = _lstm_cell_first(gates0, Hd)            # decoder_c == 0
    hs = [h]

    dec_whf = dec_whf_ref[...]                     # W_hh + W_hp @ W_x   (Hd, 4Hd)
    dec_bcf = dec_bcf_ref[...]                     # b    + b_hp @ W_x   (1, 4Hd)
    for _ in range(1, pred_len):                   # static unroll
        gates = jnp.dot(h, dec_whf, preferred_element_type=jnp.float32) + dec_bcf
        h, c = _lstm_cell(gates, c, Hd)
        hs.append(h)

    # One batched output projection after the serial chain.
    h_all = jnp.concatenate(hs, axis=0)                                    # (T*B, Hd)
    rel_all = (jnp.dot(h_all, dec_whp_ref[...], preferred_element_type=jnp.float32)
               + dec_bhp_ref[...])                                         # (T*B, 2)
    out_ref[...] = rel_all


# --------------------------- parameters ---------------------------

def init_params(key, cfg):
    """All matrix weights stored pre-transposed (in, out) = torch W^T,
    LSTM gate columns in torch order (i, f, g, o)."""
    E = cfg['embedding_dim']
    He = cfg['encoder_h_dim']
    Hd = cfg['decoder_h_dim']
    M = cfg['mlp_dim']
    Bn = cfg['bottleneck_dim']

    keys = iter(jax.random.split(key, 16))

    def w(shape, scale=0.1):
        return (scale * jax.random.normal(next(keys), shape)).astype(jnp.float32)

    def z(shape):
        return jnp.zeros(shape, jnp.float32)

    def o(shape):
        return jnp.ones(shape, jnp.float32)

    return {
        # Encoder
        'enc_se_w': w((2, E)), 'enc_se_b': z((1, E)),
        'enc_wih': w((E, 4 * He)), 'enc_whh': w((He, 4 * He)),
        'enc_b': z((1, 4 * He)),          # = b_ih + b_hh when porting torch weights
        # PoolHiddenNet (mlp_pre_pool dims: [E+He, 512, bottleneck])
        'pool_se_w': w((2, E)), 'pool_se_b': z((1, E)),
        'pool_w1': w((E + He, 512)), 'pool_b1': z((1, 512)),
        'pool_g1': o((1, 512)), 'pool_be1': z((1, 512)),
        'pool_w2': w((512, Bn)), 'pool_b2': z((1, Bn)),
        'pool_g2': o((1, Bn)), 'pool_be2': z((1, Bn)),
        # mlp_decoder_context (noise_first_dim = 0)
        'ctx_w1': w((He + Bn, M)), 'ctx_b1': z((1, M)),
        'ctx_g1': o((1, M)), 'ctx_be1': z((1, M)),
        'ctx_w2': w((M, Hd)), 'ctx_b2': z((1, Hd)),
        'ctx_g2': o((1, Hd)), 'ctx_be2': z((1, Hd)),
        # Decoder (shares one spatial_embedding for initial input and re-embed)
        'dec_se_w': w((2, E)), 'dec_se_b': z((1, E)),
        'dec_wih': w((E, 4 * Hd)), 'dec_whh': w((Hd, 4 * Hd)),
        'dec_b': z((1, 4 * Hd)),
        'dec_whp': w((Hd, 2)), 'dec_bhp': z((1, 2)),
    }


def _fold_and_flatten(p):
    """Parameter-only preprocessing done OUTSIDE the kernel:
       gate reorder (i,f,g,o)->(i,f,o,g), spatial-embedding fold, decoder
       hidden2pos fold, bf16 cast of the MLP matmul weights."""
    def perm(w4h):
        i, f, g, o = jnp.split(w4h, 4, axis=-1)
        return jnp.concatenate([i, f, o, g], axis=-1)

    enc_wih = perm(p['enc_wih']); enc_whh = perm(p['enc_whh']); enc_b = perm(p['enc_b'])
    dec_wih = perm(p['dec_wih']); dec_whh = perm(p['dec_whh']); dec_b = perm(p['dec_b'])

    enc_wx = p['enc_se_w'] @ enc_wih                        # (2, 4He)
    enc_bc = p['enc_se_b'] @ enc_wih + enc_b                # (1, 4He)
    dec_wx = p['dec_se_w'] @ dec_wih                        # (2, 4Hd)
    dec_bc = p['dec_se_b'] @ dec_wih + dec_b                # (1, 4Hd)
    dec_whf = dec_whh + p['dec_whp'] @ dec_wx               # (Hd, 4Hd)
    dec_bcf = dec_bc + p['dec_bhp'] @ dec_wx                # (1, 4Hd)

    bf16 = lambda x: x.astype(jnp.bfloat16)
    return [
        enc_wx, enc_bc, enc_whh,
        p['pool_se_w'], p['pool_se_b'],
        bf16(p['pool_w1']), p['pool_b1'], p['pool_g1'], p['pool_be1'],
        bf16(p['pool_w2']), p['pool_b2'], p['pool_g2'], p['pool_be2'],
        bf16(p['ctx_w1']), p['ctx_b1'], p['ctx_g1'], p['ctx_be1'],
        bf16(p['ctx_w2']), p['ctx_b2'], p['ctx_g2'], p['ctx_be2'],
        dec_wx, dec_bc, dec_whh, dec_whf, dec_bcf,
        p['dec_whp'], p['dec_bhp'],
    ]


# --------------------------- forward pass ---------------------------

@functools.partial(jax.jit, static_argnames=("seq_start_end", "pred_len", "He", "Hd"))
def _traj_gen_jit(params, obs_traj, obs_traj_rel, *, seq_start_end, pred_len, He, Hd):
    obs_len, batch, _ = obs_traj_rel.shape
    folded = _fold_and_flatten(params)
    end_pos = obs_traj[-1]                                   # only last step is needed
    flat = [obs_traj_rel, end_pos] + folded

    kern = functools.partial(
        _fused_forward_kernel,
        obs_len=int(obs_len), pred_len=int(pred_len),
        He=int(He), Hd=int(Hd),
        seq_start_end=seq_start_end,
    )

    slab = pl.pallas_call(
        kern,
        out_shape=jax.ShapeDtypeStruct((pred_len * batch, 2), jnp.float32),
        in_specs=[pl.BlockSpec(memory_space=VMEM)] * len(flat),
        out_specs=pl.BlockSpec(memory_space=VMEM),
    )(*flat)

    # (pred_len*batch, 2) -> (pred_len, batch, 2)  (matches torch.stack(..., dim=0))
    return slab.reshape(pred_len, batch, 2)


def trajectory_generator_forward(params, obs_traj, obs_traj_rel, seq_start_end, cfg):
    return _traj_gen_jit(
        params, obs_traj, obs_traj_rel,
        seq_start_end=tuple((int(s), int(e)) for (s, e) in seq_start_end),
        pred_len=int(cfg['pred_len']),
        He=int(cfg['encoder_h_dim']),
        Hd=int(cfg['decoder_h_dim']),
    )


# --------------------------- demo ---------------------------

if __name__ == "__main__":
    cfg = dict(obs_len=8, pred_len=8, embedding_dim=16, encoder_h_dim=16,
               decoder_h_dim=32, mlp_dim=64, bottleneck_dim=64)

    key = jax.random.PRNGKey(0)
    k_p, k_a, k_b = jax.random.split(key, 3)
    params = init_params(k_p, cfg)

    batch = 4
    seq_start_end = [(0, 2), (2, 4)]          # two scenes of 2 pedestrians each
    obs_traj = jax.random.normal(k_a, (cfg['obs_len'], batch, 2), dtype=jnp.float32)
    obs_traj_rel = jax.random.normal(k_b, (cfg['obs_len'], batch, 2), dtype=jnp.float32)

    out = trajectory_generator_forward(params, obs_traj, obs_traj_rel,
                                       seq_start_end, cfg)
    out = jax.block_until_ready(out)
    assert out.shape == (cfg['pred_len'], batch, 2)
    assert bool(jnp.all(jnp.isfinite(out)))
    print("KERNEL_OK")
</pallas_src>

<mosaic_0001>
module attributes {stable_mosaic.version = 11 : i64} {
  func.func @_fused_forward_kernel(%arg0: memref<8x4x2xf32, #tpu.memory_space<vmem>>, %arg1: memref<4x2xf32, #tpu.memory_space<vmem>>, %arg2: memref<2x64xf32, #tpu.memory_space<vmem>>, %arg3: memref<1x64xf32, #tpu.memory_space<vmem>>, %arg4: memref<16x64xf32, #tpu.memory_space<vmem>>, %arg5: memref<2x16xf32, #tpu.memory_space<vmem>>, %arg6: memref<1x16xf32, #tpu.memory_space<vmem>>, %arg7: memref<32x512xbf16, #tpu.memory_space<vmem>>, %arg8: memref<1x512xf32, #tpu.memory_space<vmem>>, %arg9: memref<1x512xf32, #tpu.memory_space<vmem>>, %arg10: memref<1x512xf32, #tpu.memory_space<vmem>>, %arg11: memref<512x64xbf16, #tpu.memory_space<vmem>>, %arg12: memref<1x64xf32, #tpu.memory_space<vmem>>, %arg13: memref<1x64xf32, #tpu.memory_space<vmem>>, %arg14: memref<1x64xf32, #tpu.memory_space<vmem>>, %arg15: memref<80x64xbf16, #tpu.memory_space<vmem>>, %arg16: memref<1x64xf32, #tpu.memory_space<vmem>>, %arg17: memref<1x64xf32, #tpu.memory_space<vmem>>, %arg18: memref<1x64xf32, #tpu.memory_space<vmem>>, %arg19: memref<64x32xbf16, #tpu.memory_space<vmem>>, %arg20: memref<1x32xf32, #tpu.memory_space<vmem>>, %arg21: memref<1x32xf32, #tpu.memory_space<vmem>>, %arg22: memref<1x32xf32, #tpu.memory_space<vmem>>, %arg23: memref<2x128xf32, #tpu.memory_space<vmem>>, %arg24: memref<1x128xf32, #tpu.memory_space<vmem>>, %arg25: memref<32x128xf32, #tpu.memory_space<vmem>>, %arg26: memref<32x128xf32, #tpu.memory_space<vmem>>, %arg27: memref<1x128xf32, #tpu.memory_space<vmem>>, %arg28: memref<32x2xf32, #tpu.memory_space<vmem>>, %arg29: memref<1x2xf32, #tpu.memory_space<vmem>>, %arg30: memref<32x2xf32, #tpu.memory_space<vmem>>) attributes {dimension_semantics = [], scalar_prefetch = 0 : i64, scratch_operands = 0 : i64, tpu.core_type = #tpu.core_type<tc>} {
    %c0 = arith.constant 0 : index
    %c0_0 = arith.constant 0 : index
    %c0_1 = arith.constant 0 : index
    %0 = vector.load %arg0[%c0, %c0_0, %c0_1] : memref<8x4x2xf32, #tpu.memory_space<vmem>>, vector<8x4x2xf32>
    %c0_2 = arith.constant 0 : index
    %c0_3 = arith.constant 0 : index
    %1 = vector.load %arg2[%c0_2, %c0_3] : memref<2x64xf32, #tpu.memory_space<vmem>>, vector<2x64xf32>
    %2 = vector.extract_strided_slice %0 {offsets = [0, 0, 0], sizes = [8, 4, 1], strides = [1, 1, 1]} : vector<8x4x2xf32> to vector<8x4x1xf32>
    %3 = vector.extract_strided_slice %1 {offsets = [0, 0], sizes = [1, 64], strides = [1, 1]} : vector<2x64xf32> to vector<1x64xf32>
    %4 = vector.shape_cast %3 : vector<1x64xf32> to vector<1x1x64xf32>
    %5 = vector.broadcast %2 : vector<8x4x1xf32> to vector<8x4x64xf32>
    %6 = vector.broadcast %4 : vector<1x1x64xf32> to vector<8x4x64xf32>
    %7 = arith.mulf %5, %6 : vector<8x4x64xf32>
    %8 = vector.extract_strided_slice %0 {offsets = [0, 0, 1], sizes = [8, 4, 1], strides = [1, 1, 1]} : vector<8x4x2xf32> to vector<8x4x1xf32>
    %9 = vector.extract_strided_slice %1 {offsets = [1, 0], sizes = [1, 64], strides = [1, 1]} : vector<2x64xf32> to vector<1x64xf32>
    %10 = vector.shape_cast %9 : vector<1x64xf32> to vector<1x1x64xf32>
    %11 = vector.broadcast %8 : vector<8x4x1xf32> to vector<8x4x64xf32>
    %12 = vector.broadcast %10 : vector<1x1x64xf32> to vector<8x4x64xf32>
    %13 = arith.mulf %11, %12 : vector<8x4x64xf32>
    %14 = arith.addf %7, %13 : vector<8x4x64xf32>
    %c0_4 = arith.constant 0 : index
    %c0_5 = arith.constant 0 : index
    %15 = vector.load %arg3[%c0_4, %c0_5] : memref<1x64xf32, #tpu.memory_space<vmem>>, vector<1x64xf32>
    %16 = vector.shape_cast %15 : vector<1x64xf32> to vector<1x1x64xf32>
    %17 = vector.broadcast %16 : vector<1x1x64xf32> to vector<8x4x64xf32>
    %18 = arith.addf %14, %17 : vector<8x4x64xf32>
    %c0_6 = arith.constant 0 : index
    %c0_7 = arith.constant 0 : index
    %19 = vector.load %arg4[%c0_6, %c0_7] : memref<16x64xf32, #tpu.memory_space<vmem>>, vector<16x64xf32>
    %20 = vector.extract_strided_slice %18 {offsets = [0, 0, 0], sizes = [1, 4, 64], strides = [1, 1, 1]} : vector<8x4x64xf32> to vector<1x4x64xf32>
    %21 = vector.shape_cast %20 : vector<1x4x64xf32> to vector<4x64xf32>
    %22 = vector.extract_strided_slice %21 {offsets = [0, 0], sizes = [4, 48], strides = [1, 1]} : vector<4x64xf32> to vector<4x48xf32>
    %23 = arith.negf %22 : vector<4x48xf32>
    %24 = math.exp %23 : vector<4x48xf32>
    %cst = arith.constant 1.000000e+00 : f32
    %25 = vector.broadcast %cst : f32 to vector<4x48xf32>
    %26 = arith.addf %25, %24 : vector<4x48xf32>
    %27 = arith.divf %25, %26 : vector<4x48xf32>
    %28 = vector.extract_strided_slice %21 {offsets = [0, 48], sizes = [4, 16], strides = [1, 1]} : vector<4x64xf32> to vector<4x16xf32>
    %29 = math.tanh %28 : vector<4x16xf32>
    %30 = vector.extract_strided_slice %27 {offsets = [0, 0], sizes = [4, 16], strides = [1, 1]} : vector<4x48xf32> to vector<4x16xf32>
    %31 = vector.extract_strided_slice %27 {offsets = [0, 32], sizes = [4, 16], strides = [1, 1]} : vector<4x48xf32> to vector<4x16xf32>
    %32 = arith.mulf %30, %29 : vector<4x16xf32>
    %33 = math.tanh %32 : vector<4x16xf32>
    %34 = arith.mulf %31, %33 : vector<4x16xf32>
    %35 = vector.extract_strided_slice %18 {offsets = [1, 0, 0], sizes = [1, 4, 64], strides = [1, 1, 1]} : vector<8x4x64xf32> to vector<1x4x64xf32>
    %36 = vector.shape_cast %35 : vector<1x4x64xf32> to vector<4x64xf32>
    %cst_8 = arith.constant dense<0.000000e+00> : vector<4x64xf32>
    %37 = tpu.matmul %34, %19, %cst_8 {dimension_numbers = #tpu.dot_dimension_numbers<[1], [0], [0], [1], [0, 0, 1, 1], [], []>} : vector<4x16xf32>, vector<16x64xf32>, vector<4x64xf32> -> vector<4x64xf32>
    %38 = arith.addf %36, %37 : vector<4x64xf32>
    %39 = vector.extract_strided_slice %38 {offsets = [0, 0], sizes = [4, 48], strides = [1, 1]} : vector<4x64xf32> to vector<4x48xf32>
    %40 = arith.negf %39 : vector<4x48xf32>
    %41 = math.exp %40 : vector<4x48xf32>
    %cst_9 = arith.constant 1.000000e+00 : f32
    %42 = vector.broadcast %cst_9 : f32 to vector<4x48xf32>
    %43 = arith.addf %42, %41 : vector<4x48xf32>
    %44 = arith.divf %42, %43 : vector<4x48xf32>
    %45 = vector.extract_strided_slice %38 {offsets = [0, 48], sizes = [4, 16], strides = [1, 1]} : vector<4x64xf32> to vector<4x16xf32>
    %46 = math.tanh %45 : vector<4x16xf32>
    %47 = vector.extract_strided_slice %44 {offsets = [0, 0], sizes = [4, 16], strides = [1, 1]} : vector<4x48xf32> to vector<4x16xf32>
    %48 = vector.extract_strided_slice %44 {offsets = [0, 16], sizes = [4, 16], strides = [1, 1]} : vector<4x48xf32> to vector<4x16xf32>
    %49 = vector.extract_strided_slice %44 {offsets = [0, 32], sizes = [4, 16], strides = [1, 1]} : vector<4x48xf32> to vector<4x16xf32>
    %50 = arith.mulf %48, %32 : vector<4x16xf32>
    %51 = arith.mulf %47, %46 : vector<4x16xf32>
    %52 = arith.addf %50, %51 : vector<4x16xf32>
    %53 = math.tanh %52 : vector<4x16xf32>
    %54 = arith.mulf %49, %53 : vector<4x16xf32>
    %55 = vector.extract_strided_slice %18 {offsets = [2, 0, 0], sizes = [1, 4, 64], strides = [1, 1, 1]} : vector<8x4x64xf32> to vector<1x4x64xf32>
    %56 = vector.shape_cast %55 : vector<1x4x64xf32> to vector<4x64xf32>
    %cst_10 = arith.constant dense<0.000000e+00> : vector<4x64xf32>
    %57 = tpu.matmul %54, %19, %cst_10 {dimension_numbers = #tpu.dot_dimension_numbers<[1], [0], [0], [1], [0, 0, 1, 1], [], []>} : vector<4x16xf32>, vector<16x64xf32>, vector<4x64xf32> -> vector<4x64xf32>
    %58 = arith.addf %56, %57 : vector<4x64xf32>
    %59 = vector.extract_strided_slice %58 {offsets = [0, 0], sizes = [4, 48], strides = [1, 1]} : vector<4x64xf32> to vector<4x48xf32>
    %60 = arith.negf %59 : vector<4x48xf32>
    %61 = math.exp %60 : vector<4x48xf32>
    %cst_11 = arith.constant 1.000000e+00 : f32
    %62 = vector.broadcast %cst_11 : f32 to vector<4x48xf32>
    %63 = arith.addf %62, %61 : vector<4x48xf32>
    %64 = arith.divf %62, %63 : vector<4x48xf32>
    %65 = vector.extract_strided_slice %58 {offsets = [0, 48], sizes = [4, 16], strides = [1, 1]} : vector<4x64xf32> to vector<4x16xf32>
    %66 = math.tanh %65 : vector<4x16xf32>
    %67 = vector.extract_strided_slice %64 {offsets = [0, 0], sizes = [4, 16], strides = [1, 1]} : vector<4x48xf32> to vector<4x16xf32>
    %68 = vector.extract_strided_slice %64 {offsets = [0, 16], sizes = [4, 16], strides = [1, 1]} : vector<4x48xf32> to vector<4x16xf32>
    %69 = vector.extract_strided_slice %64 {offsets = [0, 32], sizes = [4, 16], strides = [1, 1]} : vector<4x48xf32> to vector<4x16xf32>
    %70 = arith.mulf %68, %52 : vector<4x16xf32>
    %71 = arith.mulf %67, %66 : vector<4x16xf32>
    %72 = arith.addf %70, %71 : vector<4x16xf32>
    %73 = math.tanh %72 : vector<4x16xf32>
    %74 = arith.mulf %69, %73 : vector<4x16xf32>
    %75 = vector.extract_strided_slice %18 {offsets = [3, 0, 0], sizes = [1, 4, 64], strides = [1, 1, 1]} : vector<8x4x64xf32> to vector<1x4x64xf32>
    %76 = vector.shape_cast %75 : vector<1x4x64xf32> to vector<4x64xf32>
    %cst_12 = arith.constant dense<0.000000e+00> : vector<4x64xf32>
    %77 = tpu.matmul %74, %19, %cst_12 {dimension_numbers = #tpu.dot_dimension_numbers<[1], [0], [0], [1], [0, 0, 1, 1], [], []>} : vector<4x16xf32>, vector<16x64xf32>, vector<4x64xf32> -> vector<4x64xf32>
    %78 = arith.addf %76, %77 : vector<4x64xf32>
    %79 = vector.extract_strided_slice %78 {offsets = [0, 0], sizes = [4, 48], strides = [1, 1]} : vector<4x64xf32> to vector<4x48xf32>
    %80 = arith.negf %79 : vector<4x48xf32>
    %81 = math.exp %80 : vector<4x48xf32>
    %cst_13 = arith.constant 1.000000e+00 : f32
    %82 = vector.broadcast %cst_13 : f32 to vector<4x48xf32>
    %83 = arith.addf %82, %81 : vector<4x48xf32>
    %84 = arith.divf %82, %83 : vector<4x48xf32>
    %85 = vector.extract_strided_slice %78 {offsets = [0, 48], sizes = [4, 16], strides = [1, 1]} : vector<4x64xf32> to vector<4x16xf32>
    %86 = math.tanh %85 : vector<4x16xf32>
    %87 = vector.extract_strided_slice %84 {offsets = [0, 0], sizes = [4, 16], strides = [1, 1]} : vector<4x48xf32> to vector<4x16xf32>
    %88 = vector.extract_strided_slice %84 {offsets = [0, 16], sizes = [4, 16], strides = [1, 1]} : vector<4x48xf32> to vector<4x16xf32>
    %89 = vector.extract_strided_slice %84 {offsets = [0, 32], sizes = [4, 16], strides = [1, 1]} : vector<4x48xf32> to vector<4x16xf32>
    %90 = arith.mulf %88, %72 : vector<4x16xf32>
    %91 = arith.mulf %87, %86 : vector<4x16xf32>
    %92 = arith.addf %90, %91 : vector<4x16xf32>
    %93 = math.tanh %92 : vector<4x16xf32>
    %94 = arith.mulf %89, %93 : vector<4x16xf32>
    %95 = vector.extract_strided_slice %18 {offsets = [4, 0, 0], sizes = [1, 4, 64], strides = [1, 1, 1]} : vector<8x4x64xf32> to vector<1x4x64xf32>
    %96 = vector.shape_cast %95 : vector<1x4x64xf32> to vector<4x64xf32>
    %cst_14 = arith.constant dense<0.000000e+00> : vector<4x64xf32>
    %97 = tpu.matmul %94, %19, %cst_14 {dimension_numbers = #tpu.dot_dimension_numbers<[1], [0], [0], [1], [0, 0, 1, 1], [], []>} : vector<4x16xf32>, vector<16x64xf32>, vector<4x64xf32> -> vector<4x64xf32>
    %98 = arith.addf %96, %97 : vector<4x64xf32>
    %99 = vector.extract_strided_slice %98 {offsets = [0, 0], sizes = [4, 48], strides = [1, 1]} : vector<4x64xf32> to vector<4x48xf32>
    %100 = arith.negf %99 : vector<4x48xf32>
    %101 = math.exp %100 : vector<4x48xf32>
    %cst_15 = arith.constant 1.000000e+00 : f32
    %102 = vector.broadcast %cst_15 : f32 to vector<4x48xf32>
    %103 = arith.addf %102, %101 : vector<4x48xf32>
    %104 = arith.divf %102, %103 : vector<4x48xf32>
    %105 = vector.extract_strided_slice %98 {offsets = [0, 48], sizes = [4, 16], strides = [1, 1]} : vector<4x64xf32> to vector<4x16xf32>
    %106 = math.tanh %105 : vector<4x16xf32>
    %107 = vector.extract_strided_slice %104 {offsets = [0, 0], sizes = [4, 16], strides = [1, 1]} : vector<4x48xf32> to vector<4x16xf32>
    %108 = vector.extract_strided_slice %104 {offsets = [0, 16], sizes = [4, 16], strides = [1, 1]} : vector<4x48xf32> to vector<4x16xf32>
    %109 = vector.extract_strided_slice %104 {offsets = [0, 32], sizes = [4, 16], strides = [1, 1]} : vector<4x48xf32> to vector<4x16xf32>
    %110 = arith.mulf %108, %92 : vector<4x16xf32>
    %111 = arith.mulf %107, %106 : vector<4x16xf32>
    %112 = arith.addf %110, %111 : vector<4x16xf32>
    %113 = math.tanh %112 : vector<4x16xf32>
    %114 = arith.mulf %109, %113 : vector<4x16xf32>
    %115 = vector.extract_strided_slice %18 {offsets = [5, 0, 0], sizes = [1, 4, 64], strides = [1, 1, 1]} : vector<8x4x64xf32> to vector<1x4x64xf32>
    %116 = vector.shape_cast %115 : vector<1x4x64xf32> to vector<4x64xf32>
    %cst_16 = arith.constant dense<0.000000e+00> : vector<4x64xf32>
    %117 = tpu.matmul %114, %19, %cst_16 {dimension_numbers = #tpu.dot_dimension_numbers<[1], [0], [0], [1], [0, 0, 1, 1], [], []>} : vector<4x16xf32>, vector<16x64xf32>, vector<4x64xf32> -> vector<4x64xf32>
    %118 = arith.addf %116, %117 : vector<4x64xf32>
    %119 = vector.extract_strided_slice %118 {offsets = [0, 0], sizes = [4, 48], strides = [1, 1]} : vector<4x64xf32> to vector<4x48xf32>
    %120 = arith.negf %119 : vector<4x48xf32>
    %121 = math.exp %120 : vector<4x48xf32>
    %cst_17 = arith.constant 1.000000e+00 : f32
    %122 = vector.broadcast %cst_17 : f32 to vector<4x48xf32>
    %123 = arith.addf %122, %121 : vector<4x48xf32>
    %124 = arith.divf %122, %123 : vector<4x48xf32>
    %125 = vector.extract_strided_slice %118 {offsets = [0, 48], sizes = [4, 16], strides = [1, 1]} : vector<4x64xf32> to vector<4x16xf32>
    %126 = math.tanh %125 : vector<4x16xf32>
    %127 = vector.extract_strided_slice %124 {offsets = [0, 0], sizes = [4, 16], strides = [1, 1]} : vector<4x48xf32> to vector<4x16xf32>
    %128 = vector.extract_strided_slice %124 {offsets = [0, 16], sizes = [4, 16], strides = [1, 1]} : vector<4x48xf32> to vector<4x16xf32>
    %129 = vector.extract_strided_slice %124 {offsets = [0, 32], sizes = [4, 16], strides = [1, 1]} : vector<4x48xf32> to vector<4x16xf32>
    %130 = arith.mulf %128, %112 : vector<4x16xf32>
    %131 = arith.mulf %127, %126 : vector<4x16xf32>
    %132 = arith.addf %130, %131 : vector<4x16xf32>
    %133 = math.tanh %132 : vector<4x16xf32>
    %134 = arith.mulf %129, %133 : vector<4x16xf32>
    %135 = vector.extract_strided_slice %18 {offsets = [6, 0, 0], sizes = [1, 4, 64], strides = [1, 1, 1]} : vector<8x4x64xf32> to vector<1x4x64xf32>
    %136 = vector.shape_cast %135 : vector<1x4x64xf32> to vector<4x64xf32>
    %cst_18 = arith.constant dense<0.000000e+00> : vector<4x64xf32>
    %137 = tpu.matmul %134, %19, %cst_18 {dimension_numbers = #tpu.dot_dimension_numbers<[1], [0], [0], [1], [0, 0, 1, 1], [], []>} : vector<4x16xf32>, vector<16x64xf32>, vector<4x64xf32> -> vector<4x64xf32>
    %138 = arith.addf %136, %137 : vector<4x64xf32>
    %139 = vector.extract_strided_slice %138 {offsets = [0, 0], sizes = [4, 48], strides = [1, 1]} : vector<4x64xf32> to vector<4x48xf32>
    %140 = arith.negf %139 : vector<4x48xf32>
    %141 = math.exp %140 : vector<4x48xf32>
    %cst_19 = arith.constant 1.000000e+00 : f32
    %142 = vector.broadcast %cst_19 : f32 to vector<4x48xf32>
    %143 = arith.addf %142, %141 : vector<4x48xf32>
    %144 = arith.divf %142, %143 : vector<4x48xf32>
    %145 = vector.extract_strided_slice %138 {offsets = [0, 48], sizes = [4, 16], strides = [1, 1]} : vector<4x64xf32> to vector<4x16xf32>
    %146 = math.tanh %145 : vector<4x16xf32>
    %147 = vector.extract_strided_slice %144 {offsets = [0, 0], sizes = [4, 16], strides = [1, 1]} : vector<4x48xf32> to vector<4x16xf32>
    %148 = vector.extract_strided_slice %144 {offsets = [0, 16], sizes = [4, 16], strides = [1, 1]} : vector<4x48xf32> to vector<4x16xf32>
    %149 = vector.extract_strided_slice %144 {offsets = [0, 32], sizes = [4, 16], strides = [1, 1]} : vector<4x48xf32> to vector<4x16xf32>
    %150 = arith.mulf %148, %132 : vector<4x16xf32>
    %151 = arith.mulf %147, %146 : vector<4x16xf32>
    %152 = arith.addf %150, %151 : vector<4x16xf32>
    %153 = math.tanh %152 : vector<4x16xf32>
    %154 = arith.mulf %149, %153 : vector<4x16xf32>
    %155 = vector.extract_strided_slice %18 {offsets = [7, 0, 0], sizes = [1, 4, 64], strides = [1, 1, 1]} : vector<8x4x64xf32> to vector<1x4x64xf32>
    %156 = vector.shape_cast %155 : vector<1x4x64xf32> to vector<4x64xf32>
    %cst_20 = arith.constant dense<0.000000e+00> : vector<4x64xf32>
    %157 = tpu.matmul %154, %19, %cst_20 {dimension_numbers = #tpu.dot_dimension_numbers<[1], [0], [0], [1], [0, 0, 1, 1], [], []>} : vector<4x16xf32>, vector<16x64xf32>, vector<4x64xf32> -> vector<4x64xf32>
    %158 = arith.addf %156, %157 : vector<4x64xf32>
    %159 = vector.extract_strided_slice %158 {offsets = [0, 0], sizes = [4, 48], strides = [1, 1]} : vector<4x64xf32> to vector<4x48xf32>
    %160 = arith.negf %159 : vector<4x48xf32>
    %161 = math.exp %160 : vector<4x48xf32>
    %cst_21 = arith.constant 1.000000e+00 : f32
    %162 = vector.broadcast %cst_21 : f32 to vector<4x48xf32>
    %163 = arith.addf %162, %161 : vector<4x48xf32>
    %164 = arith.divf %162, %163 : vector<4x48xf32>
    %165 = vector.extract_strided_slice %158 {offsets = [0, 48], sizes = [4, 16], strides = [1, 1]} : vector<4x64xf32> to vector<4x16xf32>
    %166 = math.tanh %165 : vector<4x16xf32>
    %167 = vector.extract_strided_slice %164 {offsets = [0, 0], sizes = [4, 16], strides = [1, 1]} : vector<4x48xf32> to vector<4x16xf32>
    %168 = vector.extract_strided_slice %164 {offsets = [0, 16], sizes = [4, 16], strides = [1, 1]} : vector<4x48xf32> to vector<4x16xf32>
    %169 = vector.extract_strided_slice %164 {offsets = [0, 32], sizes = [4, 16], strides = [1, 1]} : vector<4x48xf32> to vector<4x16xf32>
    %170 = arith.mulf %168, %152 : vector<4x16xf32>
    %171 = arith.mulf %167, %166 : vector<4x16xf32>
    %172 = arith.addf %170, %171 : vector<4x16xf32>
    %173 = math.tanh %172 : vector<4x16xf32>
    %174 = arith.mulf %169, %173 : vector<4x16xf32>
    %c0_22 = arith.constant 0 : index
    %c0_23 = arith.constant 0 : index
    %175 = vector.load %arg1[%c0_22, %c0_23] : memref<4x2xf32, #tpu.memory_space<vmem>>, vector<4x2xf32>
    %c0_24 = arith.constant 0 : index
    %c0_25 = arith.constant 0 : index
    %176 = vector.load %arg5[%c0_24, %c0_25] : memref<2x16xf32, #tpu.memory_space<vmem>>, vector<2x16xf32>
    %c0_26 = arith.constant 0 : index
    %c0_27 = arith.constant 0 : index
    %177 = vector.load %arg6[%c0_26, %c0_27] : memref<1x16xf32, #tpu.memory_space<vmem>>, vector<1x16xf32>
    %c0_28 = arith.constant 0 : index
    %c0_29 = arith.constant 0 : index
    %178 = vector.load %arg7[%c0_28, %c0_29] : memref<32x512xbf16, #tpu.memory_space<vmem>>, vector<32x512xbf16>
    %c0_30 = arith.constant 0 : index
    %c0_31 = arith.constant 0 : index
    %179 = vector.load %arg8[%c0_30, %c0_31] : memref<1x512xf32, #tpu.memory_space<vmem>>, vector<1x512xf32>
    %c0_32 = arith.constant 0 : index
    %c0_33 = arith.constant 0 : index
    %180 = vector.load %arg9[%c0_32, %c0_33] : memref<1x512xf32, #tpu.memory_space<vmem>>, vector<1x512xf32>
    %c0_34 = arith.constant 0 : index
    %c0_35 = arith.constant 0 : index
    %181 = vector.load %arg10[%c0_34, %c0_35] : memref<1x512xf32, #tpu.memory_space<vmem>>, vector<1x512xf32>
    %c0_36 = arith.constant 0 : index
    %c0_37 = arith.constant 0 : index
    %182 = vector.load %arg11[%c0_36, %c0_37] : memref<512x64xbf16, #tpu.memory_space<vmem>>, vector<512x64xbf16>
    %c0_38 = arith.constant 0 : index
    %c0_39 = arith.constant 0 : index
    %183 = vector.load %arg12[%c0_38, %c0_39] : memref<1x64xf32, #tpu.memory_space<vmem>>, vector<1x64xf32>
    %c0_40 = arith.constant 0 : index
    %c0_41 = arith.constant 0 : index
    %184 = vector.load %arg13[%c0_40, %c0_41] : memref<1x64xf32, #tpu.memory_space<vmem>>, vector<1x64xf32>
    %c0_42 = arith.constant 0 : index
    %c0_43 = arith.constant 0 : index
    %185 = vector.load %arg14[%c0_42, %c0_43] : memref<1x64xf32, #tpu.memory_space<vmem>>, vector<1x64xf32>
    %186 = vector.extract_strided_slice %174 {offsets = [0, 0], sizes = [2, 16], strides = [1, 1]} : vector<4x16xf32> to vector<2x16xf32>
    %187 = vector.extract_strided_slice %175 {offsets = [0, 0], sizes = [2, 2], strides = [1, 1]} : vector<4x2xf32> to vector<2x2xf32>
    %188 = vector.extract_strided_slice %187 {offsets = [0, 0], sizes = [2, 1], strides = [1, 1]} : vector<2x2xf32> to vector<2x1xf32>
    %189 = vector.extract_strided_slice %176 {offsets = [0, 0], sizes = [1, 16], strides = [1, 1]} : vector<2x16xf32> to vector<1x16xf32>
    %190 = vector.broadcast %188 : vector<2x1xf32> to vector<2x16xf32>
    %191 = vector.broadcast %189 : vector<1x16xf32> to vector<2x16xf32>
    %192 = arith.mulf %190, %191 : vector<2x16xf32>
    %193 = vector.extract_strided_slice %187 {offsets = [0, 1], sizes = [2, 1], strides = [1, 1]} : vector<2x2xf32> to vector<2x1xf32>
    %194 = vector.extract_strided_slice %176 {offsets = [1, 0], sizes = [1, 16], strides = [1, 1]} : vector<2x16xf32> to vector<1x16xf32>
    %195 = vector.broadcast %193 : vector<2x1xf32> to vector<2x16xf32>
    %196 = vector.broadcast %194 : vector<1x16xf32> to vector<2x16xf32>
    %197 = arith.mulf %195, %196 : vector<2x16xf32>
    %198 = arith.addf %192, %197 : vector<2x16xf32>
    %199 = vector.shape_cast %198 : vector<2x16xf32> to vector<1x2x16xf32>
    %200 = vector.shape_cast %198 : vector<2x16xf32> to vector<2x1x16xf32>
    %201 = vector.broadcast %199 : vector<1x2x16xf32> to vector<2x2x16xf32>
    %202 = vector.broadcast %200 : vector<2x1x16xf32> to vector<2x2x16xf32>
    %203 = arith.subf %201, %202 : vector<2x2x16xf32>
    %204 = vector.shape_cast %177 : vector<1x16xf32> to vector<1x1x16xf32>
    %205 = vector.broadcast %204 : vector<1x1x16xf32> to vector<2x2x16xf32>
    %206 = arith.addf %203, %205 : vector<2x2x16xf32>
    %207 = vector.shape_cast %206 : vector<2x2x16xf32> to vector<4x16xf32>
    %208 = vector.shape_cast %186 : vector<2x16xf32> to vector<1x2x16xf32>
    %209 = vector.shape_cast %208 : vector<1x2x16xf32> to vector<1x2x16xf32>
    %210 = vector.broadcast %209 : vector<1x2x16xf32> to vector<2x2x16xf32>
    %211 = vector.shape_cast %210 : vector<2x2x16xf32> to vector<4x16xf32>
    %212 = tpu.concatenate %207, %211 in 1 : vector<4x16xf32>, vector<4x16xf32> -> vector<4x32xf32>
    %213 = arith.truncf %212 : vector<4x32xf32> to vector<4x32xbf16>
    %cst_44 = arith.constant dense<0.000000e+00> : vector<4x512xf32>
    %214 = tpu.matmul %213, %178, %cst_44 {dimension_numbers = #tpu.dot_dimension_numbers<[1], [0], [0], [1], [0, 0, 1, 1], [], []>} : vector<4x32xbf16>, vector<32x512xbf16>, vector<4x512xf32> -> vector<4x512xf32>
    %215 = vector.broadcast %179 : vector<1x512xf32> to vector<4x512xf32>
    %216 = arith.addf %214, %215 : vector<4x512xf32>
    %cst_45 = arith.constant dense<0.000000e+00> : vector<512xf32>
    %217 = vector.multi_reduction <add>, %216, %cst_45 [0] : vector<4x512xf32> to vector<512xf32>
    %218 = vector.shape_cast %217 : vector<512xf32> to vector<1x512xf32>
    %cst_46 = arith.constant 4.000000e+00 : f32
    %219 = vector.broadcast %cst_46 : f32 to vector<1x512xf32>
    %220 = arith.divf %218, %219 : vector<1x512xf32>
    %221 = vector.broadcast %220 : vector<1x512xf32> to vector<4x512xf32>
    %222 = arith.subf %216, %221 : vector<4x512xf32>
    %223 = arith.mulf %222, %222 : vector<4x512xf32>
    %cst_47 = arith.constant dense<0.000000e+00> : vector<512xf32>
    %224 = vector.multi_reduction <add>, %223, %cst_47 [0] : vector<4x512xf32> to vector<512xf32>
    %225 = vector.shape_cast %224 : vector<512xf32> to vector<1x512xf32>
    %cst_48 = arith.constant 4.000000e+00 : f32
    %226 = vector.broadcast %cst_48 : f32 to vector<1x512xf32>
    %227 = arith.divf %225, %226 : vector<1x512xf32>
    %228 = vector.broadcast %220 : vector<1x512xf32> to vector<4x512xf32>
    %229 = arith.subf %216, %228 : vector<4x512xf32>
    %cst_49 = arith.constant 9.99999974E-6 : f32
    %230 = vector.broadcast %cst_49 : f32 to vector<1x512xf32>
    %231 = arith.addf %227, %230 : vector<1x512xf32>
    %232 = math.rsqrt %231 : vector<1x512xf32>
    %233 = vector.broadcast %232 : vector<1x512xf32> to vector<4x512xf32>
    %234 = arith.mulf %229, %233 : vector<4x512xf32>
    %235 = vector.broadcast %180 : vector<1x512xf32> to vector<4x512xf32>
    %236 = arith.mulf %234, %235 : vector<4x512xf32>
    %237 = vector.broadcast %181 : vector<1x512xf32> to vector<4x512xf32>
    %238 = arith.addf %236, %237 : vector<4x512xf32>
    %cst_50 = arith.constant 0.000000e+00 : f32
    %239 = vector.broadcast %cst_50 : f32 to vector<4x512xf32>
    %240 = arith.maximumf %238, %239 : vector<4x512xf32>
    %241 = arith.truncf %240 : vector<4x512xf32> to vector<4x512xbf16>
    %cst_51 = arith.constant dense<0.000000e+00> : vector<4x64xf32>
    %242 = tpu.matmul %241, %182, %cst_51 {dimension_numbers = #tpu.dot_dimension_numbers<[1], [0], [0], [1], [0, 0, 1, 1], [], []>} : vector<4x512xbf16>, vector<512x64xbf16>, vector<4x64xf32> -> vector<4x64xf32>
    %243 = vector.broadcast %183 : vector<1x64xf32> to vector<4x64xf32>
    %244 = arith.addf %242, %243 : vector<4x64xf32>
    %cst_52 = arith.constant dense<0.000000e+00> : vector<64xf32>
    %245 = vector.multi_reduction <add>, %244, %cst_52 [0] : vector<4x64xf32> to vector<64xf32>
    %246 = vector.shape_cast %245 : vector<64xf32> to vector<1x64xf32>
    %cst_53 = arith.constant 4.000000e+00 : f32
    %247 = vector.broadcast %cst_53 : f32 to vector<1x64xf32>
    %248 = arith.divf %246, %247 : vector<1x64xf32>
    %249 = vector.broadcast %248 : vector<1x64xf32> to vector<4x64xf32>
    %250 = arith.subf %244, %249 : vector<4x64xf32>
    %251 = arith.mulf %250, %250 : vector<4x64xf32>
    %cst_54 = arith.constant dense<0.000000e+00> : vector<64xf32>
    %252 = vector.multi_reduction <add>, %251, %cst_54 [0] : vector<4x64xf32> to vector<64xf32>
    %253 = vector.shape_cast %252 : vector<64xf32> to vector<1x64xf32>
    %cst_55 = arith.constant 4.000000e+00 : f32
    %254 = vector.broadcast %cst_55 : f32 to vector<1x64xf32>
    %255 = arith.divf %253, %254 : vector<1x64xf32>
    %256 = vector.broadcast %248 : vector<1x64xf32> to vector<4x64xf32>
    %257 = arith.subf %244, %256 : vector<4x64xf32>
    %cst_56 = arith.constant 9.99999974E-6 : f32
    %258 = vector.broadcast %cst_56 : f32 to vector<1x64xf32>
    %259 = arith.addf %255, %258 : vector<1x64xf32>
    %260 = math.rsqrt %259 : vector<1x64xf32>
    %261 = vector.broadcast %260 : vector<1x64xf32> to vector<4x64xf32>
    %262 = arith.mulf %257, %261 : vector<4x64xf32>
    %263 = vector.broadcast %184 : vector<1x64xf32> to vector<4x64xf32>
    %264 = arith.mulf %262, %263 : vector<4x64xf32>
    %265 = vector.broadcast %185 : vector<1x64xf32> to vector<4x64xf32>
    %266 = arith.addf %264, %265 : vector<4x64xf32>
    %cst_57 = arith.constant 0.000000e+00 : f32
    %267 = vector.broadcast %cst_57 : f32 to vector<4x64xf32>
    %268 = arith.maximumf %266, %267 : vector<4x64xf32>
    %269 = vector.shape_cast %268 : vector<4x64xf32> to vector<2x2x64xf32>
    %cst_58 = arith.constant dense<0xFF800000> : vector<2x64xf32>
    %270 = vector.multi_reduction <maximumf>, %269, %cst_58 [1] : vector<2x2x64xf32> to vector<2x64xf32>
    %271 = vector.extract_strided_slice %174 {offsets = [2, 0], sizes = [2, 16], strides = [1, 1]} : vector<4x16xf32> to vector<2x16xf32>
    %272 = vector.extract_strided_slice %175 {offsets = [2, 0], sizes = [2, 2], strides = [1, 1]} : vector<4x2xf32> to vector<2x2xf32>
    %273 = vector.extract_strided_slice %272 {offsets = [0, 0], sizes = [2, 1], strides = [1, 1]} : vector<2x2xf32> to vector<2x1xf32>
    %274 = vector.extract_strided_slice %176 {offsets = [0, 0], sizes = [1, 16], strides = [1, 1]} : vector<2x16xf32> to vector<1x16xf32>
    %275 = vector.broadcast %273 : vector<2x1xf32> to vector<2x16xf32>
    %276 = vector.broadcast %274 : vector<1x16xf32> to vector<2x16xf32>
    %277 = arith.mulf %275, %276 : vector<2x16xf32>
    %278 = vector.extract_strided_slice %272 {offsets = [0, 1], sizes = [2, 1], strides = [1, 1]} : vector<2x2xf32> to vector<2x1xf32>
    %279 = vector.extract_strided_slice %176 {offsets = [1, 0], sizes = [1, 16], strides = [1, 1]} : vector<2x16xf32> to vector<1x16xf32>
    %280 = vector.broadcast %278 : vector<2x1xf32> to vector<2x16xf32>
    %281 = vector.broadcast %279 : vector<1x16xf32> to vector<2x16xf32>
    %282 = arith.mulf %280, %281 : vector<2x16xf32>
    %283 = arith.addf %277, %282 : vector<2x16xf32>
    %284 = vector.shape_cast %283 : vector<2x16xf32> to vector<1x2x16xf32>
    %285 = vector.shape_cast %283 : vector<2x16xf32> to vector<2x1x16xf32>
    %286 = vector.broadcast %284 : vector<1x2x16xf32> to vector<2x2x16xf32>
    %287 = vector.broadcast %285 : vector<2x1x16xf32> to vector<2x2x16xf32>
    %288 = arith.subf %286, %287 : vector<2x2x16xf32>
    %289 = vector.shape_cast %177 : vector<1x16xf32> to vector<1x1x16xf32>
    %290 = vector.broadcast %289 : vector<1x1x16xf32> to vector<2x2x16xf32>
    %291 = arith.addf %288, %290 : vector<2x2x16xf32>
    %292 = vector.shape_cast %291 : vector<2x2x16xf32> to vector<4x16xf32>
    %293 = vector.shape_cast %271 : vector<2x16xf32> to vector<1x2x16xf32>
    %294 = vector.shape_cast %293 : vector<1x2x16xf32> to vector<1x2x16xf32>
    %295 = vector.broadcast %294 : vector<1x2x16xf32> to vector<2x2x16xf32>
    %296 = vector.shape_cast %295 : vector<2x2x16xf32> to vector<4x16xf32>
    %297 = tpu.concatenate %292, %296 in 1 : vector<4x16xf32>, vector<4x16xf32> -> vector<4x32xf32>
    %298 = arith.truncf %297 : vector<4x32xf32> to vector<4x32xbf16>
    %cst_59 = arith.constant dense<0.000000e+00> : vector<4x512xf32>
    %299 = tpu.matmul %298, %178, %cst_59 {dimension_numbers = #tpu.dot_dimension_numbers<[1], [0], [0], [1], [0, 0, 1, 1], [], []>} : vector<4x32xbf16>, vector<32x512xbf16>, vector<4x512xf32> -> vector<4x512xf32>
    %300 = vector.broadcast %179 : vector<1x512xf32> to vector<4x512xf32>
    %301 = arith.addf %299, %300 : vector<4x512xf32>
    %cst_60 = arith.constant dense<0.000000e+00> : vector<512xf32>
    %302 = vector.multi_reduction <add>, %301, %cst_60 [0] : vector<4x512xf32> to vector<512xf32>
    %303 = vector.shape_cast %302 : vector<512xf32> to vector<1x512xf32>
    %cst_61 = arith.constant 4.000000e+00 : f32
    %304 = vector.broadcast %cst_61 : f32 to vector<1x512xf32>
    %305 = arith.divf %303, %304 : vector<1x512xf32>
    %306 = vector.broadcast %305 : vector<1x512xf32> to vector<4x512xf32>
    %307 = arith.subf %301, %306 : vector<4x512xf32>
    %308 = arith.mulf %307, %307 : vector<4x512xf32>
    %cst_62 = arith.constant dense<0.000000e+00> : vector<512xf32>
    %309 = vector.multi_reduction <add>, %308, %cst_62 [0] : vector<4x512xf32> to vector<512xf32>
    %310 = vector.shape_cast %309 : vector<512xf32> to vector<1x512xf32>
    %cst_63 = arith.constant 4.000000e+00 : f32
    %311 = vector.broadcast %cst_63 : f32 to vector<1x512xf32>
    %312 = arith.divf %310, %311 : vector<1x512xf32>
    %313 = vector.broadcast %305 : vector<1x512xf32> to vector<4x512xf32>
    %314 = arith.subf %301, %313 : vector<4x512xf32>
    %cst_64 = arith.constant 9.99999974E-6 : f32
    %315 = vector.broadcast %cst_64 : f32 to vector<1x512xf32>
    %316 = arith.addf %312, %315 : vector<1x512xf32>
    %317 = math.rsqrt %316 : vector<1x512xf32>
    %318 = vector.broadcast %317 : vector<1x512xf32> to vector<4x512xf32>
    %319 = arith.mulf %314, %318 : vector<4x512xf32>
    %320 = vector.broadcast %180 : vector<1x512xf32> to vector<4x512xf32>
    %321 = arith.mulf %319, %320 : vector<4x512xf32>
    %322 = vector.broadcast %181 : vector<1x512xf32> to vector<4x512xf32>
    %323 = arith.addf %321, %322 : vector<4x512xf32>
    %cst_65 = arith.constant 0.000000e+00 : f32
    %324 = vector.broadcast %cst_65 : f32 to vector<4x512xf32>
    %325 = arith.maximumf %323, %324 : vector<4x512xf32>
    %326 = arith.truncf %325 : vector<4x512xf32> to vector<4x512xbf16>
    %cst_66 = arith.constant dense<0.000000e+00> : vector<4x64xf32>
    %327 = tpu.matmul %326, %182, %cst_66 {dimension_numbers = #tpu.dot_dimension_numbers<[1], [0], [0], [1], [0, 0, 1, 1], [], []>} : vector<4x512xbf16>, vector<512x64xbf16>, vector<4x64xf32> -> vector<4x64xf32>
    %328 = vector.broadcast %183 : vector<1x64xf32> to vector<4x64xf32>
    %329 = arith.addf %327, %328 : vector<4x64xf32>
    %cst_67 = arith.constant dense<0.000000e+00> : vector<64xf32>
    %330 = vector.multi_reduction <add>, %329, %cst_67 [0] : vector<4x64xf32> to vector<64xf32>
    %331 = vector.shape_cast %330 : vector<64xf32> to vector<1x64xf32>
    %cst_68 = arith.constant 4.000000e+00 : f32
    %332 = vector.broadcast %cst_68 : f32 to vector<1x64xf32>
    %333 = arith.divf %331, %332 : vector<1x64xf32>
    %334 = vector.broadcast %333 : vector<1x64xf32> to vector<4x64xf32>
    %335 = arith.subf %329, %334 : vector<4x64xf32>
    %336 = arith.mulf %335, %335 : vector<4x64xf32>
    %cst_69 = arith.constant dense<0.000000e+00> : vector<64xf32>
    %337 = vector.multi_reduction <add>, %336, %cst_69 [0] : vector<4x64xf32> to vector<64xf32>
    %338 = vector.shape_cast %337 : vector<64xf32> to vector<1x64xf32>
    %cst_70 = arith.constant 4.000000e+00 : f32
    %339 = vector.broadcast %cst_70 : f32 to vector<1x64xf32>
    %340 = arith.divf %338, %339 : vector<1x64xf32>
    %341 = vector.broadcast %333 : vector<1x64xf32> to vector<4x64xf32>
    %342 = arith.subf %329, %341 : vector<4x64xf32>
    %cst_71 = arith.constant 9.99999974E-6 : f32
    %343 = vector.broadcast %cst_71 : f32 to vector<1x64xf32>
    %344 = arith.addf %340, %343 : vector<1x64xf32>
    %345 = math.rsqrt %344 : vector<1x64xf32>
    %346 = vector.broadcast %345 : vector<1x64xf32> to vector<4x64xf32>
    %347 = arith.mulf %342, %346 : vector<4x64xf32>
    %348 = vector.broadcast %184 : vector<1x64xf32> to vector<4x64xf32>
    %349 = arith.mulf %347, %348 : vector<4x64xf32>
    %350 = vector.broadcast %185 : vector<1x64xf32> to vector<4x64xf32>
    %351 = arith.addf %349, %350 : vector<4x64xf32>
    %cst_72 = arith.constant 0.000000e+00 : f32
    %352 = vector.broadcast %cst_72 : f32 to vector<4x64xf32>
    %353 = arith.maximumf %351, %352 : vector<4x64xf32>
    %354 = vector.shape_cast %353 : vector<4x64xf32> to vector<2x2x64xf32>
    %cst_73 = arith.constant dense<0xFF800000> : vector<2x64xf32>
    %355 = vector.multi_reduction <maximumf>, %354, %cst_73 [1] : vector<2x2x64xf32> to vector<2x64xf32>
    %356 = tpu.concatenate %270, %355 in 0 : vector<2x64xf32>, vector<2x64xf32> -> vector<4x64xf32>
    %357 = tpu.concatenate %174, %356 in 1 : vector<4x16xf32>, vector<4x64xf32> -> vector<4x80xf32>
    %358 = arith.truncf %357 : vector<4x80xf32> to vector<4x80xbf16>
    %c0_74 = arith.constant 0 : index
    %c0_75 = arith.constant 0 : index
    %359 = vector.load %arg15[%c0_74, %c0_75] : memref<80x64xbf16, #tpu.memory_space<vmem>>, vector<80x64xbf16>
    %cst_76 = arith.constant dense<0.000000e+00> : vector<4x64xf32>
    %360 = tpu.matmul %358, %359, %cst_76 {dimension_numbers = #tpu.dot_dimension_numbers<[1], [0], [0], [1], [0, 0, 1, 1], [], []>} : vector<4x80xbf16>, vector<80x64xbf16>, vector<4x64xf32> -> vector<4x64xf32>
    %c0_77 = arith.constant 0 : index
    %c0_78 = arith.constant 0 : index
    %361 = vector.load %arg16[%c0_77, %c0_78] : memref<1x64xf32, #tpu.memory_space<vmem>>, vector<1x64xf32>
    %362 = vector.broadcast %361 : vector<1x64xf32> to vector<4x64xf32>
    %363 = arith.addf %360, %362 : vector<4x64xf32>
    %c0_79 = arith.constant 0 : index
    %c0_80 = arith.constant 0 : index
    %364 = vector.load %arg17[%c0_79, %c0_80] : memref<1x64xf32, #tpu.memory_space<vmem>>, vector<1x64xf32>
    %c0_81 = arith.constant 0 : index
    %c0_82 = arith.constant 0 : index
    %365 = vector.load %arg18[%c0_81, %c0_82] : memref<1x64xf32, #tpu.memory_space<vmem>>, vector<1x64xf32>
    %cst_83 = arith.constant dense<0.000000e+00> : vector<64xf32>
    %366 = vector.multi_reduction <add>, %363, %cst_83 [0] : vector<4x64xf32> to vector<64xf32>
    %367 = vector.shape_cast %366 : vector<64xf32> to vector<1x64xf32>
    %cst_84 = arith.constant 4.000000e+00 : f32
    %368 = vector.broadcast %cst_84 : f32 to vector<1x64xf32>
    %369 = arith.divf %367, %368 : vector<1x64xf32>
    %370 = vector.broadcast %369 : vector<1x64xf32> to vector<4x64xf32>
    %371 = arith.subf %363, %370 : vector<4x64xf32>
    %372 = arith.mulf %371, %371 : vector<4x64xf32>
    %cst_85 = arith.constant dense<0.000000e+00> : vector<64xf32>
    %373 = vector.multi_reduction <add>, %372, %cst_85 [0] : vector<4x64xf32> to vector<64xf32>
    %374 = vector.shape_cast %373 : vector<64xf32> to vector<1x64xf32>
    %cst_86 = arith.constant 4.000000e+00 : f32
    %375 = vector.broadcast %cst_86 : f32 to vector<1x64xf32>
    %376 = arith.divf %374, %375 : vector<1x64xf32>
    %377 = vector.broadcast %369 : vector<1x64xf32> to vector<4x64xf32>
    %378 = arith.subf %363, %377 : vector<4x64xf32>
    %cst_87 = arith.constant 9.99999974E-6 : f32
    %379 = vector.broadcast %cst_87 : f32 to vector<1x64xf32>
    %380 = arith.addf %376, %379 : vector<1x64xf32>
    %381 = math.rsqrt %380 : vector<1x64xf32>
    %382 = vector.broadcast %381 : vector<1x64xf32> to vector<4x64xf32>
    %383 = arith.mulf %378, %382 : vector<4x64xf32>
    %384 = vector.broadcast %364 : vector<1x64xf32> to vector<4x64xf32>
    %385 = arith.mulf %383, %384 : vector<4x64xf32>
    %386 = vector.broadcast %365 : vector<1x64xf32> to vector<4x64xf32>
    %387 = arith.addf %385, %386 : vector<4x64xf32>
    %cst_88 = arith.constant 0.000000e+00 : f32
    %388 = vector.broadcast %cst_88 : f32 to vector<4x64xf32>
    %389 = arith.maximumf %387, %388 : vector<4x64xf32>
    %390 = arith.truncf %389 : vector<4x64xf32> to vector<4x64xbf16>
    %c0_89 = arith.constant 0 : index
    %c0_90 = arith.constant 0 : index
    %391 = vector.load %arg19[%c0_89, %c0_90] : memref<64x32xbf16, #tpu.memory_space<vmem>>, vector<64x32xbf16>
    %cst_91 = arith.constant dense<0.000000e+00> : vector<4x32xf32>
    %392 = tpu.matmul %390, %391, %cst_91 {dimension_numbers = #tpu.dot_dimension_numbers<[1], [0], [0], [1], [0, 0, 1, 1], [], []>} : vector<4x64xbf16>, vector<64x32xbf16>, vector<4x32xf32> -> vector<4x32xf32>
    %c0_92 = arith.constant 0 : index
    %c0_93 = arith.constant 0 : index
    %393 = vector.load %arg20[%c0_92, %c0_93] : memref<1x32xf32, #tpu.memory_space<vmem>>, vector<1x32xf32>
    %394 = vector.broadcast %393 : vector<1x32xf32> to vector<4x32xf32>
    %395 = arith.addf %392, %394 : vector<4x32xf32>
    %c0_94 = arith.constant 0 : index
    %c0_95 = arith.constant 0 : index
    %396 = vector.load %arg21[%c0_94, %c0_95] : memref<1x32xf32, #tpu.memory_space<vmem>>, vector<1x32xf32>
    %c0_96 = arith.constant 0 : index
    %c0_97 = arith.constant 0 : index
    %397 = vector.load %arg22[%c0_96, %c0_97] : memref<1x32xf32, #tpu.memory_space<vmem>>, vector<1x32xf32>
    %cst_98 = arith.constant dense<0.000000e+00> : vector<32xf32>
    %398 = vector.multi_reduction <add>, %395, %cst_98 [0] : vector<4x32xf32> to vector<32xf32>
    %399 = vector.shape_cast %398 : vector<32xf32> to vector<1x32xf32>
    %cst_99 = arith.constant 4.000000e+00 : f32
    %400 = vector.broadcast %cst_99 : f32 to vector<1x32xf32>
    %401 = arith.divf %399, %400 : vector<1x32xf32>
    %402 = vector.broadcast %401 : vector<1x32xf32> to vector<4x32xf32>
    %403 = arith.subf %395, %402 : vector<4x32xf32>
    %404 = arith.mulf %403, %403 : vector<4x32xf32>
    %cst_100 = arith.constant dense<0.000000e+00> : vector<32xf32>
    %405 = vector.multi_reduction <add>, %404, %cst_100 [0] : vector<4x32xf32> to vector<32xf32>
    %406 = vector.shape_cast %405 : vector<32xf32> to vector<1x32xf32>
    %cst_101 = arith.constant 4.000000e+00 : f32
    %407 = vector.broadcast %cst_101 : f32 to vector<1x32xf32>
    %408 = arith.divf %406, %407 : vector<1x32xf32>
    %409 = vector.broadcast %401 : vector<1x32xf32> to vector<4x32xf32>
    %410 = arith.subf %395, %409 : vector<4x32xf32>
    %cst_102 = arith.constant 9.99999974E-6 : f32
    %411 = vector.broadcast %cst_102 : f32 to vector<1x32xf32>
    %412 = arith.addf %408, %411 : vector<1x32xf32>
    %413 = math.rsqrt %412 : vector<1x32xf32>
    %414 = vector.broadcast %413 : vector<1x32xf32> to vector<4x32xf32>
    %415 = arith.mulf %410, %414 : vector<4x32xf32>
    %416 = vector.broadcast %396 : vector<1x32xf32> to vector<4x32xf32>
    %417 = arith.mulf %415, %416 : vector<4x32xf32>
    %418 = vector.broadcast %397 : vector<1x32xf32> to vector<4x32xf32>
    %419 = arith.addf %417, %418 : vector<4x32xf32>
    %cst_103 = arith.constant 0.000000e+00 : f32
    %420 = vector.broadcast %cst_103 : f32 to vector<4x32xf32>
    %421 = arith.maximumf %419, %420 : vector<4x32xf32>
    %c0_104 = arith.constant 0 : index
    %c0_105 = arith.constant 0 : index
    %422 = vector.load %arg23[%c0_104, %c0_105] : memref<2x128xf32, #tpu.memory_space<vmem>>, vector<2x128xf32>
    %423 = vector.extract_strided_slice %0 {offsets = [7, 0, 0], sizes = [1, 4, 2], strides = [1, 1, 1]} : vector<8x4x2xf32> to vector<1x4x2xf32>
    %424 = vector.shape_cast %423 : vector<1x4x2xf32> to vector<4x2xf32>
    %425 = vector.extract_strided_slice %424 {offsets = [0, 0], sizes = [4, 1], strides = [1, 1]} : vector<4x2xf32> to vector<4x1xf32>
    %426 = vector.extract_strided_slice %422 {offsets = [0, 0], sizes = [1, 128], strides = [1, 1]} : vector<2x128xf32> to vector<1x128xf32>
    %427 = vector.broadcast %425 : vector<4x1xf32> to vector<4x128xf32>
    %428 = vector.broadcast %426 : vector<1x128xf32> to vector<4x128xf32>
    %429 = arith.mulf %427, %428 : vector<4x128xf32>
    %430 = vector.extract_strided_slice %424 {offsets = [0, 1], sizes = [4, 1], strides = [1, 1]} : vector<4x2xf32> to vector<4x1xf32>
    %431 = vector.extract_strided_slice %422 {offsets = [1, 0], sizes = [1, 128], strides = [1, 1]} : vector<2x128xf32> to vector<1x128xf32>
    %432 = vector.broadcast %430 : vector<4x1xf32> to vector<4x128xf32>
    %433 = vector.broadcast %431 : vector<1x128xf32> to vector<4x128xf32>
    %434 = arith.mulf %432, %433 : vector<4x128xf32>
    %435 = arith.addf %429, %434 : vector<4x128xf32>
    %c0_106 = arith.constant 0 : index
    %c0_107 = arith.constant 0 : index
    %436 = vector.load %arg25[%c0_106, %c0_107] : memref<32x128xf32, #tpu.memory_space<vmem>>, vector<32x128xf32>
    %cst_108 = arith.constant dense<0.000000e+00> : vector<4x128xf32>
    %437 = tpu.matmul %421, %436, %cst_108 {dimension_numbers = #tpu.dot_dimension_numbers<[1], [0], [0], [1], [0, 0, 1, 1], [], []>} : vector<4x32xf32>, vector<32x128xf32>, vector<4x128xf32> -> vector<4x128xf32>
    %438 = arith.addf %435, %437 : vector<4x128xf32>
    %c0_109 = arith.constant 0 : index
    %c0_110 = arith.constant 0 : index
    %439 = vector.load %arg24[%c0_109, %c0_110] : memref<1x128xf32, #tpu.memory_space<vmem>>, vector<1x128xf32>
    %440 = vector.broadcast %439 : vector<1x128xf32> to vector<4x128xf32>
    %441 = arith.addf %438, %440 : vector<4x128xf32>
    %442 = vector.extract_strided_slice %441 {offsets = [0, 0], sizes = [4, 96], strides = [1, 1]} : vector<4x128xf32> to vector<4x96xf32>
    %443 = arith.negf %442 : vector<4x96xf32>
    %444 = math.exp %443 : vector<4x96xf32>
    %cst_111 = arith.constant 1.000000e+00 : f32
    %445 = vector.broadcast %cst_111 : f32 to vector<4x96xf32>
    %446 = arith.addf %445, %444 : vector<4x96xf32>
    %447 = arith.divf %445, %446 : vector<4x96xf32>
    %448 = vector.extract_strided_slice %441 {offsets = [0, 96], sizes = [4, 32], strides = [1, 1]} : vector<4x128xf32> to vector<4x32xf32>
    %449 = math.tanh %448 : vector<4x32xf32>
    %450 = vector.extract_strided_slice %447 {offsets = [0, 0], sizes = [4, 32], strides = [1, 1]} : vector<4x96xf32> to vector<4x32xf32>
    %451 = vector.extract_strided_slice %447 {offsets = [0, 64], sizes = [4, 32], strides = [1, 1]} : vector<4x96xf32> to vector<4x32xf32>
    %452 = arith.mulf %450, %449 : vector<4x32xf32>
    %453 = math.tanh %452 : vector<4x32xf32>
    %454 = arith.mulf %451, %453 : vector<4x32xf32>
    %c0_112 = arith.constant 0 : index
    %c0_113 = arith.constant 0 : index
    %455 = vector.load %arg26[%c0_112, %c0_113] : memref<32x128xf32, #tpu.memory_space<vmem>>, vector<32x128xf32>
    %c0_114 = arith.constant 0 : index
    %c0_115 = arith.constant 0 : index
    %456 = vector.load %arg27[%c0_114, %c0_115] : memref<1x128xf32, #tpu.memory_space<vmem>>, vector<1x128xf32>
    %cst_116 = arith.constant dense<0.000000e+00> : vector<4x128xf32>
    %457 = tpu.matmul %454, %455, %cst_116 {dimension_numbers = #tpu.dot_dimension_numbers<[1], [0], [0], [1], [0, 0, 1, 1], [], []>} : vector<4x32xf32>, vector<32x128xf32>, vector<4x128xf32> -> vector<4x128xf32>
    %458 = vector.broadcast %456 : vector<1x128xf32> to vector<4x128xf32>
    %459 = arith.addf %457, %458 : vector<4x128xf32>
    %460 = vector.extract_strided_slice %459 {offsets = [0, 0], sizes = [4, 96], strides = [1, 1]} : vector<4x128xf32> to vector<4x96xf32>
    %461 = arith.negf %460 : vector<4x96xf32>
    %462 = math.exp %461 : vector<4x96xf32>
    %cst_117 = arith.constant 1.000000e+00 : f32
    %463 = vector.broadcast %cst_117 : f32 to vector<4x96xf32>
    %464 = arith.addf %463, %462 : vector<4x96xf32>
    %465 = arith.divf %463, %464 : vector<4x96xf32>
    %466 = vector.extract_strided_slice %459 {offsets = [0, 96], sizes = [4, 32], strides = [1, 1]} : vector<4x128xf32> to vector<4x32xf32>
    %467 = math.tanh %466 : vector<4x32xf32>
    %468 = vector.extract_strided_slice %465 {offsets = [0, 0], sizes = [4, 32], strides = [1, 1]} : vector<4x96xf32> to vector<4x32xf32>
    %469 = vector.extract_strided_slice %465 {offsets = [0, 32], sizes = [4, 32], strides = [1, 1]} : vector<4x96xf32> to vector<4x32xf32>
    %470 = vector.extract_strided_slice %465 {offsets = [0, 64], sizes = [4, 32], strides = [1, 1]} : vector<4x96xf32> to vector<4x32xf32>
    %471 = arith.mulf %469, %452 : vector<4x32xf32>
    %472 = arith.mulf %468, %467 : vector<4x32xf32>
    %473 = arith.addf %471, %472 : vector<4x32xf32>
    %474 = math.tanh %473 : vector<4x32xf32>
    %475 = arith.mulf %470, %474 : vector<4x32xf32>
    %cst_118 = arith.constant dense<0.000000e+00> : vector<4x128xf32>
    %476 = tpu.matmul %475, %455, %cst_118 {dimension_numbers = #tpu.dot_dimension_numbers<[1], [0], [0], [1], [0, 0, 1, 1], [], []>} : vector<4x32xf32>, vector<32x128xf32>, vector<4x128xf32> -> vector<4x128xf32>
    %477 = vector.broadcast %456 : vector<1x128xf32> to vector<4x128xf32>
    %478 = arith.addf %476, %477 : vector<4x128xf32>
    %479 = vector.extract_strided_slice %478 {offsets = [0, 0], sizes = [4, 96], strides = [1, 1]} : vector<4x128xf32> to vector<4x96xf32>
    %480 = arith.negf %479 : vector<4x96xf32>
    %481 = math.exp %480 : vector<4x96xf32>
    %cst_119 = arith.constant 1.000000e+00 : f32
    %482 = vector.broadcast %cst_119 : f32 to vector<4x96xf32>
    %483 = arith.addf %482, %481 : vector<4x96xf32>
    %484 = arith.divf %482, %483 : vector<4x96xf32>
    %485 = vector.extract_strided_slice %478 {offsets = [0, 96], sizes = [4, 32], strides = [1, 1]} : vector<4x128xf32> to vector<4x32xf32>
    %486 = math.tanh %485 : vector<4x32xf32>
    %487 = vector.extract_strided_slice %484 {offsets = [0, 0], sizes = [4, 32], strides = [1, 1]} : vector<4x96xf32> to vector<4x32xf32>
    %488 = vector.extract_strided_slice %484 {offsets = [0, 32], sizes = [4, 32], strides = [1, 1]} : vector<4x96xf32> to vector<4x32xf32>
    %489 = vector.extract_strided_slice %484 {offsets = [0, 64], sizes = [4, 32], strides = [1, 1]} : vector<4x96xf32> to vector<4x32xf32>
    %490 = arith.mulf %488, %473 : vector<4x32xf32>
    %491 = arith.mulf %487, %486 : vector<4x32xf32>
    %492 = arith.addf %490, %491 : vector<4x32xf32>
    %493 = math.tanh %492 : vector<4x32xf32>
    %494 = arith.mulf %489, %493 : vector<4x32xf32>
    %cst_120 = arith.constant dense<0.000000e+00> : vector<4x128xf32>
    %495 = tpu.matmul %494, %455, %cst_120 {dimension_numbers = #tpu.dot_dimension_numbers<[1], [0], [0], [1], [0, 0, 1, 1], [], []>} : vector<4x32xf32>, vector<32x128xf32>, vector<4x128xf32> -> vector<4x128xf32>
    %496 = vector.broadcast %456 : vector<1x128xf32> to vector<4x128xf32>
    %497 = arith.addf %495, %496 : vector<4x128xf32>
    %498 = vector.extract_strided_slice %497 {offsets = [0, 0], sizes = [4, 96], strides = [1, 1]} : vector<4x128xf32> to vector<4x96xf32>
    %499 = arith.negf %498 : vector<4x96xf32>
    %500 = math.exp %499 : vector<4x96xf32>
    %cst_121 = arith.constant 1.000000e+00 : f32
    %501 = vector.broadcast %cst_121 : f32 to vector<4x96xf32>
    %502 = arith.addf %501, %500 : vector<4x96xf32>
    %503 = arith.divf %501, %502 : vector<4x96xf32>
    %504 = vector.extract_strided_slice %497 {offsets = [0, 96], sizes = [4, 32], strides = [1, 1]} : vector<4x128xf32> to vector<4x32xf32>
    %505 = math.tanh %504 : vector<4x32xf32>
    %506 = vector.extract_strided_slice %503 {offsets = [0, 0], sizes = [4, 32], strides = [1, 1]} : vector<4x96xf32> to vector<4x32xf32>
    %507 = vector.extract_strided_slice %503 {offsets = [0, 32], sizes = [4, 32], strides = [1, 1]} : vector<4x96xf32> to vector<4x32xf32>
    %508 = vector.extract_strided_slice %503 {offsets = [0, 64], sizes = [4, 32], strides = [1, 1]} : vector<4x96xf32> to vector<4x32xf32>
    %509 = arith.mulf %507, %492 : vector<4x32xf32>
    %510 = arith.mulf %506, %505 : vector<4x32xf32>
    %511 = arith.addf %509, %510 : vector<4x32xf32>
    %512 = math.tanh %511 : vector<4x32xf32>
    %513 = arith.mulf %508, %512 : vector<4x32xf32>
    %cst_122 = arith.constant dense<0.000000e+00> : vector<4x128xf32>
    %514 = tpu.matmul %513, %455, %cst_122 {dimension_numbers = #tpu.dot_dimension_numbers<[1], [0], [0], [1], [0, 0, 1, 1], [], []>} : vector<4x32xf32>, vector<32x128xf32>, vector<4x128xf32> -> vector<4x128xf32>
    %515 = vector.broadcast %456 : vector<1x128xf32> to vector<4x128xf32>
    %516 = arith.addf %514, %515 : vector<4x128xf32>
    %517 = vector.extract_strided_slice %516 {offsets = [0, 0], sizes = [4, 96], strides = [1, 1]} : vector<4x128xf32> to vector<4x96xf32>
    %518 = arith.negf %517 : vector<4x96xf32>
    %519 = math.exp %518 : vector<4x96xf32>
    %cst_123 = arith.constant 1.000000e+00 : f32
    %520 = vector.broadcast %cst_123 : f32 to vector<4x96xf32>
    %521 = arith.addf %520, %519 : vector<4x96xf32>
    %522 = arith.divf %520, %521 : vector<4x96xf32>
    %523 = vector.extract_strided_slice %516 {offsets = [0, 96], sizes = [4, 32], strides = [1, 1]} : vector<4x128xf32> to vector<4x32xf32>
    %524 = math.tanh %523 : vector<4x32xf32>
    %525 = vector.extract_strided_slice %522 {offsets = [0, 0], sizes = [4, 32], strides = [1, 1]} : vector<4x96xf32> to vector<4x32xf32>
    %526 = vector.extract_strided_slice %522 {offsets = [0, 32], sizes = [4, 32], strides = [1, 1]} : vector<4x96xf32> to vector<4x32xf32>
    %527 = vector.extract_strided_slice %522 {offsets = [0, 64], sizes = [4, 32], strides = [1, 1]} : vector<4x96xf32> to vector<4x32xf32>
    %528 = arith.mulf %526, %511 : vector<4x32xf32>
    %529 = arith.mulf %525, %524 : vector<4x32xf32>
    %530 = arith.addf %528, %529 : vector<4x32xf32>
    %531 = math.tanh %530 : vector<4x32xf32>
    %532 = arith.mulf %527, %531 : vector<4x32xf32>
    %cst_124 = arith.constant dense<0.000000e+00> : vector<4x128xf32>
    %533 = tpu.matmul %532, %455, %cst_124 {dimension_numbers = #tpu.dot_dimension_numbers<[1], [0], [0], [1], [0, 0, 1, 1], [], []>} : vector<4x32xf32>, vector<32x128xf32>, vector<4x128xf32> -> vector<4x128xf32>
    %534 = vector.broadcast %456 : vector<1x128xf32> to vector<4x128xf32>
    %535 = arith.addf %533, %534 : vector<4x128xf32>
    %536 = vector.extract_strided_slice %535 {offsets = [0, 0], sizes = [4, 96], strides = [1, 1]} : vector<4x128xf32> to vector<4x96xf32>
    %537 = arith.negf %536 : vector<4x96xf32>
    %538 = math.exp %537 : vector<4x96xf32>
    %cst_125 = arith.constant 1.000000e+00 : f32
    %539 = vector.broadcast %cst_125 : f32 to vector<4x96xf32>
    %540 = arith.addf %539, %538 : vector<4x96xf32>
    %541 = arith.divf %539, %540 : vector<4x96xf32>
    %542 = vector.extract_strided_slice %535 {offsets = [0, 96], sizes = [4, 32], strides = [1, 1]} : vector<4x128xf32> to vector<4x32xf32>
    %543 = math.tanh %542 : vector<4x32xf32>
    %544 = vector.extract_strided_slice %541 {offsets = [0, 0], sizes = [4, 32], strides = [1, 1]} : vector<4x96xf32> to vector<4x32xf32>
    %545 = vector.extract_strided_slice %541 {offsets = [0, 32], sizes = [4, 32], strides = [1, 1]} : vector<4x96xf32> to vector<4x32xf32>
    %546 = vector.extract_strided_slice %541 {offsets = [0, 64], sizes = [4, 32], strides = [1, 1]} : vector<4x96xf32> to vector<4x32xf32>
    %547 = arith.mulf %545, %530 : vector<4x32xf32>
    %548 = arith.mulf %544, %543 : vector<4x32xf32>
    %549 = arith.addf %547, %548 : vector<4x32xf32>
    %550 = math.tanh %549 : vector<4x32xf32>
    %551 = arith.mulf %546, %550 : vector<4x32xf32>
    %cst_126 = arith.constant dense<0.000000e+00> : vector<4x128xf32>
    %552 = tpu.matmul %551, %455, %cst_126 {dimension_numbers = #tpu.dot_dimension_numbers<[1], [0], [0], [1], [0, 0, 1, 1], [], []>} : vector<4x32xf32>, vector<32x128xf32>, vector<4x128xf32> -> vector<4x128xf32>
    %553 = vector.broadcast %456 : vector<1x128xf32> to vector<4x128xf32>
    %554 = arith.addf %552, %553 : vector<4x128xf32>
    %555 = vector.extract_strided_slice %554 {offsets = [0, 0], sizes = [4, 96], strides = [1, 1]} : vector<4x128xf32> to vector<4x96xf32>
    %556 = arith.negf %555 : vector<4x96xf32>
    %557 = math.exp %556 : vector<4x96xf32>
    %cst_127 = arith.constant 1.000000e+00 : f32
    %558 = vector.broadcast %cst_127 : f32 to vector<4x96xf32>
    %559 = arith.addf %558, %557 : vector<4x96xf32>
    %560 = arith.divf %558, %559 : vector<4x96xf32>
    %561 = vector.extract_strided_slice %554 {offsets = [0, 96], sizes = [4, 32], strides = [1, 1]} : vector<4x128xf32> to vector<4x32xf32>
    %562 = math.tanh %561 : vector<4x32xf32>
    %563 = vector.extract_strided_slice %560 {offsets = [0, 0], sizes = [4, 32], strides = [1, 1]} : vector<4x96xf32> to vector<4x32xf32>
    %564 = vector.extract_strided_slice %560 {offsets = [0, 32], sizes = [4, 32], strides = [1, 1]} : vector<4x96xf32> to vector<4x32xf32>
    %565 = vector.extract_strided_slice %560 {offsets = [0, 64], sizes = [4, 32], strides = [1, 1]} : vector<4x96xf32> to vector<4x32xf32>
    %566 = arith.mulf %564, %549 : vector<4x32xf32>
    %567 = arith.mulf %563, %562 : vector<4x32xf32>
    %568 = arith.addf %566, %567 : vector<4x32xf32>
    %569 = math.tanh %568 : vector<4x32xf32>
    %570 = arith.mulf %565, %569 : vector<4x32xf32>
    %cst_128 = arith.constant dense<0.000000e+00> : vector<4x128xf32>
    %571 = tpu.matmul %570, %455, %cst_128 {dimension_numbers = #tpu.dot_dimension_numbers<[1], [0], [0], [1], [0, 0, 1, 1], [], []>} : vector<4x32xf32>, vector<32x128xf32>, vector<4x128xf32> -> vector<4x128xf32>
    %572 = vector.broadcast %456 : vector<1x128xf32> to vector<4x128xf32>
    %573 = arith.addf %571, %572 : vector<4x128xf32>
    %574 = vector.extract_strided_slice %573 {offsets = [0, 0], sizes = [4, 96], strides = [1, 1]} : vector<4x128xf32> to vector<4x96xf32>
    %575 = arith.negf %574 : vector<4x96xf32>
    %576 = math.exp %575 : vector<4x96xf32>
    %cst_129 = arith.constant 1.000000e+00 : f32
    %577 = vector.broadcast %cst_129 : f32 to vector<4x96xf32>
    %578 = arith.addf %577, %576 : vector<4x96xf32>
    %579 = arith.divf %577, %578 : vector<4x96xf32>
    %580 = vector.extract_strided_slice %573 {offsets = [0, 96], sizes = [4, 32], strides = [1, 1]} : vector<4x128xf32> to vector<4x32xf32>
    %581 = math.tanh %580 : vector<4x32xf32>
    %582 = vector.extract_strided_slice %579 {offsets = [0, 0], sizes = [4, 32], strides = [1, 1]} : vector<4x96xf32> to vector<4x32xf32>
    %583 = vector.extract_strided_slice %579 {offsets = [0, 32], sizes = [4, 32], strides = [1, 1]} : vector<4x96xf32> to vector<4x32xf32>
    %584 = vector.extract_strided_slice %579 {offsets = [0, 64], sizes = [4, 32], strides = [1, 1]} : vector<4x96xf32> to vector<4x32xf32>
    %585 = arith.mulf %583, %568 : vector<4x32xf32>
    %586 = arith.mulf %582, %581 : vector<4x32xf32>
    %587 = arith.addf %585, %586 : vector<4x32xf32>
    %588 = math.tanh %587 : vector<4x32xf32>
    %589 = arith.mulf %584, %588 : vector<4x32xf32>
    %590 = tpu.concatenate %454, %475, %494, %513, %532, %551, %570, %589 in 0 : vector<4x32xf32>, vector<4x32xf32>, vector<4x32xf32>, vector<4x32xf32>, vector<4x32xf32>, vector<4x32xf32>, vector<4x32xf32>, vector<4x32xf32> -> vector<32x32xf32>
    %c0_130 = arith.constant 0 : index
    %c0_131 = arith.constant 0 : index
    %591 = vector.load %arg28[%c0_130, %c0_131] : memref<32x2xf32, #tpu.memory_space<vmem>>, vector<32x2xf32>
    %cst_132 = arith.constant dense<0.000000e+00> : vector<32x2xf32>
    %592 = tpu.matmul %590, %591, %cst_132 {dimension_numbers = #tpu.dot_dimension_numbers<[1], [0], [0], [1], [0, 0, 1, 1], [], []>} : vector<32x32xf32>, vector<32x2xf32>, vector<32x2xf32> -> vector<32x2xf32>
    %c0_133 = arith.constant 0 : index
    %c0_134 = arith.constant 0 : index
    %593 = vector.load %arg29[%c0_133, %c0_134] : memref<1x2xf32, #tpu.memory_space<vmem>>, vector<1x2xf32>
    %594 = vector.broadcast %593 : vector<1x2xf32> to vector<32x2xf32>
    %595 = arith.addf %592, %594 : vector<32x2xf32>
    %c0_135 = arith.constant 0 : index
    %c0_136 = arith.constant 0 : index
    %596 = vector.load %arg30[%c0_135, %c0_136] : memref<32x2xf32, #tpu.memory_space<vmem>>, vector<32x2xf32>
    tpu.vector_store %arg30[%c0_135, %c0_136], %595 {strides = array<i32>} : memref<32x2xf32, #tpu.memory_space<vmem>>, vector<32x2xf32>,
    return
  }
}

</mosaic_0001>

<llo_original>
// kernel: _traj_gen_jit.1
$region0: #{_traj_gen_jit.1}
  #allocation0 [shape = 'u32[]', space=smem, size = 0x4, offset = 0x4, fixed_abs, tag = 'smem constant byte address 0x4 - core index']
  #allocation1 [shape = 'u32[144,128]{1,0:T(1,128)}', space=vmem, size = 0x12000, scoped, tag = 'internal scratch']
  %s0 = inlined_call_operand.smem [shape: u32[31], index: -1, kind: input, shape index: {}]
  %s1 = sld [smem:[%s0]]
  %s2 = scalar_lea.smem %s0, 1
  %s3 = sld [smem:[%s2]]
  %s4 = scalar_lea.smem %s0, 2
  %s5 = sld [smem:[%s4]]
  %s6 = scalar_lea.smem %s0, 3
  %s7 = sld [smem:[%s6]]
  %s8 = scalar_lea.smem %s0, 4
  %s9 = sld [smem:[%s8]]
  %s10 = scalar_lea.smem %s0, 5
  %s11 = sld [smem:[%s10]]
  %s12 = scalar_lea.smem %s0, 6
  %s13 = sld [smem:[%s12]]
  %s14 = scalar_lea.smem %s0, 7
  %s15 = sld [smem:[%s14]]
  %s16 = scalar_lea.smem %s0, 8
  %s17 = sld [smem:[%s16]]
  %s18 = scalar_lea.smem %s0, 9
  %s19 = sld [smem:[%s18]]
  %s20 = scalar_lea.smem %s0, 10
  %s21 = sld [smem:[%s20]]
  %s22 = scalar_lea.smem %s0, 11
  %s23 = sld [smem:[%s22]]
  %s24 = scalar_lea.smem %s0, 12
  %s25 = sld [smem:[%s24]]
  %s26 = scalar_lea.smem %s0, 13
  %s27 = sld [smem:[%s26]]
  %s28 = scalar_lea.smem %s0, 14
  %s29 = sld [smem:[%s28]]
  %s30 = scalar_lea.smem %s0, 15
  %s31 = sld [smem:[%s30]]
  %s32 = scalar_lea.smem %s0, 16
  %s33 = sld [smem:[%s32]]
  %s34 = scalar_lea.smem %s0, 17
  %s35 = sld [smem:[%s34]]
  %s36 = scalar_lea.smem %s0, 18
  %s37 = sld [smem:[%s36]]
  %s38 = scalar_lea.smem %s0, 19
  %s39 = sld [smem:[%s38]]
  %s40 = scalar_lea.smem %s0, 20
  %s41 = sld [smem:[%s40]]
  %s42 = scalar_lea.smem %s0, 21
  %s43 = sld [smem:[%s42]]
  %s44 = scalar_lea.smem %s0, 22
  %s45 = sld [smem:[%s44]]
  %s46 = scalar_lea.smem %s0, 23
  %s47 = sld [smem:[%s46]]
  %s48 = scalar_lea.smem %s0, 24
  %s49 = sld [smem:[%s48]]
  %s50 = scalar_lea.smem %s0, 25
  %s51 = sld [smem:[%s50]]
  %s52 = scalar_lea.smem %s0, 26
  %s53 = sld [smem:[%s52]]
  %s54 = scalar_lea.smem %s0, 27
  %s55 = sld [smem:[%s54]]
  %s56 = scalar_lea.smem %s0, 28
  %s57 = sld [smem:[%s56]]
  %s58 = scalar_lea.smem %s0, 29
  %s59 = sld [smem:[%s58]]
  %s60 = scalar_lea.smem %s0, 30
  %s61 = sld [smem:[%s60]]
  %s62 = sld [smem:[#allocation0]]
  $region130: #{_traj_gen_jit.1} parent=0
    _
  %s64 = ssub.s32 1, %s62
  %s65 = scalar_select 0, %s64, %s62
  // Predicated region
  $region2: #{_traj_gen_jit.1} parent=0 // pred_check
    _
  $region3: #{_traj_gen_jit.1} parent=0 // pred_check_branch
    %67 = sbr.rel (0) target = $region5
  $region4: #{_traj_gen_jit.1} parent=0 // pred_region
    _
  $region5: #{_traj_gen_jit.1} parent=0 // pred_fallthru
    _
  // Predicated region
  $region6: #{_traj_gen_jit.1} parent=0 // pred_check
    _
  $region7: #{_traj_gen_jit.1} parent=0 // pred_check_branch
    %69 = sbr.rel (0) target = $region9
  $region8: #{_traj_gen_jit.1} parent=0 // pred_region
    _
  $region9: #{_traj_gen_jit.1} parent=0 // pred_fallthru
    _
  // Predicated region
  $region10: #{_traj_gen_jit.1} parent=0 // pred_check
    _
  $region11: #{_traj_gen_jit.1} parent=0 // pred_check_branch
    %71 = sbr.rel (0) target = $region13
  $region12: #{_traj_gen_jit.1} parent=0 // pred_region
    _
  $region13: #{_traj_gen_jit.1} parent=0 // pred_fallthru
    _
  // Predicated region
  $region14: #{_traj_gen_jit.1} parent=0 // pred_check
    _
  $region15: #{_traj_gen_jit.1} parent=0 // pred_check_branch
    %73 = sbr.rel (0) target = $region17
  $region16: #{_traj_gen_jit.1} parent=0 // pred_region
    _
  $region17: #{_traj_gen_jit.1} parent=0 // pred_fallthru
    _
  // Predicated region
  $region18: #{_traj_gen_jit.1} parent=0 // pred_check
    _
  $region19: #{_traj_gen_jit.1} parent=0 // pred_check_branch
    %75 = sbr.rel (0) target = $region21
  $region20: #{_traj_gen_jit.1} parent=0 // pred_region
    _
  $region21: #{_traj_gen_jit.1} parent=0 // pred_fallthru
    _
  // Predicated region
  $region22: #{_traj_gen_jit.1} parent=0 // pred_check
    _
  $region23: #{_traj_gen_jit.1} parent=0 // pred_check_branch
    %77 = sbr.rel (0) target = $region25
  $region24: #{_traj_gen_jit.1} parent=0 // pred_region
    _
  $region25: #{_traj_gen_jit.1} parent=0 // pred_fallthru
    _
  // Predicated region
  $region26: #{_traj_gen_jit.1} parent=0 // pred_check
    _
  $region27: #{_traj_gen_jit.1} parent=0 // pred_check_branch
    %79 = sbr.rel (0) target = $region29
  $region28: #{_traj_gen_jit.1} parent=0 // pred_region
    _
  $region29: #{_traj_gen_jit.1} parent=0 // pred_fallthru
    _
  // Predicated region
  $region30: #{_traj_gen_jit.1} parent=0 // pred_check
    _
  $region31: #{_traj_gen_jit.1} parent=0 // pred_check_branch
    %81 = sbr.rel (0) target = $region33
  $region32: #{_traj_gen_jit.1} parent=0 // pred_region
    _
  $region33: #{_traj_gen_jit.1} parent=0 // pred_fallthru
    _
  // Predicated region
  $region34: #{_traj_gen_jit.1} parent=0 // pred_check
    _
  $region35: #{_traj_gen_jit.1} parent=0 // pred_check_branch
    %83 = sbr.rel (0) target = $region37
  $region36: #{_traj_gen_jit.1} parent=0 // pred_region
    _
  $region37: #{_traj_gen_jit.1} parent=0 // pred_fallthru
    _
  // Predicated region
  $region38: #{_traj_gen_jit.1} parent=0 // pred_check
    _
  $region39: #{_traj_gen_jit.1} parent=0 // pred_check_branch
    %85 = sbr.rel (0) target = $region41
  $region40: #{_traj_gen_jit.1} parent=0 // pred_region
    _
  $region41: #{_traj_gen_jit.1} parent=0 // pred_fallthru
    _
  // Predicated region
  $region42: #{_traj_gen_jit.1} parent=0 // pred_check
    _
  $region43: #{_traj_gen_jit.1} parent=0 // pred_check_branch
    %87 = sbr.rel (0) target = $region45
  $region44: #{_traj_gen_jit.1} parent=0 // pred_region
    _
  $region45: #{_traj_gen_jit.1} parent=0 // pred_fallthru
    _
  // Predicated region
  $region46: #{_traj_gen_jit.1} parent=0 // pred_check
    _
  $region47: #{_traj_gen_jit.1} parent=0 // pred_check_branch
    %89 = sbr.rel (0) target = $region49
  $region48: #{_traj_gen_jit.1} parent=0 // pred_region
    _
  $region49: #{_traj_gen_jit.1} parent=0 // pred_fallthru
    _
  // Predicated region
  $region50: #{_traj_gen_jit.1} parent=0 // pred_check
    _
  $region51: #{_traj_gen_jit.1} parent=0 // pred_check_branch
    %91 = sbr.rel (0) target = $region53
  $region52: #{_traj_gen_jit.1} parent=0 // pred_region
    _
  $region53: #{_traj_gen_jit.1} parent=0 // pred_fallthru
    _
  // Predicated region
  $region54: #{_traj_gen_jit.1} parent=0 // pred_check
    _
  $region55: #{_traj_gen_jit.1} parent=0 // pred_check_branch
    %93 = sbr.rel (0) target = $region57
  $region56: #{_traj_gen_jit.1} parent=0 // pred_region
    _
  $region57: #{_traj_gen_jit.1} parent=0 // pred_fallthru
    _
  // Predicated region
  $region58: #{_traj_gen_jit.1} parent=0 // pred_check
    _
  $region59: #{_traj_gen_jit.1} parent=0 // pred_check_branch
    %95 = sbr.rel (0) target = $region61
  $region60: #{_traj_gen_jit.1} parent=0 // pred_region
    _
  $region61: #{_traj_gen_jit.1} parent=0 // pred_fallthru
    _
  // Predicated region
  $region62: #{_traj_gen_jit.1} parent=0 // pred_check
    _
  $region63: #{_traj_gen_jit.1} parent=0 // pred_check_branch
    %97 = sbr.rel (0) target = $region65
  $region64: #{_traj_gen_jit.1} parent=0 // pred_region
    _
  $region65: #{_traj_gen_jit.1} parent=0 // pred_fallthru
    _
  // Predicated region
  $region66: #{_traj_gen_jit.1} parent=0 // pred_check
    _
  $region67: #{_traj_gen_jit.1} parent=0 // pred_check_branch
    %99 = sbr.rel (0) target = $region69
  $region68: #{_traj_gen_jit.1} parent=0 // pred_region
    _
  $region69: #{_traj_gen_jit.1} parent=0 // pred_fallthru
    _
  // Predicated region
  $region70: #{_traj_gen_jit.1} parent=0 // pred_check
    _
  $region71: #{_traj_gen_jit.1} parent=0 // pred_check_branch
    %101 = sbr.rel (0) target = $region73
  $region72: #{_traj_gen_jit.1} parent=0 // pred_region
    _
  $region73: #{_traj_gen_jit.1} parent=0 // pred_fallthru
    _
  // Predicated region
  $region74: #{_traj_gen_jit.1} parent=0 // pred_check
    _
  $region75: #{_traj_gen_jit.1} parent=0 // pred_check_branch
    %103 = sbr.rel (0) target = $region77
  $region76: #{_traj_gen_jit.1} parent=0 // pred_region
    _
  $region77: #{_traj_gen_jit.1} parent=0 // pred_fallthru
    _
  // Predicated region
  $region78: #{_traj_gen_jit.1} parent=0 // pred_check
    _
  $region79: #{_traj_gen_jit.1} parent=0 // pred_check_branch
    %105 = sbr.rel (0) target = $region81
  $region80: #{_traj_gen_jit.1} parent=0 // pred_region
    _
  $region81: #{_traj_gen_jit.1} parent=0 // pred_fallthru
    _
  // Predicated region
  $region82: #{_traj_gen_jit.1} parent=0 // pred_check
    _
  $region83: #{_traj_gen_jit.1} parent=0 // pred_check_branch
    %107 = sbr.rel (0) target = $region85
  $region84: #{_traj_gen_jit.1} parent=0 // pred_region
    _
  $region85: #{_traj_gen_jit.1} parent=0 // pred_fallthru
    _
  // Predicated region
  $region86: #{_traj_gen_jit.1} parent=0 // pred_check
    _
  $region87: #{_traj_gen_jit.1} parent=0 // pred_check_branch
    %109 = sbr.rel (0) target = $region89
  $region88: #{_traj_gen_jit.1} parent=0 // pred_region
    _
  $region89: #{_traj_gen_jit.1} parent=0 // pred_fallthru
    _
  // Predicated region
  $region90: #{_traj_gen_jit.1} parent=0 // pred_check
    _
  $region91: #{_traj_gen_jit.1} parent=0 // pred_check_branch
    %111 = sbr.rel (0) target = $region93
  $region92: #{_traj_gen_jit.1} parent=0 // pred_region
    _
  $region93: #{_traj_gen_jit.1} parent=0 // pred_fallthru
    _
  // Predicated region
  $region94: #{_traj_gen_jit.1} parent=0 // pred_check
    _
  $region95: #{_traj_gen_jit.1} parent=0 // pred_check_branch
    %113 = sbr.rel (0) target = $region97
  $region96: #{_traj_gen_jit.1} parent=0 // pred_region
    _
  $region97: #{_traj_gen_jit.1} parent=0 // pred_fallthru
    _
  // Predicated region
  $region98: #{_traj_gen_jit.1} parent=0 // pred_check
    _
  $region99: #{_traj_gen_jit.1} parent=0 // pred_check_branch
    %115 = sbr.rel (0) target = $region101
  $region100: #{_traj_gen_jit.1} parent=0 // pred_region
    _
  $region101: #{_traj_gen_jit.1} parent=0 // pred_fallthru
    _
  // Predicated region
  $region102: #{_traj_gen_jit.1} parent=0 // pred_check
    _
  $region103: #{_traj_gen_jit.1} parent=0 // pred_check_branch
    %117 = sbr.rel (0) target = $region105
  $region104: #{_traj_gen_jit.1} parent=0 // pred_region
    _
  $region105: #{_traj_gen_jit.1} parent=0 // pred_fallthru
    _
  // Predicated region
  $region106: #{_traj_gen_jit.1} parent=0 // pred_check
    _
  $region107: #{_traj_gen_jit.1} parent=0 // pred_check_branch
    %119 = sbr.rel (0) target = $region109
  $region108: #{_traj_gen_jit.1} parent=0 // pred_region
    _
  $region109: #{_traj_gen_jit.1} parent=0 // pred_fallthru
    _
  // Predicated region
  $region110: #{_traj_gen_jit.1} parent=0 // pred_check
    _
  $region111: #{_traj_gen_jit.1} parent=0 // pred_check_branch
    %121 = sbr.rel (0) target = $region113
  $region112: #{_traj_gen_jit.1} parent=0 // pred_region
    _
  $region113: #{_traj_gen_jit.1} parent=0 // pred_fallthru
    _
  // Predicated region
  $region114: #{_traj_gen_jit.1} parent=0 // pred_check
    _
  $region115: #{_traj_gen_jit.1} parent=0 // pred_check_branch
    %123 = sbr.rel (0) target = $region117
  $region116: #{_traj_gen_jit.1} parent=0 // pred_region
    _
  $region117: #{_traj_gen_jit.1} parent=0 // pred_fallthru
    _
  // Predicated region
  $region118: #{_traj_gen_jit.1} parent=0 // pred_check
    _
  $region119: #{_traj_gen_jit.1} parent=0 // pred_check_branch
    %125 = sbr.rel (0) target = $region121
  $region120: #{_traj_gen_jit.1} parent=0 // pred_region
    _
  $region121: #{_traj_gen_jit.1} parent=0 // pred_fallthru
    _
  %v127 = vld [vmem:[%s1] sm:$0xf]
  %v128 = vld [vmem:[%s1 + $0x4] sm:$0xf]
  %v129 = vld [vmem:[%s1 + $0x8] sm:$0xf]
  %v130 = vld [vmem:[%s1 + $0xc] sm:$0xf]
  %v131 = vld [vmem:[%s1 + $0x10] sm:$0xf]
  %v132 = vld [vmem:[%s1 + $0x14] sm:$0xf]
  %v133 = vld [vmem:[%s1 + $0x18] sm:$0xf]
  %v134 = vld [vmem:[%s1 + $0x1c] sm:$0xf]
  %v135 = vld [vmem:[%s5] sm:$0x3]
  %137 = vset.pattern.permute.xlu0 0
  %138 = vperm.xlu0 %137, %v127
  %v139 = vpop.permute.xlu0 %138
  %142 = vset.pattern.permute.xlu0 0
  %143 = vperm.xlu0 %142, %v128
  %v144 = vpop.permute.xlu0 %143
  %147 = vset.pattern.permute.xlu0 0
  %148 = vperm.xlu0 %147, %v129
  %v149 = vpop.permute.xlu0 %148
  %152 = vset.pattern.permute.xlu0 0
  %153 = vperm.xlu0 %152, %v130
  %v154 = vpop.permute.xlu0 %153
  %157 = vset.pattern.permute.xlu0 0
  %158 = vperm.xlu0 %157, %v131
  %v159 = vpop.permute.xlu0 %158
  %162 = vset.pattern.permute.xlu0 0
  %163 = vperm.xlu0 %162, %v132
  %v164 = vpop.permute.xlu0 %163
  %167 = vset.pattern.permute.xlu0 0
  %168 = vperm.xlu0 %167, %v133
  %v169 = vpop.permute.xlu0 %168
  %172 = vset.pattern.permute.xlu0 0
  %173 = vperm.xlu0 %172, %v134
  %v174 = vpop.permute.xlu0 %173
  %v176 = vlaneseq
  %v177 = vshrl.u32 %v176, 7
  %v178 = vsub.s32 0, %v177
  %v179 = vrot.slane %v135, %v178
  %v180 = vmul.f32 %v139, %v179
  %v181 = vmul.f32 %v144, %v179
  %v182 = vmul.f32 %v149, %v179
  %v183 = vmul.f32 %v154, %v179
  %v184 = vmul.f32 %v159, %v179
  %v185 = vmul.f32 %v164, %v179
  %v186 = vmul.f32 %v169, %v179
  %v187 = vmul.f32 %v174, %v179
  %188 = vset.pattern.permute.xlu0 1
  %189 = vperm.xlu0 %188, %v127
  %v190 = vpop.permute.xlu0 %189
  %192 = vset.pattern.permute.xlu0 1
  %193 = vperm.xlu0 %192, %v128
  %v194 = vpop.permute.xlu0 %193
  %196 = vset.pattern.permute.xlu0 1
  %197 = vperm.xlu0 %196, %v129
  %v198 = vpop.permute.xlu0 %197
  %200 = vset.pattern.permute.xlu0 1
  %201 = vperm.xlu0 %200, %v130
  %v202 = vpop.permute.xlu0 %201
  %204 = vset.pattern.permute.xlu0 1
  %205 = vperm.xlu0 %204, %v131
  %v206 = vpop.permute.xlu0 %205
  %208 = vset.pattern.permute.xlu0 1
  %209 = vperm.xlu0 %208, %v132
  %v210 = vpop.permute.xlu0 %209
  %212 = vset.pattern.permute.xlu0 1
  %213 = vperm.xlu0 %212, %v133
  %v214 = vpop.permute.xlu0 %213
  %216 = vset.pattern.permute.xlu0 1
  %217 = vperm.xlu0 %216, %v134
  %v218 = vpop.permute.xlu0 %217
  %v220 = vlaneseq
  %v221 = vshrl.u32 %v220, 7
  %v222 = vsub.s32 1, %v221
  %v223 = vrot.slane %v135, %v222
  %v224 = vmul.f32 %v190, %v223
  %v225 = vmul.f32 %v194, %v223
  %v226 = vmul.f32 %v198, %v223
  %v227 = vmul.f32 %v202, %v223
  %v228 = vmul.f32 %v206, %v223
  %v229 = vmul.f32 %v210, %v223
  %v230 = vmul.f32 %v214, %v223
  %v231 = vmul.f32 %v218, %v223
  %v232 = vadd.f32 %v180, %v224
  %v233 = vadd.f32 %v181, %v225
  %v234 = vadd.f32 %v182, %v226
  %v235 = vadd.f32 %v183, %v227
  %v236 = vadd.f32 %v184, %v228
  %v237 = vadd.f32 %v185, %v229
  %v238 = vadd.f32 %v186, %v230
  %v239 = vadd.f32 %v187, %v231
  %v240 = vld [vmem:[%s7] sm:$0x1]
  %v242 = vlaneseq
  %v243 = vshrl.u32 %v242, 7
  %v244 = vsub.s32 0, %v243
  %v245 = vrot.slane %v240, %v244
  %v247 = vadd.f32 %v232, %v245
  %v248 = vadd.f32 %v233, %v245
  %v249 = vadd.f32 %v234, %v245
  %v250 = vadd.f32 %v235, %v245
  %v251 = vadd.f32 %v236, %v245
  %v252 = vadd.f32 %v237, %v245
  %v253 = vadd.f32 %v238, %v245
  %v254 = vadd.f32 %v239, %v245
  %v255 = vld [vmem:[%s9] sm:$0xff]
  %v256 = vld [vmem:[%s9 + $0x8] sm:$0xff]
  %v257 = vxor.u32 %v247, 2147483648
  %v258 = vmul.f32 %v257, 1.442695
  %v259 = vpow.pop %v258
  %v260 = vadd.f32 %v259, 1.0
  %v261 = vrcp.pop %v260
  %v262 = vmul.f32 1.0, %v261
  %v263 = vtanh.pop %v247
  %265 = vrot.lane.b32.xlu0 %v263, 80
  %v266 = vpop.permute.xlu0 %265
  %v268 = vmul.f32 %v262, %v266
  %v269 = vtanh.pop %v268
  %271 = vrot.lane.b32.xlu0 %v269, 32
  %v272 = vpop.permute.xlu0 %271
  %v274 = vmul.f32 %v262, %v272
  %276 = vrot.lane.b32.xlu0 %v274, 96
  %v277 = vpop.permute.xlu0 %276
  %vm278 = vcmask 130048
  %v279 = vsel %vm278, %v277, 0
  %281 = vmatprep.subr.mxu0 0.0
  %282 = vmatpush1.msra.mxu0 %v255
  %283 = vmatprep.subr.mxu0 0.0
  %284 = vmatpush1.msra.mxu0 %v256
  %285 = vmatprep.subr.mxu0 0.0
  %286 = vmatpush1.msra.mxu0 0.0
  %287 = vmatprep.subr.mxu0 0.0
  %288 = vmatpush1.msra.mxu0 0.0
  %289 = vmatprep.subr.mxu0 0.0
  %290 = vmatpush1.msra.mxu0 0.0
  %291 = vmatprep.subr.mxu0 0.0
  %292 = vmatpush1.msra.mxu0 0.0
  %293 = vmatprep.subr.mxu0 0.0
  %294 = vmatpush1.msra.mxu0 0.0
  %295 = vmatprep.subr.mxu0 0.0
  %296 = vmatpush1.msra.mxu0 0.0
  %297 = vmatprep.subr.mxu0 0.0
  %298 = vmatpush1.msra.mxu0 0.0
  %299 = vmatprep.subr.mxu0 0.0
  %300 = vmatpush1.msra.mxu0 0.0
  %301 = vmatprep.subr.mxu0 0.0
  %302 = vmatpush1.msra.mxu0 0.0
  %303 = vmatprep.subr.mxu0 0.0
  %304 = vmatpush1.msra.mxu0 0.0
  %305 = vmatprep.subr.mxu0 0.0
  %306 = vmatpush1.msra.mxu0 0.0
  %307 = vmatprep.subr.mxu0 0.0
  %308 = vmatpush1.msra.mxu0 0.0
  %309 = vmatprep.subr.mxu0 0.0
  %310 = vmatpush1.msra.mxu0 0.0
  %311 = vmatprep.subr.mxu0 0.0
  %312 = vmatpush1.msra.mxu0 0.0
  %313 = vmatprep.subr.mxu0 0.0
  %314 = vmatpush1.msra.mxu0 0.0
  %315 = vmatprep.subr.mxu0 0.0
  %316 = vmatpush1.msra.mxu0 0.0
  %317 = vmatprep.subr.mxu0 0.0
  %318 = vmatpush1.msra.mxu0 0.0
  %319 = vmatprep.subr.mxu0 0.0
  %320 = vmatpush1.msra.mxu0 0.0
  %321 = vmatprep.subr.mxu0 0.0
  %322 = vmatpush1.msra.mxu0 0.0
  %323 = vmatprep.subr.mxu0 0.0
  %324 = vmatpush1.msra.mxu0 0.0
  %325 = vmatprep.subr.mxu0 0.0
  %326 = vmatpush1.msra.mxu0 0.0
  %327 = vmatprep.subr.mxu0 0.0
  %328 = vmatpush1.msra.mxu0 0.0
  %329 = vmatprep.subr.mxu0 0.0
  %330 = vmatpush1.msra.mxu0 0.0
  %331 = vmatprep.subr.mxu0 0.0
  %332 = vmatpush1.msra.mxu0 0.0
  %333 = vmatprep.subr.mxu0 0.0
  %334 = vmatpush1.msra.mxu0 0.0
  %335 = vmatprep.subr.mxu0 0.0
  %336 = vmatpush1.msra.mxu0 0.0
  %337 = vmatprep.subr.mxu0 0.0
  %338 = vmatpush1.msra.mxu0 0.0
  %339 = vmatprep.subr.mxu0 0.0
  %340 = vmatpush1.msra.mxu0 0.0
  %341 = vmatprep.subr.mxu0 0.0
  %342 = vmatpush1.msra.mxu0 0.0
  %343 = vmatprep.subr.mxu0 0.0
  %344 = vmatpush1.msra.mxu0 0.0
  %345 = vmatprep.mubr.f32.mxu0 0.0
  %346 = vmatmul.mubr.f32.gmra.mrb[0].mxu0 %v279
  %v347 = vpop.f32.mrb[0].mxu0
  %v348 = vadd.f32 0.0, %v347
  %v349 = vpop.f32.mrb[0].mxu0
  %350 = vdwg.mxu0
  %v351 = vadd.f32 %v248, %v348
  %v352 = vxor.u32 %v351, 2147483648
  %v353 = vmul.f32 %v352, 1.442695
  %v354 = vpow.pop %v353
  %v355 = vadd.f32 %v354, 1.0
  %v356 = vrcp.pop %v355
  %v357 = vmul.f32 1.0, %v356
  %v358 = vtanh.pop %v351
  %360 = vrot.lane.b32.xlu0 %v268, 16
  %v361 = vpop.permute.xlu0 %360
  %v363 = vmul.f32 %v357, %v361
  %365 = vrot.lane.b32.xlu0 %v358, 80
  %v366 = vpop.permute.xlu0 %365
  %v368 = vmul.f32 %v357, %v366
  %370 = vrot.lane.b32.xlu0 %v368, 16
  %v371 = vpop.permute.xlu0 %370
  %v373 = vadd.f32 %v363, %v371
  %v374 = vtanh.pop %v373
  %376 = vrot.lane.b32.xlu0 %v374, 16
  %v377 = vpop.permute.xlu0 %376
  %v379 = vmul.f32 %v357, %v377
  %381 = vrot.lane.b32.xlu0 %v379, 96
  %v382 = vpop.permute.xlu0 %381
  %v383 = vsel %vm278, %v382, 0
  %385 = vmatprep.subr.mxu0 0.0
  %386 = vmatpush1.msra.mxu0 %v255
  %387 = vmatprep.subr.mxu0 0.0
  %388 = vmatpush1.msra.mxu0 %v256
  %389 = vmatprep.subr.mxu0 0.0
  %390 = vmatpush1.msra.mxu0 0.0
  %391 = vmatprep.subr.mxu0 0.0
  %392 = vmatpush1.msra.mxu0 0.0
  %393 = vmatprep.subr.mxu0 0.0
  %394 = vmatpush1.msra.mxu0 0.0
  %395 = vmatprep.subr.mxu0 0.0
  %396 = vmatpush1.msra.mxu0 0.0
  %397 = vmatprep.subr.mxu0 0.0
  %398 = vmatpush1.msra.mxu0 0.0
  %399 = vmatprep.subr.mxu0 0.0
  %400 = vmatpush1.msra.mxu0 0.0
  %401 = vmatprep.subr.mxu0 0.0
  %402 = vmatpush1.msra.mxu0 0.0
  %403 = vmatprep.subr.mxu0 0.0
  %404 = vmatpush1.msra.mxu0 0.0
  %405 = vmatprep.subr.mxu0 0.0
  %406 = vmatpush1.msra.mxu0 0.0
  %407 = vmatprep.subr.mxu0 0.0
  %408 = vmatpush1.msra.mxu0 0.0
  %409 = vmatprep.subr.mxu0 0.0
  %410 = vmatpush1.msra.mxu0 0.0
  %411 = vmatprep.subr.mxu0 0.0
  %412 = vmatpush1.msra.mxu0 0.0
  %413 = vmatprep.subr.mxu0 0.0
  %414 = vmatpush1.msra.mxu0 0.0
  %415 = vmatprep.subr.mxu0 0.0
  %416 = vmatpush1.msra.mxu0 0.0
  %417 = vmatprep.subr.mxu0 0.0
  %418 = vmatpush1.msra.mxu0 0.0
  %419 = vmatprep.subr.mxu0 0.0
  %420 = vmatpush1.msra.mxu0 0.0
  %421 = vmatprep.subr.mxu0 0.0
  %422 = vmatpush1.msra.mxu0 0.0
  %423 = vmatprep.subr.mxu0 0.0
  %424 = vmatpush1.msra.mxu0 0.0
  %425 = vmatprep.subr.mxu0 0.0
  %426 = vmatpush1.msra.mxu0 0.0
  %427 = vmatprep.subr.mxu0 0.0
  %428 = vmatpush1.msra.mxu0 0.0
  %429 = vmatprep.subr.mxu0 0.0
  %430 = vmatpush1.msra.mxu0 0.0
  %431 = vmatprep.subr.mxu0 0.0
  %432 = vmatpush1.msra.mxu0 0.0
  %433 = vmatprep.subr.mxu0 0.0
  %434 = vmatpush1.msra.mxu0 0.0
  %435 = vmatprep.subr.mxu0 0.0
  %436 = vmatpush1.msra.mxu0 0.0
  %437 = vmatprep.subr.mxu0 0.0
  %438 = vmatpush1.msra.mxu0 0.0
  %439 = vmatprep.subr.mxu0 0.0
  %440 = vmatpush1.msra.mxu0 0.0
  %441 = vmatprep.subr.mxu0 0.0
  %442 = vmatpush1.msra.mxu0 0.0
  %443 = vmatprep.subr.mxu0 0.0
  %444 = vmatpush1.msra.mxu0 0.0
  %445 = vmatprep.subr.mxu0 0.0
  %446 = vmatpush1.msra.mxu0 0.0
  %447 = vmatprep.subr.mxu0 0.0
  %448 = vmatpush1.msra.mxu0 0.0
  %449 = vmatprep.mubr.f32.mxu0 0.0
  %450 = vmatmul.mubr.f32.gmra.mrb[0].mxu0 %v383
  %v451 = vpop.f32.mrb[0].mxu0
  %v452 = vadd.f32 0.0, %v451
  %v453 = vpop.f32.mrb[0].mxu0
  %454 = vdwg.mxu0
  %v455 = vadd.f32 %v249, %v452
  %v456 = vxor.u32 %v455, 2147483648
  %v457 = vmul.f32 %v456, 1.442695
  %v458 = vpow.pop %v457
  %v459 = vadd.f32 %v458, 1.0
  %v460 = vrcp.pop %v459
  %v461 = vmul.f32 1.0, %v460
  %v462 = vtanh.pop %v455
  %v463 = vmul.f32 %v461, %v373
  %465 = vrot.lane.b32.xlu0 %v462, 80
  %v466 = vpop.permute.xlu0 %465
  %v468 = vmul.f32 %v461, %v466
  %470 = vrot.lane.b32.xlu0 %v468, 16
  %v471 = vpop.permute.xlu0 %470
  %v473 = vadd.f32 %v463, %v471
  %v474 = vtanh.pop %v473
  %476 = vrot.lane.b32.xlu0 %v474, 16
  %v477 = vpop.permute.xlu0 %476
  %v479 = vmul.f32 %v461, %v477
  %481 = vrot.lane.b32.xlu0 %v479, 96
  %v482 = vpop.permute.xlu0 %481
  %v483 = vsel %vm278, %v482, 0
  %485 = vmatprep.subr.mxu0 0.0
  %486 = vmatpush1.msra.mxu0 %v255
  %487 = vmatprep.subr.mxu0 0.0
  %488 = vmatpush1.msra.mxu0 %v256
  %489 = vmatprep.subr.mxu0 0.0
  %490 = vmatpush1.msra.mxu0 0.0
  %491 = vmatprep.subr.mxu0 0.0
  %492 = vmatpush1.msra.mxu0 0.0
  %493 = vmatprep.subr.mxu0 0.0
  %494 = vmatpush1.msra.mxu0 0.0
  %495 = vmatprep.subr.mxu0 0.0
  %496 = vmatpush1.msra.mxu0 0.0
  %497 = vmatprep.subr.mxu0 0.0
  %498 = vmatpush1.msra.mxu0 0.0
  %499 = vmatprep.subr.mxu0 0.0
  %500 = vmatpush1.msra.mxu0 0.0
  %501 = vmatprep.subr.mxu0 0.0
  %502 = vmatpush1.msra.mxu0 0.0
  %503 = vmatprep.subr.mxu0 0.0
  %504 = vmatpush1.msra.mxu0 0.0
  %505 = vmatprep.subr.mxu0 0.0
  %506 = vmatpush1.msra.mxu0 0.0
  %507 = vmatprep.subr.mxu0 0.0
  %508 = vmatpush1.msra.mxu0 0.0
  %509 = vmatprep.subr.mxu0 0.0
  %510 = vmatpush1.msra.mxu0 0.0
  %511 = vmatprep.subr.mxu0 0.0
  %512 = vmatpush1.msra.mxu0 0.0
  %513 = vmatprep.subr.mxu0 0.0
  %514 = vmatpush1.msra.mxu0 0.0
  %515 = vmatprep.subr.mxu0 0.0
  %516 = vmatpush1.msra.mxu0 0.0
  %517 = vmatprep.subr.mxu0 0.0
  %518 = vmatpush1.msra.mxu0 0.0
  %519 = vmatprep.subr.mxu0 0.0
  %520 = vmatpush1.msra.mxu0 0.0
  %521 = vmatprep.subr.mxu0 0.0
  %522 = vmatpush1.msra.mxu0 0.0
  %523 = vmatprep.subr.mxu0 0.0
  %524 = vmatpush1.msra.mxu0 0.0
  %525 = vmatprep.subr.mxu0 0.0
  %526 = vmatpush1.msra.mxu0 0.0
  %527 = vmatprep.subr.mxu0 0.0
  %528 = vmatpush1.msra.mxu0 0.0
  %529 = vmatprep.subr.mxu0 0.0
  %530 = vmatpush1.msra.mxu0 0.0
  %531 = vmatprep.subr.mxu0 0.0
  %532 = vmatpush1.msra.mxu0 0.0
  %533 = vmatprep.subr.mxu0 0.0
  %534 = vmatpush1.msra.mxu0 0.0
  %535 = vmatprep.subr.mxu0 0.0
  %536 = vmatpush1.msra.mxu0 0.0
  %537 = vmatprep.subr.mxu0 0.0
  %538 = vmatpush1.msra.mxu0 0.0
  %539 = vmatprep.subr.mxu0 0.0
  %540 = vmatpush1.msra.mxu0 0.0
  %541 = vmatprep.subr.mxu0 0.0
  %542 = vmatpush1.msra.mxu0 0.0
  %543 = vmatprep.subr.mxu0 0.0
  %544 = vmatpush1.msra.mxu0 0.0
  %545 = vmatprep.subr.mxu0 0.0
  %546 = vmatpush1.msra.mxu0 0.0
  %547 = vmatprep.subr.mxu0 0.0
  %548 = vmatpush1.msra.mxu0 0.0
  %549 = vmatprep.mubr.f32.mxu0 0.0
  %550 = vmatmul.mubr.f32.gmra.mrb[0].mxu0 %v483
  %v551 = vpop.f32.mrb[0].mxu0
  %v552 = vadd.f32 0.0, %v551
  %v553 = vpop.f32.mrb[0].mxu0
  %554 = vdwg.mxu0
  %v555 = vadd.f32 %v250, %v552
  %v556 = vxor.u32 %v555, 2147483648
  %v557 = vmul.f32 %v556, 1.442695
  %v558 = vpow.pop %v557
  %v559 = vadd.f32 %v558, 1.0
  %v560 = vrcp.pop %v559
  %v561 = vmul.f32 1.0, %v560
  %v562 = vtanh.pop %v555
  %v563 = vmul.f32 %v561, %v473
  %565 = vrot.lane.b32.xlu0 %v562, 80
  %v566 = vpop.permute.xlu0 %565
  %v568 = vmul.f32 %v561, %v566
  %570 = vrot.lane.b32.xlu0 %v568, 16
  %v571 = vpop.permute.xlu0 %570
  %v573 = vadd.f32 %v563, %v571
  %v574 = vtanh.pop %v573
  %576 = vrot.lane.b32.xlu0 %v574, 16
  %v577 = vpop.permute.xlu0 %576
  %v579 = vmul.f32 %v561, %v577
  %581 = vrot.lane.b32.xlu0 %v579, 96
  %v582 = vpop.permute.xlu0 %581
  %v583 = vsel %vm278, %v582, 0
  %585 = vmatprep.subr.mxu0 0.0
  %586 = vmatpush1.msra.mxu0 %v255
  %587 = vmatprep.subr.mxu0 0.0
  %588 = vmatpush1.msra.mxu0 %v256
  %589 = vmatprep.subr.mxu0 0.0
  %590 = vmatpush1.msra.mxu0 0.0
  %591 = vmatprep.subr.mxu0 0.0
  %592 = vmatpush1.msra.mxu0 0.0
  %593 = vmatprep.subr.mxu0 0.0
  %594 = vmatpush1.msra.mxu0 0.0
  %595 = vmatprep.subr.mxu0 0.0
  %596 = vmatpush1.msra.mxu0 0.0
  %597 = vmatprep.subr.mxu0 0.0
  %598 = vmatpush1.msra.mxu0 0.0
  %599 = vmatprep.subr.mxu0 0.0
  %600 = vmatpush1.msra.mxu0 0.0
  %601 = vmatprep.subr.mxu0 0.0
  %602 = vmatpush1.msra.mxu0 0.0
  %603 = vmatprep.subr.mxu0 0.0
  %604 = vmatpush1.msra.mxu0 0.0
  %605 = vmatprep.subr.mxu0 0.0
  %606 = vmatpush1.msra.mxu0 0.0
  %607 = vmatprep.subr.mxu0 0.0
  %608 = vmatpush1.msra.mxu0 0.0
  %609 = vmatprep.subr.mxu0 0.0
  %610 = vmatpush1.msra.mxu0 0.0
  %611 = vmatprep.subr.mxu0 0.0
  %612 = vmatpush1.msra.mxu0 0.0
  %613 = vmatprep.subr.mxu0 0.0
  %614 = vmatpush1.msra.mxu0 0.0
  %615 = vmatprep.subr.mxu0 0.0
  %616 = vmatpush1.msra.mxu0 0.0
  %617 = vmatprep.subr.mxu0 0.0
  %618 = vmatpush1.msra.mxu0 0.0
  %619 = vmatprep.subr.mxu0 0.0
  %620 = vmatpush1.msra.mxu0 0.0
  %621 = vmatprep.subr.mxu0 0.0
  %622 = vmatpush1.msra.mxu0 0.0
  %623 = vmatprep.subr.mxu0 0.0
  %624 = vmatpush1.msra.mxu0 0.0
  %625 = vmatprep.subr.mxu0 0.0
  %626 = vmatpush1.msra.mxu0 0.0
  %627 = vmatprep.subr.mxu0 0.0
  %628 = vmatpush1.msra.mxu0 0.0
  %629 = vmatprep.subr.mxu0 0.0
  %630 = vmatpush1.msra.mxu0 0.0
  %631 = vmatprep.subr.mxu0 0.0
  %632 = vmatpush1.msra.mxu0 0.0
  %633 = vmatprep.subr.mxu0 0.0
  %634 = vmatpush1.msra.mxu0 0.0
  %635 = vmatprep.subr.mxu0 0.0
  %636 = vmatpush1.msra.mxu0 0.0
  %637 = vmatprep.subr.mxu0 0.0
  %638 = vmatpush1.msra.mxu0 0.0
  %639 = vmatprep.subr.mxu0 0.0
  %640 = vmatpush1.msra.mxu0 0.0
  %641 = vmatprep.subr.mxu0 0.0
  %642 = vmatpush1.msra.mxu0 0.0
  %643 = vmatprep.subr.mxu0 0.0
  %644 = vmatpush1.msra.mxu0 0.0
  %645 = vmatprep.subr.mxu0 0.0
  %646 = vmatpush1.msra.mxu0 0.0
  %647 = vmatprep.subr.mxu0 0.0
  %648 = vmatpush1.msra.mxu0 0.0
  %649 = vmatprep.mubr.f32.mxu0 0.0
  %650 = vmatmul.mubr.f32.gmra.mrb[0].mxu0 %v583
  %v651 = vpop.f32.mrb[0].mxu0
  %v652 = vadd.f32 0.0, %v651
  %v653 = vpop.f32.mrb[0].mxu0
  %654 = vdwg.mxu0
  %v655 = vadd.f32 %v251, %v652
  %v656 = vxor.u32 %v655, 2147483648
  %v657 = vmul.f32 %v656, 1.442695
  %v658 = vpow.pop %v657
  %v659 = vadd.f32 %v658, 1.0
  %v660 = vrcp.pop %v659
  %v661 = vmul.f32 1.0, %v660
  %v662 = vtanh.pop %v655
  %v663 = vmul.f32 %v661, %v573
  %665 = vrot.lane.b32.xlu0 %v662, 80
  %v666 = vpop.permute.xlu0 %665
  %v668 = vmul.f32 %v661, %v666
  %670 = vrot.lane.b32.xlu0 %v668, 16
  %v671 = vpop.permute.xlu0 %670
  %v673 = vadd.f32 %v663, %v671
  %v674 = vtanh.pop %v673
  %676 = vrot.lane.b32.xlu0 %v674, 16
  %v677 = vpop.permute.xlu0 %676
  %v679 = vmul.f32 %v661, %v677
  %681 = vrot.lane.b32.xlu0 %v679, 96
  %v682 = vpop.permute.xlu0 %681
  %v683 = vsel %vm278, %v682, 0
  %685 = vmatprep.subr.mxu0 0.0
  %686 = vmatpush1.msra.mxu0 %v255
  %687 = vmatprep.subr.mxu0 0.0
  %688 = vmatpush1.msra.mxu0 %v256
  %689 = vmatprep.subr.mxu0 0.0
  %690 = vmatpush1.msra.mxu0 0.0
  %691 = vmatprep.subr.mxu0 0.0
  %692 = vmatpush1.msra.mxu0 0.0
  %693 = vmatprep.subr.mxu0 0.0
  %694 = vmatpush1.msra.mxu0 0.0
  %695 = vmatprep.subr.mxu0 0.0
  %696 = vmatpush1.msra.mxu0 0.0
  %697 = vmatprep.subr.mxu0 0.0
  %698 = vmatpush1.msra.mxu0 0.0
  %699 = vmatprep.subr.mxu0 0.0
  %700 = vmatpush1.msra.mxu0 0.0
  %701 = vmatprep.subr.mxu0 0.0
  %702 = vmatpush1.msra.mxu0 0.0
  %703 = vmatprep.subr.mxu0 0.0
  %704 = vmatpush1.msra.mxu0 0.0
  %705 = vmatprep.subr.mxu0 0.0
  %706 = vmatpush1.msra.mxu0 0.0
  %707 = vmatprep.subr.mxu0 0.0
  %708 = vmatpush1.msra.mxu0 0.0
  %709 = vmatprep.subr.mxu0 0.0
  %710 = vmatpush1.msra.mxu0 0.0
  %711 = vmatprep.subr.mxu0 0.0
  %712 = vmatpush1.msra.mxu0 0.0
  %713 = vmatprep.subr.mxu0 0.0
  %714 = vmatpush1.msra.mxu0 0.0
  %715 = vmatprep.subr.mxu0 0.0
  %716 = vmatpush1.msra.mxu0 0.0
  %717 = vmatprep.subr.mxu0 0.0
  %718 = vmatpush1.msra.mxu0 0.0
  %719 = vmatprep.subr.mxu0 0.0
  %720 = vmatpush1.msra.mxu0 0.0
  %721 = vmatprep.subr.mxu0 0.0
  %722 = vmatpush1.msra.mxu0 0.0
  %723 = vmatprep.subr.mxu0 0.0
  %724 = vmatpush1.msra.mxu0 0.0
  %725 = vmatprep.subr.mxu0 0.0
  %726 = vmatpush1.msra.mxu0 0.0
  %727 = vmatprep.subr.mxu0 0.0
  %728 = vmatpush1.msra.mxu0 0.0
  %729 = vmatprep.subr.mxu0 0.0
  %730 = vmatpush1.msra.mxu0 0.0
  %731 = vmatprep.subr.mxu0 0.0
  %732 = vmatpush1.msra.mxu0 0.0
  %733 = vmatprep.subr.mxu0 0.0
  %734 = vmatpush1.msra.mxu0 0.0
  %735 = vmatprep.subr.mxu0 0.0
  %736 = vmatpush1.msra.mxu0 0.0
  %737 = vmatprep.subr.mxu0 0.0
  %738 = vmatpush1.msra.mxu0 0.0
  %739 = vmatprep.subr.mxu0 0.0
  %740 = vmatpush1.msra.mxu0 0.0
  %741 = vmatprep.subr.mxu0 0.0
  %742 = vmatpush1.msra.mxu0 0.0
  %743 = vmatprep.subr.mxu0 0.0
  %744 = vmatpush1.msra.mxu0 0.0
  %745 = vmatprep.subr.mxu0 0.0
  %746 = vmatpush1.msra.mxu0 0.0
  %747 = vmatprep.subr.mxu0 0.0
  %748 = vmatpush1.msra.mxu0 0.0
  %749 = vmatprep.mubr.f32.mxu0 0.0
  %750 = vmatmul.mubr.f32.gmra.mrb[0].mxu0 %v683
  %v751 = vpop.f32.mrb[0].mxu0
  %v752 = vadd.f32 0.0, %v751
  %v753 = vpop.f32.mrb[0].mxu0
  %754 = vdwg.mxu0
  %v755 = vadd.f32 %v252, %v752
  %v756 = vxor.u32 %v755, 2147483648
  %v757 = vmul.f32 %v756, 1.442695
  %v758 = vpow.pop %v757
  %v759 = vadd.f32 %v758, 1.0
  %v760 = vrcp.pop %v759
  %v761 = vmul.f32 1.0, %v760
  %v762 = vtanh.pop %v755
  %v763 = vmul.f32 %v761, %v673
  %765 = vrot.lane.b32.xlu0 %v762, 80
  %v766 = vpop.permute.xlu0 %765
  %v768 = vmul.f32 %v761, %v766
  %770 = vrot.lane.b32.xlu0 %v768, 16
  %v771 = vpop.permute.xlu0 %770
  %v773 = vadd.f32 %v763, %v771
  %v774 = vtanh.pop %v773
  %776 = vrot.lane.b32.xlu0 %v774, 16
  %v777 = vpop.permute.xlu0 %776
  %v779 = vmul.f32 %v761, %v777
  %781 = vrot.lane.b32.xlu0 %v779, 96
  %v782 = vpop.permute.xlu0 %781
  %v783 = vsel %vm278, %v782, 0
  %785 = vmatprep.subr.mxu0 0.0
  %786 = vmatpush1.msra.mxu0 %v255
  %787 = vmatprep.subr.mxu0 0.0
  %788 = vmatpush1.msra.mxu0 %v256
  %789 = vmatprep.subr.mxu0 0.0
  %790 = vmatpush1.msra.mxu0 0.0
  %791 = vmatprep.subr.mxu0 0.0
  %792 = vmatpush1.msra.mxu0 0.0
  %793 = vmatprep.subr.mxu0 0.0
  %794 = vmatpush1.msra.mxu0 0.0
  %795 = vmatprep.subr.mxu0 0.0
  %796 = vmatpush1.msra.mxu0 0.0
  %797 = vmatprep.subr.mxu0 0.0
  %798 = vmatpush1.msra.mxu0 0.0
  %799 = vmatprep.subr.mxu0 0.0
  %800 = vmatpush1.msra.mxu0 0.0
  %801 = vmatprep.subr.mxu0 0.0
  %802 = vmatpush1.msra.mxu0 0.0
  %803 = vmatprep.subr.mxu0 0.0
  %804 = vmatpush1.msra.mxu0 0.0
  %805 = vmatprep.subr.mxu0 0.0
  %806 = vmatpush1.msra.mxu0 0.0
  %807 = vmatprep.subr.mxu0 0.0
  %808 = vmatpush1.msra.mxu0 0.0
  %809 = vmatprep.subr.mxu0 0.0
  %810 = vmatpush1.msra.mxu0 0.0
  %811 = vmatprep.subr.mxu0 0.0
  %812 = vmatpush1.msra.mxu0 0.0
  %813 = vmatprep.subr.mxu0 0.0
  %814 = vmatpush1.msra.mxu0 0.0
  %815 = vmatprep.subr.mxu0 0.0
  %816 = vmatpush1.msra.mxu0 0.0
  %817 = vmatprep.subr.mxu0 0.0
  %818 = vmatpush1.msra.mxu0 0.0
  %819 = vmatprep.subr.mxu0 0.0
  %820 = vmatpush1.msra.mxu0 0.0
  %821 = vmatprep.subr.mxu0 0.0
  %822 = vmatpush1.msra.mxu0 0.0
  %823 = vmatprep.subr.mxu0 0.0
  %824 = vmatpush1.msra.mxu0 0.0
  %825 = vmatprep.subr.mxu0 0.0
  %826 = vmatpush1.msra.mxu0 0.0
  %827 = vmatprep.subr.mxu0 0.0
  %828 = vmatpush1.msra.mxu0 0.0
  %829 = vmatprep.subr.mxu0 0.0
  %830 = vmatpush1.msra.mxu0 0.0
  %831 = vmatprep.subr.mxu0 0.0
  %832 = vmatpush1.msra.mxu0 0.0
  %833 = vmatprep.subr.mxu0 0.0
  %834 = vmatpush1.msra.mxu0 0.0
  %835 = vmatprep.subr.mxu0 0.0
  %836 = vmatpush1.msra.mxu0 0.0
  %837 = vmatprep.subr.mxu0 0.0
  %838 = vmatpush1.msra.mxu0 0.0
  %839 = vmatprep.subr.mxu0 0.0
  %840 = vmatpush1.msra.mxu0 0.0
  %841 = vmatprep.subr.mxu0 0.0
  %842 = vmatpush1.msra.mxu0 0.0
  %843 = vmatprep.subr.mxu0 0.0
  %844 = vmatpush1.msra.mxu0 0.0
  %845 = vmatprep.subr.mxu0 0.0
  %846 = vmatpush1.msra.mxu0 0.0
  %847 = vmatprep.subr.mxu0 0.0
  %848 = vmatpush1.msra.mxu0 0.0
  %849 = vmatprep.mubr.f32.mxu0 0.0
  %850 = vmatmul.mubr.f32.gmra.mrb[0].mxu0 %v783
  %v851 = vpop.f32.mrb[0].mxu0
  %v852 = vadd.f32 0.0, %v851
  %v853 = vpop.f32.mrb[0].mxu0
  %854 = vdwg.mxu0
  %v855 = vadd.f32 %v253, %v852
  %v856 = vxor.u32 %v855, 2147483648
  %v857 = vmul.f32 %v856, 1.442695
  %v858 = vpow.pop %v857
  %v859 = vadd.f32 %v858, 1.0
  %v860 = vrcp.pop %v859
  %v861 = vmul.f32 1.0, %v860
  %v862 = vtanh.pop %v855
  %v863 = vmul.f32 %v861, %v773
  %865 = vrot.lane.b32.xlu0 %v862, 80
  %v866 = vpop.permute.xlu0 %865
  %v868 = vmul.f32 %v861, %v866
  %870 = vrot.lane.b32.xlu0 %v868, 16
  %v871 = vpop.permute.xlu0 %870
  %v873 = vadd.f32 %v863, %v871
  %v874 = vtanh.pop %v873
  %876 = vrot.lane.b32.xlu0 %v874, 16
  %v877 = vpop.permute.xlu0 %876
  %v879 = vmul.f32 %v861, %v877
  %881 = vrot.lane.b32.xlu0 %v879, 96
  %v882 = vpop.permute.xlu0 %881
  %v883 = vsel %vm278, %v882, 0
  %885 = vmatprep.subr.mxu0 0.0
  %886 = vmatpush1.msra.mxu0 %v255
  %887 = vmatprep.subr.mxu0 0.0
  %888 = vmatpush1.msra.mxu0 %v256
  %889 = vmatprep.subr.mxu0 0.0
  %890 = vmatpush1.msra.mxu0 0.0
  %891 = vmatprep.subr.mxu0 0.0
  %892 = vmatpush1.msra.mxu0 0.0
  %893 = vmatprep.subr.mxu0 0.0
  %894 = vmatpush1.msra.mxu0 0.0
  %895 = vmatprep.subr.mxu0 0.0
  %896 = vmatpush1.msra.mxu0 0.0
  %897 = vmatprep.subr.mxu0 0.0
  %898 = vmatpush1.msra.mxu0 0.0
  %899 = vmatprep.subr.mxu0 0.0
  %900 = vmatpush1.msra.mxu0 0.0
  %901 = vmatprep.subr.mxu0 0.0
  %902 = vmatpush1.msra.mxu0 0.0
  %903 = vmatprep.subr.mxu0 0.0
  %904 = vmatpush1.msra.mxu0 0.0
  %905 = vmatprep.subr.mxu0 0.0
  %906 = vmatpush1.msra.mxu0 0.0
  %907 = vmatprep.subr.mxu0 0.0
  %908 = vmatpush1.msra.mxu0 0.0
  %909 = vmatprep.subr.mxu0 0.0
  %910 = vmatpush1.msra.mxu0 0.0
  %911 = vmatprep.subr.mxu0 0.0
  %912 = vmatpush1.msra.mxu0 0.0
  %913 = vmatprep.subr.mxu0 0.0
  %914 = vmatpush1.msra.mxu0 0.0
  %915 = vmatprep.subr.mxu0 0.0
  %916 = vmatpush1.msra.mxu0 0.0
  %917 = vmatprep.subr.mxu0 0.0
  %918 = vmatpush1.msra.mxu0 0.0
  %919 = vmatprep.subr.mxu0 0.0
  %920 = vmatpush1.msra.mxu0 0.0
  %921 = vmatprep.subr.mxu0 0.0
  %922 = vmatpush1.msra.mxu0 0.0
  %923 = vmatprep.subr.mxu0 0.0
  %924 = vmatpush1.msra.mxu0 0.0
  %925 = vmatprep.subr.mxu0 0.0
  %926 = vmatpush1.msra.mxu0 0.0
  %927 = vmatprep.subr.mxu0 0.0
  %928 = vmatpush1.msra.mxu0 0.0
  %929 = vmatprep.subr.mxu0 0.0
  %930 = vmatpush1.msra.mxu0 0.0
  %931 = vmatprep.subr.mxu0 0.0
  %932 = vmatpush1.msra.mxu0 0.0
  %933 = vmatprep.subr.mxu0 0.0
  %934 = vmatpush1.msra.mxu0 0.0
  %935 = vmatprep.subr.mxu0 0.0
  %936 = vmatpush1.msra.mxu0 0.0
  %937 = vmatprep.subr.mxu0 0.0
  %938 = vmatpush1.msra.mxu0 0.0
  %939 = vmatprep.subr.mxu0 0.0
  %940 = vmatpush1.msra.mxu0 0.0
  %941 = vmatprep.subr.mxu0 0.0
  %942 = vmatpush1.msra.mxu0 0.0
  %943 = vmatprep.subr.mxu0 0.0
  %944 = vmatpush1.msra.mxu0 0.0
  %945 = vmatprep.subr.mxu0 0.0
  %946 = vmatpush1.msra.mxu0 0.0
  %947 = vmatprep.subr.mxu0 0.0
  %948 = vmatpush1.msra.mxu0 0.0
  %949 = vmatprep.mubr.f32.mxu0 0.0
  %950 = vmatmul.mubr.f32.gmra.mrb[0].mxu0 %v883
  %v951 = vpop.f32.mrb[0].mxu0
  %v952 = vadd.f32 0.0, %v951
  %v953 = vpop.f32.mrb[0].mxu0
  %954 = vdwg.mxu0
  %v955 = vadd.f32 %v254, %v952
  %v956 = vxor.u32 %v955, 2147483648
  %v957 = vmul.f32 %v956, 1.442695
  %v958 = vpow.pop %v957
  %v959 = vadd.f32 %v958, 1.0
  %v960 = vrcp.pop %v959
  %v961 = vmul.f32 1.0, %v960
  %v962 = vtanh.pop %v955
  %v963 = vmul.f32 %v961, %v873
  %965 = vrot.lane.b32.xlu0 %v962, 80
  %v966 = vpop.permute.xlu0 %965
  %v968 = vmul.f32 %v961, %v966
  %970 = vrot.lane.b32.xlu0 %v968, 16
  %v971 = vpop.permute.xlu0 %970
  %v973 = vadd.f32 %v963, %v971
  %v974 = vtanh.pop %v973
  %976 = vrot.lane.b32.xlu0 %v974, 16
  %v977 = vpop.permute.xlu0 %976
  %v979 = vmul.f32 %v961, %v977
  %v980 = vld [vmem:[%s3] sm:$0xf]
  %v981 = vld [vmem:[%s11] sm:$0x3]
  %v982 = vld [vmem:[%s13] sm:$0x1]
  %v983 = vld [vmem:[%s15] sm:$0xff]
  %v984 = vld [vmem:[%s15 + $0x8] sm:$0xff]
  %v985 = vld [vmem:[%s15 + $0x10] sm:$0xff]
  %v986 = vld [vmem:[%s15 + $0x18] sm:$0xff]
  %v987 = vld [vmem:[%s15 + $0x20] sm:$0xff]
  %v988 = vld [vmem:[%s15 + $0x28] sm:$0xff]
  %v989 = vld [vmem:[%s15 + $0x30] sm:$0xff]
  %v990 = vld [vmem:[%s15 + $0x38] sm:$0xff]
  %v991 = vld [vmem:[%s17] sm:$0xf]
  %v992 = vld [vmem:[%s19] sm:$0xf]
  %v993 = vld [vmem:[%s21] sm:$0xf]
  %v994 = vld [vmem:[%s23] sm:$0xf]
  %v995 = vld [vmem:[%s23 + $0x4] sm:$0xf]
  %v996 = vld [vmem:[%s23 + $0x8] sm:$0xf]
  %v997 = vld [vmem:[%s23 + $0xc] sm:$0xf]
  %v998 = vld [vmem:[%s23 + $0x10] sm:$0xf]
  %v999 = vld [vmem:[%s23 + $0x14] sm:$0xf]
  %v1000 = vld [vmem:[%s23 + $0x18] sm:$0xf]
  %v1001 = vld [vmem:[%s23 + $0x1c] sm:$0xf]
  %v1002 = vld [vmem:[%s23 + $0x20] sm:$0xf]
  %v1003 = vld [vmem:[%s23 + $0x24] sm:$0xf]
  %v1004 = vld [vmem:[%s23 + $0x28] sm:$0xf]
  %v1005 = vld [vmem:[%s23 + $0x2c] sm:$0xf]
  %v1006 = vld [vmem:[%s23 + $0x30] sm:$0xf]
  %v1007 = vld [vmem:[%s23 + $0x34] sm:$0xf]
  %v1008 = vld [vmem:[%s23 + $0x38] sm:$0xf]
  %v1009 = vld [vmem:[%s23 + $0x3c] sm:$0xf]
  %v1010 = vld [vmem:[%s23 + $0x40] sm:$0xf]
  %v1011 = vld [vmem:[%s23 + $0x44] sm:$0xf]
  %v1012 = vld [vmem:[%s23 + $0x48] sm:$0xf]
  %v1013 = vld [vmem:[%s23 + $0x4c] sm:$0xf]
  %v1014 = vld [vmem:[%s23 + $0x50] sm:$0xf]
  %v1015 = vld [vmem:[%s23 + $0x54] sm:$0xf]
  %v1016 = vld [vmem:[%s23 + $0x58] sm:$0xf]
  %v1017 = vld [vmem:[%s23 + $0x5c] sm:$0xf]
  %v1018 = vld [vmem:[%s23 + $0x60] sm:$0xf]
  %v1019 = vld [vmem:[%s23 + $0x64] sm:$0xf]
  %v1020 = vld [vmem:[%s23 + $0x68] sm:$0xf]
  %v1021 = vld [vmem:[%s23 + $0x6c] sm:$0xf]
  %v1022 = vld [vmem:[%s23 + $0x70] sm:$0xf]
  %v1023 = vld [vmem:[%s23 + $0x74] sm:$0xf]
  %v1024 = vld [vmem:[%s23 + $0x78] sm:$0xf]
  %v1025 = vld [vmem:[%s23 + $0x7c] sm:$0xf]
  %v1026 = vld [vmem:[%s23 + $0x80] sm:$0xf]
  %v1027 = vld [vmem:[%s23 + $0x84] sm:$0xf]
  %v1028 = vld [vmem:[%s23 + $0x88] sm:$0xf]
  %v1029 = vld [vmem:[%s23 + $0x8c] sm:$0xf]
  %v1030 = vld [vmem:[%s23 + $0x90] sm:$0xf]
  %v1031 = vld [vmem:[%s23 + $0x94] sm:$0xf]
  %v1032 = vld [vmem:[%s23 + $0x98] sm:$0xf]
  %v1033 = vld [vmem:[%s23 + $0x9c] sm:$0xf]
  %v1034 = vld [vmem:[%s23 + $0xa0] sm:$0xf]
  %v1035 = vld [vmem:[%s23 + $0xa4] sm:$0xf]
  %v1036 = vld [vmem:[%s23 + $0xa8] sm:$0xf]
  %v1037 = vld [vmem:[%s23 + $0xac] sm:$0xf]
  %v1038 = vld [vmem:[%s23 + $0xb0] sm:$0xf]
  %v1039 = vld [vmem:[%s23 + $0xb4] sm:$0xf]
  %v1040 = vld [vmem:[%s23 + $0xb8] sm:$0xf]
  %v1041 = vld [vmem:[%s23 + $0xbc] sm:$0xf]
  %v1042 = vld [vmem:[%s23 + $0xc0] sm:$0xf]
  %v1043 = vld [vmem:[%s23 + $0xc4] sm:$0xf]
  %v1044 = vld [vmem:[%s23 + $0xc8] sm:$0xf]
  %v1045 = vld [vmem:[%s23 + $0xcc] sm:$0xf]
  %v1046 = vld [vmem:[%s23 + $0xd0] sm:$0xf]
  %v1047 = vld [vmem:[%s23 + $0xd4] sm:$0xf]
  %v1048 = vld [vmem:[%s23 + $0xd8] sm:$0xf]
  %v1049 = vld [vmem:[%s23 + $0xdc] sm:$0xf]
  %v1050 = vld [vmem:[%s23 + $0xe0] sm:$0xf]
  %v1051 = vld [vmem:[%s23 + $0xe4] sm:$0xf]
  %v1052 = vld [vmem:[%s23 + $0xe8] sm:$0xf]
  %v1053 = vld [vmem:[%s23 + $0xec] sm:$0xf]
  %v1054 = vld [vmem:[%s23 + $0xf0] sm:$0xf]
  %v1055 = vld [vmem:[%s23 + $0xf4] sm:$0xf]
  %v1056 = vld [vmem:[%s23 + $0xf8] sm:$0xf]
  %v1057 = vld [vmem:[%s23 + $0xfc] sm:$0xf]
  %v1058 = vld [vmem:[%s25] sm:$0x1]
  %v1059 = vld [vmem:[%s27] sm:$0x1]
  %v1060 = vld [vmem:[%s29] sm:$0x1]
  %1062 = vset.pattern.permute.xlu0 0
  %1063 = vperm.xlu0 %1062, %v980
  %v1064 = vpop.permute.xlu0 %1063
  %v1066 = vlaneseq
  %v1067 = vshrl.u32 %v1066, 7
  %v1068 = vsub.s32 0, %v1067
  %v1069 = vrot.slane %v981, %v1068
  %v1070 = vmul.f32 %v1064, %v1069
  %1071 = vset.pattern.permute.xlu0 1
  %1072 = vperm.xlu0 %1071, %v980
  %v1073 = vpop.permute.xlu0 %1072
  %v1075 = vlaneseq
  %v1076 = vshrl.u32 %v1075, 7
  %v1077 = vsub.s32 1, %v1076
  %v1078 = vrot.slane %v981, %v1077
  %v1079 = vmul.f32 %v1073, %v1078
  %v1080 = vadd.f32 %v1070, %v1079
  %v1083 = vunpack.c.l.s4 1966171168
  %v1084 = vunpack.c.0.s8 %v1083
  %v1085 = vlaneseq
  %v1086 = vshrl.u32 %v1085, 7
  %v1087 = vsub.s32 %v1084, %v1086
  %v1088 = vrot.slane %v1080, %v1087
  %v1089 = vcombine.high %v1088, %v1088
  %v1091 = vunpack.c.l.s4 1966171168
  %v1092 = vunpack.c.0.s8 %v1091
  %v1093 = vlaneseq
  %v1094 = vshrl.u32 %v1093, 7
  %v1095 = vsub.s32 %v1092, %v1094
  %v1096 = vrot.slane %v1088, %v1095
  %v1098 = vunpack.c.l.s4 1966171168
  %v1099 = vunpack.c.0.s8 %v1098
  %v1100 = vlaneseq
  %v1101 = vshrl.u32 %v1100, 7
  %v1102 = vsub.s32 %v1099, %v1101
  %v1103 = vrot.slane %v1089, %v1102
  %v1104 = vlaneseq
  %v1105 = vshrl.u32 %v1104, 7
  %v1106 = vsub.s32 0, %v1105
  %v1107 = vrot.slane %v1096, %v1106
  %v1108 = vlaneseq
  %v1109 = vshrl.u32 %v1108, 7
  %v1110 = vsub.s32 0, %v1109
  %v1111 = vrot.slane %v1103, %v1110
  %v1114 = vsub.f32 %v1080, %v1107
  %v1115 = vsub.f32 %v1080, %v1111
  %v1117 = vlaneseq
  %v1118 = vshrl.u32 %v1117, 7
  %v1119 = vsub.s32 0, %v1118
  %v1120 = vrot.slane %v982, %v1119
  %v1122 = vadd.f32 %v1114, %v1120
  %v1123 = vadd.f32 %v1115, %v1120
  %v1126 = vcombine.low %v1122, %v1123
  %v1128 = vunpack.c.l.s4 1983009808
  %v1129 = vunpack.c.0.s8 %v1128
  %v1130 = vlaneseq
  %v1131 = vshrl.u32 %v1130, 7
  %v1132 = vsub.s32 %v1129, %v1131
  %v1133 = vrot.slane %v1126, %v1132
  %v1136 = vcombine.low %v979, %v979
  %v1138 = vunpack.c.l.s4 1983009808
  %v1139 = vunpack.c.0.s8 %v1138
  %v1140 = vlaneseq
  %v1141 = vshrl.u32 %v1140, 7
  %v1142 = vsub.s32 %v1139, %v1141
  %v1143 = vrot.slane %v1136, %v1142
  %1144 = vrot.lane.b32.xlu0 %v1143, 112
  %v1145 = vpop.permute.xlu0 %1144
  %v1147 = vsel %vm278, %v1133, %v1145
  %v1148 = vpack.c.bf16 %v1147, %v1147
  %v1150 = vlaneseq
  %v1151 = vshrl.u32 %v1150, 7
  %v1152 = vsub.s32 0, %v1151
  %v1153 = vrot.slane %v991, %v1152
  %v1154 = vlaneseq
  %v1155 = vshrl.u32 %v1154, 7
  %v1156 = vsub.s32 1, %v1155
  %v1157 = vrot.slane %v991, %v1156
  %v1158 = vlaneseq
  %v1159 = vshrl.u32 %v1158, 7
  %v1160 = vsub.s32 2, %v1159
  %v1161 = vrot.slane %v991, %v1160
  %v1162 = vlaneseq
  %v1163 = vshrl.u32 %v1162, 7
  %v1164 = vsub.s32 3, %v1163
  %v1165 = vrot.slane %v991, %v1164
  %v1178 = vunpack.c.l.b16 %v983
  %v1179 = vunpack.c.h.b16 %v983
  %v1180 = vunpack.c.l.b16 %v984
  %v1181 = vunpack.c.h.b16 %v984
  %v1182 = vunpack.c.l.b16 %v985
  %v1183 = vunpack.c.h.b16 %v985
  %v1184 = vunpack.c.l.b16 %v986
  %v1185 = vunpack.c.h.b16 %v986
  %v1186 = vunpack.c.l.b16 %v987
  %v1187 = vunpack.c.h.b16 %v987
  %v1188 = vunpack.c.l.b16 %v988
  %v1189 = vunpack.c.h.b16 %v988
  %v1190 = vunpack.c.l.b16 %v989
  %v1191 = vunpack.c.h.b16 %v989
  %v1192 = vunpack.c.l.b16 %v990
  %v1193 = vunpack.c.h.b16 %v990
  %v1194 = vpack.c.b16 %v1182, %v1178
  %v1195 = vpack.c.b16 %v1183, %v1179
  %v1196 = vpack.c.b16 %v1184, %v1180
  %v1197 = vpack.c.b16 %v1185, %v1181
  %v1198 = vpack.c.b16 %v1190, %v1186
  %v1199 = vpack.c.b16 %v1191, %v1187
  %v1200 = vpack.c.b16 %v1192, %v1188
  %v1201 = vpack.c.b16 %v1193, %v1189
  %vm1210 = vcmask 261120
  %v1212 = vsel %vm1210, %v1148, 0
  %1214 = vmatprep.subr.bf16.mxu0 %v1195
  %1215 = vmatpush1.bf16.msra.mxu0 %v1194
  %1216 = vmatprep.subr.bf16.mxu0 %v1199
  %1217 = vmatpush1.bf16.msra.mxu0 %v1198
  %1218 = vmatprep.subr.bf16.mxu0 0
  %1219 = vmatpush1.bf16.msra.mxu0 0
  %1220 = vmatprep.subr.bf16.mxu0 0
  %1221 = vmatpush1.bf16.msra.mxu0 0
  %1222 = vmatprep.subr.bf16.mxu0 0
  %1223 = vmatpush1.bf16.msra.mxu0 0
  %1224 = vmatprep.subr.bf16.mxu0 0
  %1225 = vmatpush1.bf16.msra.mxu0 0
  %1226 = vmatprep.subr.bf16.mxu0 0
  %1227 = vmatpush1.bf16.msra.mxu0 0
  %1228 = vmatprep.subr.bf16.mxu0 0
  %1229 = vmatpush1.bf16.msra.mxu0 0
  %1230 = vmatprep.subr.bf16.mxu0 0
  %1231 = vmatpush1.bf16.msra.mxu0 0
  %1232 = vmatprep.subr.bf16.mxu0 0
  %1233 = vmatpush1.bf16.msra.mxu0 0
  %1234 = vmatprep.subr.bf16.mxu0 0
  %1235 = vmatpush1.bf16.msra.mxu0 0
  %1236 = vmatprep.subr.bf16.mxu0 0
  %1237 = vmatpush1.bf16.msra.mxu0 0
  %1238 = vmatprep.subr.bf16.mxu0 0
  %1239 = vmatpush1.bf16.msra.mxu0 0
  %1240 = vmatprep.subr.bf16.mxu0 0
  %1241 = vmatpush1.bf16.msra.mxu0 0
  %1242 = vmatprep.subr.bf16.mxu0 0
  %1243 = vmatpush1.bf16.msra.mxu0 0
  %1244 = vmatprep.subr.bf16.mxu0 0
  %1245 = vmatpush1.bf16.msra.mxu0 0
  %1246 = vmatprep.mubr.bf16.mxu0 0
  %1247 = vmatmul.mubr.bf16.gmra.mrb[0].mxu0 %v1212
  %v1248 = vpop.f32.mrb[0].mxu0
  %v1249 = vadd.f32 %v1153, %v1248
  %v1250 = vpop.f32.mrb[0].mxu0
  %v1251 = vadd.f32 %v1157, %v1250
  %v1252 = vpop.f32.mrb[0].mxu0
  %v1253 = vpop.f32.mrb[0].mxu0
  %1254 = vdwg.mxu0
  %1255 = vmatprep.subr.bf16.mxu0 %v1197
  %1256 = vmatpush1.bf16.msra.mxu0 %v1196
  %1257 = vmatprep.subr.bf16.mxu0 %v1201
  %1258 = vmatpush1.bf16.msra.mxu0 %v1200
  %1259 = vmatprep.subr.bf16.mxu0 0
  %1260 = vmatpush1.bf16.msra.mxu0 0
  %1261 = vmatprep.subr.bf16.mxu0 0
  %1262 = vmatpush1.bf16.msra.mxu0 0
  %1263 = vmatprep.subr.bf16.mxu0 0
  %1264 = vmatpush1.bf16.msra.mxu0 0
  %1265 = vmatprep.subr.bf16.mxu0 0
  %1266 = vmatpush1.bf16.msra.mxu0 0
  %1267 = vmatprep.subr.bf16.mxu0 0
  %1268 = vmatpush1.bf16.msra.mxu0 0
  %1269 = vmatprep.subr.bf16.mxu0 0
  %1270 = vmatpush1.bf16.msra.mxu0 0
  %1271 = vmatprep.subr.bf16.mxu0 0
  %1272 = vmatpush1.bf16.msra.mxu0 0
  %1273 = vmatprep.subr.bf16.mxu0 0
  %1274 = vmatpush1.bf16.msra.mxu0 0
  %1275 = vmatprep.subr.bf16.mxu0 0
  %1276 = vmatpush1.bf16.msra.mxu0 0
  %1277 = vmatprep.subr.bf16.mxu0 0
  %1278 = vmatpush1.bf16.msra.mxu0 0
  %1279 = vmatprep.subr.bf16.mxu0 0
  %1280 = vmatpush1.bf16.msra.mxu0 0
  %1281 = vmatprep.subr.bf16.mxu0 0
  %1282 = vmatpush1.bf16.msra.mxu0 0
  %1283 = vmatprep.subr.bf16.mxu0 0
  %1284 = vmatpush1.bf16.msra.mxu0 0
  %1285 = vmatprep.subr.bf16.mxu0 0
  %1286 = vmatpush1.bf16.msra.mxu0 0
  %1287 = vmatprep.mubr.bf16.mxu0 0
  %1288 = vmatmul.mubr.bf16.gmra.mrb[0].mxu0 %v1212
  %v1289 = vpop.f32.mrb[0].mxu0
  %v1290 = vadd.f32 %v1161, %v1289
  %v1291 = vpop.f32.mrb[0].mxu0
  %v1292 = vadd.f32 %v1165, %v1291
  %v1293 = vpop.f32.mrb[0].mxu0
  %v1294 = vpop.f32.mrb[0].mxu0
  %1295 = vdwg.mxu0
  %vm1296 = vcmask 1043456
  %v1297 = vsel %vm1296, %v1249, 0.0
  %v1298 = vrot.slane %v1297, 4
  %v1299 = vadd.f32 %v1297, %v1298
  %v1300 = vrot.slane %v1299, 2
  %v1301 = vadd.f32 %v1299, %v1300
  %v1302 = vrot.slane %v1301, 1
  %v1303 = vadd.f32 %v1301, %v1302
  %v1304 = vsel %vm1296, %v1251, 0.0
  %v1305 = vrot.slane %v1304, 4
  %v1306 = vadd.f32 %v1304, %v1305
  %v1307 = vrot.slane %v1306, 2
  %v1308 = vadd.f32 %v1306, %v1307
  %v1309 = vrot.slane %v1308, 1
  %v1310 = vadd.f32 %v1308, %v1309
  %v1311 = vsel %vm1296, %v1290, 0.0
  %v1312 = vrot.slane %v1311, 4
  %v1313 = vadd.f32 %v1311, %v1312
  %v1314 = vrot.slane %v1313, 2
  %v1315 = vadd.f32 %v1313, %v1314
  %v1316 = vrot.slane %v1315, 1
  %v1317 = vadd.f32 %v1315, %v1316
  %v1318 = vsel %vm1296, %v1292, 0.0
  %v1319 = vrot.slane %v1318, 4
  %v1320 = vadd.f32 %v1318, %v1319
  %v1321 = vrot.slane %v1320, 2
  %v1322 = vadd.f32 %v1320, %v1321
  %v1323 = vrot.slane %v1322, 1
  %v1324 = vadd.f32 %v1322, %v1323
  %v1325 = vrcp.pop 4.0
  %v1326 = vmul.f32 %v1303, %v1325
  %v1327 = vmul.f32 %v1310, %v1325
  %v1328 = vmul.f32 %v1317, %v1325
  %v1329 = vmul.f32 %v1324, %v1325
  %v1330 = vsub.f32 %v1249, %v1326
  %v1331 = vsub.f32 %v1251, %v1327
  %v1332 = vsub.f32 %v1290, %v1328
  %v1333 = vsub.f32 %v1292, %v1329
  %v1334 = vmul.f32 %v1330, %v1330
  %v1335 = vmul.f32 %v1331, %v1331
  %v1336 = vmul.f32 %v1332, %v1332
  %v1337 = vmul.f32 %v1333, %v1333
  %v1338 = vsel %vm1296, %v1334, 0.0
  %v1339 = vrot.slane %v1338, 4
  %v1340 = vadd.f32 %v1338, %v1339
  %v1341 = vrot.slane %v1340, 2
  %v1342 = vadd.f32 %v1340, %v1341
  %v1343 = vrot.slane %v1342, 1
  %v1344 = vadd.f32 %v1342, %v1343
  %v1345 = vsel %vm1296, %v1335, 0.0
  %v1346 = vrot.slane %v1345, 4
  %v1347 = vadd.f32 %v1345, %v1346
  %v1348 = vrot.slane %v1347, 2
  %v1349 = vadd.f32 %v1347, %v1348
  %v1350 = vrot.slane %v1349, 1
  %v1351 = vadd.f32 %v1349, %v1350
  %v1352 = vsel %vm1296, %v1336, 0.0
  %v1353 = vrot.slane %v1352, 4
  %v1354 = vadd.f32 %v1352, %v1353
  %v1355 = vrot.slane %v1354, 2
  %v1356 = vadd.f32 %v1354, %v1355
  %v1357 = vrot.slane %v1356, 1
  %v1358 = vadd.f32 %v1356, %v1357
  %v1359 = vsel %vm1296, %v1337, 0.0
  %v1360 = vrot.slane %v1359, 4
  %v1361 = vadd.f32 %v1359, %v1360
  %v1362 = vrot.slane %v1361, 2
  %v1363 = vadd.f32 %v1361, %v1362
  %v1364 = vrot.slane %v1363, 1
  %v1365 = vadd.f32 %v1363, %v1364
  %v1366 = vmul.f32 %v1344, %v1325
  %v1367 = vmul.f32 %v1351, %v1325
  %v1368 = vmul.f32 %v1358, %v1325
  %v1369 = vmul.f32 %v1365, %v1325
  %v1370 = vadd.f32 %v1366, 1e-05
  %v1371 = vadd.f32 %v1367, 1e-05
  %v1372 = vadd.f32 %v1368, 1e-05
  %v1373 = vadd.f32 %v1369, 1e-05
  %v1374 = vrsqrt.pop %v1370
  %v1375 = vrsqrt.pop %v1371
  %v1376 = vrsqrt.pop %v1372
  %v1377 = vrsqrt.pop %v1373
  %v1378 = vmul.f32 %v1330, %v1374
  %v1379 = vmul.f32 %v1331, %v1375
  %v1380 = vmul.f32 %v1332, %v1376
  %v1381 = vmul.f32 %v1333, %v1377
  %v1383 = vlaneseq
  %v1384 = vshrl.u32 %v1383, 7
  %v1385 = vsub.s32 0, %v1384
  %v1386 = vrot.slane %v992, %v1385
  %v1387 = vlaneseq
  %v1388 = vshrl.u32 %v1387, 7
  %v1389 = vsub.s32 1, %v1388
  %v1390 = vrot.slane %v992, %v1389
  %v1391 = vlaneseq
  %v1392 = vshrl.u32 %v1391, 7
  %v1393 = vsub.s32 2, %v1392
  %v1394 = vrot.slane %v992, %v1393
  %v1395 = vlaneseq
  %v1396 = vshrl.u32 %v1395, 7
  %v1397 = vsub.s32 3, %v1396
  %v1398 = vrot.slane %v992, %v1397
  %v1403 = vmul.f32 %v1378, %v1386
  %v1404 = vmul.f32 %v1379, %v1390
  %v1405 = vmul.f32 %v1380, %v1394
  %v1406 = vmul.f32 %v1381, %v1398
  %v1408 = vlaneseq
  %v1409 = vshrl.u32 %v1408, 7
  %v1410 = vsub.s32 0, %v1409
  %v1411 = vrot.slane %v993, %v1410
  %v1412 = vlaneseq
  %v1413 = vshrl.u32 %v1412, 7
  %v1414 = vsub.s32 1, %v1413
  %v1415 = vrot.slane %v993, %v1414
  %v1416 = vlaneseq
  %v1417 = vshrl.u32 %v1416, 7
  %v1418 = vsub.s32 2, %v1417
  %v1419 = vrot.slane %v993, %v1418
  %v1420 = vlaneseq
  %v1421 = vshrl.u32 %v1420, 7
  %v1422 = vsub.s32 3, %v1421
  %v1423 = vrot.slane %v993, %v1422
  %v1428 = vadd.f32 %v1403, %v1411
  %v1429 = vadd.f32 %v1404, %v1415
  %v1430 = vadd.f32 %v1405, %v1419
  %v1431 = vadd.f32 %v1406, %v1423
  %v1432 = vmax.f32 %v1428, 0.0
  %v1433 = vmax.f32 %v1429, 0.0
  %v1434 = vmax.f32 %v1430, 0.0
  %v1435 = vmax.f32 %v1431, 0.0
  %v1436 = vpack.c.bf16 %v1432, %v1432
  %v1437 = vpack.c.bf16 %v1433, %v1433
  %v1438 = vpack.c.bf16 %v1434, %v1434
  %v1439 = vpack.c.bf16 %v1435, %v1435
  %v1441 = vlaneseq
  %v1442 = vshrl.u32 %v1441, 7
  %v1443 = vsub.s32 0, %v1442
  %v1444 = vrot.slane %v1058, %v1443
  %v1510 = vunpack.c.l.b16 %v994
  %v1511 = vunpack.c.l.b16 %v995
  %v1512 = vunpack.c.l.b16 %v996
  %v1513 = vunpack.c.l.b16 %v997
  %v1514 = vunpack.c.l.b16 %v998
  %v1515 = vunpack.c.l.b16 %v999
  %v1516 = vunpack.c.l.b16 %v1000
  %v1517 = vunpack.c.l.b16 %v1001
  %v1518 = vunpack.c.l.b16 %v1002
  %v1519 = vunpack.c.l.b16 %v1003
  %v1520 = vunpack.c.l.b16 %v1004
  %v1521 = vunpack.c.l.b16 %v1005
  %v1522 = vunpack.c.l.b16 %v1006
  %v1523 = vunpack.c.l.b16 %v1007
  %v1524 = vunpack.c.l.b16 %v1008
  %v1525 = vunpack.c.l.b16 %v1009
  %v1526 = vunpack.c.l.b16 %v1010
  %v1527 = vunpack.c.l.b16 %v1011
  %v1528 = vunpack.c.l.b16 %v1012
  %v1529 = vunpack.c.l.b16 %v1013
  %v1530 = vunpack.c.l.b16 %v1014
  %v1531 = vunpack.c.l.b16 %v1015
  %v1532 = vunpack.c.l.b16 %v1016
  %v1533 = vunpack.c.l.b16 %v1017
  %v1534 = vunpack.c.l.b16 %v1018
  %v1535 = vunpack.c.l.b16 %v1019
  %v1536 = vunpack.c.l.b16 %v1020
  %v1537 = vunpack.c.l.b16 %v1021
  %v1538 = vunpack.c.l.b16 %v1022
  %v1539 = vunpack.c.l.b16 %v1023
  %v1540 = vunpack.c.l.b16 %v1024
  %v1541 = vunpack.c.l.b16 %v1025
  %v1542 = vunpack.c.l.b16 %v1026
  %v1543 = vunpack.c.l.b16 %v1027
  %v1544 = vunpack.c.l.b16 %v1028
  %v1545 = vunpack.c.l.b16 %v1029
  %v1546 = vunpack.c.l.b16 %v1030
  %v1547 = vunpack.c.l.b16 %v1031
  %v1548 = vunpack.c.l.b16 %v1032
  %v1549 = vunpack.c.l.b16 %v1033
  %v1550 = vunpack.c.l.b16 %v1034
  %v1551 = vunpack.c.l.b16 %v1035
  %v1552 = vunpack.c.l.b16 %v1036
  %v1553 = vunpack.c.l.b16 %v1037
  %v1554 = vunpack.c.l.b16 %v1038
  %v1555 = vunpack.c.l.b16 %v1039
  %v1556 = vunpack.c.l.b16 %v1040
  %v1557 = vunpack.c.l.b16 %v1041
  %v1558 = vunpack.c.l.b16 %v1042
  %v1559 = vunpack.c.l.b16 %v1043
  %v1560 = vunpack.c.l.b16 %v1044
  %v1561 = vunpack.c.l.b16 %v1045
  %v1562 = vunpack.c.l.b16 %v1046
  %v1563 = vunpack.c.l.b16 %v1047
  %v1564 = vunpack.c.l.b16 %v1048
  %v1565 = vunpack.c.l.b16 %v1049
  %v1566 = vunpack.c.l.b16 %v1050
  %v1567 = vunpack.c.l.b16 %v1051
  %v1568 = vunpack.c.l.b16 %v1052
  %v1569 = vunpack.c.l.b16 %v1053
  %v1570 = vunpack.c.l.b16 %v1054
  %v1571 = vunpack.c.l.b16 %v1055
  %v1572 = vunpack.c.l.b16 %v1056
  %v1573 = vunpack.c.l.b16 %v1057
  %v1574 = vpack.c.b16 %v1511, %v1510
  %v1575 = vpack.c.b16 %v1513, %v1512
  %v1576 = vpack.c.b16 %v1515, %v1514
  %v1577 = vpack.c.b16 %v1517, %v1516
  %v1578 = vpack.c.b16 %v1519, %v1518
  %v1579 = vpack.c.b16 %v1521, %v1520
  %v1580 = vpack.c.b16 %v1523, %v1522
  %v1581 = vpack.c.b16 %v1525, %v1524
  %v1582 = vpack.c.b16 %v1527, %v1526
  %v1583 = vpack.c.b16 %v1529, %v1528
  %v1584 = vpack.c.b16 %v1531, %v1530
  %v1585 = vpack.c.b16 %v1533, %v1532
  %v1586 = vpack.c.b16 %v1535, %v1534
  %v1587 = vpack.c.b16 %v1537, %v1536
  %v1588 = vpack.c.b16 %v1539, %v1538
  %v1589 = vpack.c.b16 %v1541, %v1540
  %v1590 = vpack.c.b16 %v1543, %v1542
  %v1591 = vpack.c.b16 %v1545, %v1544
  %v1592 = vpack.c.b16 %v1547, %v1546
  %v1593 = vpack.c.b16 %v1549, %v1548
  %v1594 = vpack.c.b16 %v1551, %v1550
  %v1595 = vpack.c.b16 %v1553, %v1552
  %v1596 = vpack.c.b16 %v1555, %v1554
  %v1597 = vpack.c.b16 %v1557, %v1556
  %v1598 = vpack.c.b16 %v1559, %v1558
  %v1599 = vpack.c.b16 %v1561, %v1560
  %v1600 = vpack.c.b16 %v1563, %v1562
  %v1601 = vpack.c.b16 %v1565, %v1564
  %v1602 = vpack.c.b16 %v1567, %v1566
  %v1603 = vpack.c.b16 %v1569, %v1568
  %v1604 = vpack.c.b16 %v1571, %v1570
  %v1605 = vpack.c.b16 %v1573, %v1572
  %1638 = vmatprep.subr.bf16.mxu0 0
  %1639 = vmatpush1.bf16.msra.mxu0 %v1574
  %1640 = vmatprep.subr.bf16.mxu0 0
  %1641 = vmatpush1.bf16.msra.mxu0 %v1575
  %1642 = vmatprep.subr.bf16.mxu0 0
  %1643 = vmatpush1.bf16.msra.mxu0 %v1576
  %1644 = vmatprep.subr.bf16.mxu0 0
  %1645 = vmatpush1.bf16.msra.mxu0 %v1577
  %1646 = vmatprep.subr.bf16.mxu0 0
  %1647 = vmatpush1.bf16.msra.mxu0 %v1578
  %1648 = vmatprep.subr.bf16.mxu0 0
  %1649 = vmatpush1.bf16.msra.mxu0 %v1579
  %1650 = vmatprep.subr.bf16.mxu0 0
  %1651 = vmatpush1.bf16.msra.mxu0 %v1580
  %1652 = vmatprep.subr.bf16.mxu0 0
  %1653 = vmatpush1.bf16.msra.mxu0 %v1581
  %1654 = vmatprep.subr.bf16.mxu0 0
  %1655 = vmatpush1.bf16.msra.mxu0 %v1582
  %1656 = vmatprep.subr.bf16.mxu0 0
  %1657 = vmatpush1.bf16.msra.mxu0 %v1583
  %1658 = vmatprep.subr.bf16.mxu0 0
  %1659 = vmatpush1.bf16.msra.mxu0 %v1584
  %1660 = vmatprep.subr.bf16.mxu0 0
  %1661 = vmatpush1.bf16.msra.mxu0 %v1585
  %1662 = vmatprep.subr.bf16.mxu0 0
  %1663 = vmatpush1.bf16.msra.mxu0 %v1586
  %1664 = vmatprep.subr.bf16.mxu0 0
  %1665 = vmatpush1.bf16.msra.mxu0 %v1587
  %1666 = vmatprep.subr.bf16.mxu0 0
  %1667 = vmatpush1.bf16.msra.mxu0 %v1588
  %1668 = vmatprep.subr.bf16.mxu0 0
  %1669 = vmatpush1.bf16.msra.mxu0 %v1589
  %1670 = vmatprep.mubr.bf16.mxu0 %v1437
  %1671 = vmatmul.mubr.bf16.gmra.mrb[0].mxu0 %v1436
  %v1672 = vpop.f32.mrb[0].mxu0
  %v1673 = vadd.f32 %v1444, %v1672
  %v1674 = vpop.f32.mrb[0].mxu0
  %v1675 = vpop.f32.mrb[0].mxu0
  %v1676 = vpop.f32.mrb[0].mxu0
  %1677 = vdwg.mxu0
  %1678 = vmatprep.subr.bf16.mxu0 0
  %1679 = vmatpush1.bf16.msra.mxu0 %v1590
  %1680 = vmatprep.subr.bf16.mxu0 0
  %1681 = vmatpush1.bf16.msra.mxu0 %v1591
  %1682 = vmatprep.subr.bf16.mxu0 0
  %1683 = vmatpush1.bf16.msra.mxu0 %v1592
  %1684 = vmatprep.subr.bf16.mxu0 0
  %1685 = vmatpush1.bf16.msra.mxu0 %v1593
  %1686 = vmatprep.subr.bf16.mxu0 0
  %1687 = vmatpush1.bf16.msra.mxu0 %v1594
  %1688 = vmatprep.subr.bf16.mxu0 0
  %1689 = vmatpush1.bf16.msra.mxu0 %v1595
  %1690 = vmatprep.subr.bf16.mxu0 0
  %1691 = vmatpush1.bf16.msra.mxu0 %v1596
  %1692 = vmatprep.subr.bf16.mxu0 0
  %1693 = vmatpush1.bf16.msra.mxu0 %v1597
  %1694 = vmatprep.subr.bf16.mxu0 0
  %1695 = vmatpush1.bf16.msra.mxu0 %v1598
  %1696 = vmatprep.subr.bf16.mxu0 0
  %1697 = vmatpush1.bf16.msra.mxu0 %v1599
  %1698 = vmatprep.subr.bf16.mxu0 0
  %1699 = vmatpush1.bf16.msra.mxu0 %v1600
  %1700 = vmatprep.subr.bf16.mxu0 0
  %1701 = vmatpush1.bf16.msra.mxu0 %v1601
  %1702 = vmatprep.subr.bf16.mxu0 0
  %1703 = vmatpush1.bf16.msra.mxu0 %v1602
  %1704 = vmatprep.subr.bf16.mxu0 0
  %1705 = vmatpush1.bf16.msra.mxu0 %v1603
  %1706 = vmatprep.subr.bf16.mxu0 0
  %1707 = vmatpush1.bf16.msra.mxu0 %v1604
  %1708 = vmatprep.subr.bf16.mxu0 0
  %1709 = vmatpush1.bf16.msra.mxu0 %v1605
  %1710 = vmatprep.mubr.bf16.mxu0 %v1439
  %1711 = vmatmul.mubr.bf16.gmra.mrb[0].mxu0 %v1438
  %v1712 = vpop.f32.mrb[0].mxu0
  %v1713 = vadd.f32 %v1673, %v1712
  %v1714 = vpop.f32.mrb[0].mxu0
  %v1715 = vpop.f32.mrb[0].mxu0
  %v1716 = vpop.f32.mrb[0].mxu0
  %1717 = vdwg.mxu0
  %vm1718 = vcmask 519168
  %v1719 = vsel %vm1718, %v1713, 0.0
  %v1720 = vrot.slane %v1719, 4
  %v1721 = vadd.f32 %v1719, %v1720
  %v1722 = vrot.slane %v1721, 2
  %v1723 = vadd.f32 %v1721, %v1722
  %v1724 = vrot.slane %v1723, 1
  %v1725 = vadd.f32 %v1723, %v1724
  %v1726 = vmul.f32 %v1725, %v1325
  %v1727 = vsub.f32 %v1713, %v1726
  %v1728 = vmul.f32 %v1727, %v1727
  %v1729 = vsel %vm1718, %v1728, 0.0
  %v1730 = vrot.slane %v1729, 4
  %v1731 = vadd.f32 %v1729, %v1730
  %v1732 = vrot.slane %v1731, 2
  %v1733 = vadd.f32 %v1731, %v1732
  %v1734 = vrot.slane %v1733, 1
  %v1735 = vadd.f32 %v1733, %v1734
  %v1736 = vmul.f32 %v1735, %v1325
  %v1737 = vadd.f32 %v1736, 1e-05
  %v1738 = vrsqrt.pop %v1737
  %v1739 = vmul.f32 %v1727, %v1738
  %v1741 = vlaneseq
  %v1742 = vshrl.u32 %v1741, 7
  %v1743 = vsub.s32 0, %v1742
  %v1744 = vrot.slane %v1059, %v1743
  %v1746 = vmul.f32 %v1739, %v1744
  %v1748 = vlaneseq
  %v1749 = vshrl.u32 %v1748, 7
  %v1750 = vsub.s32 0, %v1749
  %v1751 = vrot.slane %v1060, %v1750
  %v1753 = vadd.f32 %v1746, %v1751
  %v1754 = vmax.f32 %v1753, 0.0
  %v1757 = vunpack.c.l.s4 1983009808
  %v1758 = vunpack.c.0.s8 %v1757
  %v1759 = vlaneseq
  %v1760 = vshrl.u32 %v1759, 7
  %v1761 = vsub.s32 %v1758, %v1760
  %v1762 = vrot.slane %v1754, %v1761
  %v1763 = vcombine.high %v1762, %v1762
  %vm1766 = vcmask 517120
  %v1767 = vsel %vm1766, %v1762, -inf
  %v1768 = vrot.slane %v1767, 4
  %v1769 = vmax.f32 %v1767, %v1768
  %v1770 = vrot.slane %v1769, 2
  %v1771 = vmax.f32 %v1769, %v1770
  %v1772 = vrot.slane %v1771, 1
  %v1773 = vmax.f32 %v1771, %v1772
  %v1774 = vsel %vm1766, %v1763, -inf
  %v1775 = vrot.slane %v1774, 4
  %v1776 = vmax.f32 %v1774, %v1775
  %v1777 = vrot.slane %v1776, 2
  %v1778 = vmax.f32 %v1776, %v1777
  %v1779 = vrot.slane %v1778, 1
  %v1780 = vmax.f32 %v1778, %v1779
  %v1781 = vcombine.high %v1096, %v1096
  %v1782 = vcombine.high %v1103, %v1103
  %v1783 = vlaneseq
  %v1784 = vshrl.u32 %v1783, 7
  %v1785 = vsub.s32 0, %v1784
  %v1786 = vrot.slane %v1781, %v1785
  %v1787 = vlaneseq
  %v1788 = vshrl.u32 %v1787, 7
  %v1789 = vsub.s32 0, %v1788
  %v1790 = vrot.slane %v1782, %v1789
  %v1793 = vsub.f32 %v1080, %v1786
  %v1794 = vsub.f32 %v1080, %v1790
  %v1795 = vadd.f32 %v1793, %v1120
  %v1796 = vadd.f32 %v1794, %v1120
  %v1800 = vunpack.c.l.s4 1983009808
  %v1801 = vunpack.c.0.s8 %v1800
  %v1802 = vlaneseq
  %v1803 = vshrl.u32 %v1802, 7
  %v1804 = vsub.s32 %v1801, %v1803
  %v1805 = vrot.slane %v1795, %v1804
  %v1806 = vcombine.high %v1805, %v1805
  %v1808 = vunpack.c.l.s4 1983009808
  %v1809 = vunpack.c.0.s8 %v1808
  %v1810 = vlaneseq
  %v1811 = vshrl.u32 %v1810, 7
  %v1812 = vsub.s32 %v1809, %v1811
  %v1813 = vrot.slane %v1796, %v1812
  %v1814 = vcombine.high %v1813, %v1813
  %v1816 = vunpack.c.l.s4 1983009808
  %v1817 = vunpack.c.0.s8 %v1816
  %v1818 = vlaneseq
  %v1819 = vshrl.u32 %v1818, 7
  %v1820 = vsub.s32 %v1817, %v1819
  %v1821 = vrot.slane %v979, %v1820
  %v1822 = vcombine.high %v1821, %v1821
  %v1823 = vcombine.low %v1806, %v1814
  %v1825 = vunpack.c.l.s4 1983009808
  %v1826 = vunpack.c.0.s8 %v1825
  %v1827 = vlaneseq
  %v1828 = vshrl.u32 %v1827, 7
  %v1829 = vsub.s32 %v1826, %v1828
  %v1830 = vrot.slane %v1823, %v1829
  %v1832 = vcombine.low %v1822, %v1822
  %v1834 = vunpack.c.l.s4 1983009808
  %v1835 = vunpack.c.0.s8 %v1834
  %v1836 = vlaneseq
  %v1837 = vshrl.u32 %v1836, 7
  %v1838 = vsub.s32 %v1835, %v1837
  %v1839 = vrot.slane %v1832, %v1838
  %1840 = vrot.lane.b32.xlu0 %v1839, 112
  %v1841 = vpop.permute.xlu0 %1840
  %v1843 = vsel %vm278, %v1830, %v1841
  %v1844 = vpack.c.bf16 %v1843, %v1843
  %v1846 = vsel %vm1210, %v1844, 0
  %1848 = vmatprep.subr.bf16.mxu0 %v1195
  %1849 = vmatpush1.bf16.msra.mxu0 %v1194
  %1850 = vmatprep.subr.bf16.mxu0 %v1199
  %1851 = vmatpush1.bf16.msra.mxu0 %v1198
  %1852 = vmatprep.subr.bf16.mxu0 0
  %1853 = vmatpush1.bf16.msra.mxu0 0
  %1854 = vmatprep.subr.bf16.mxu0 0
  %1855 = vmatpush1.bf16.msra.mxu0 0
  %1856 = vmatprep.subr.bf16.mxu0 0
  %1857 = vmatpush1.bf16.msra.mxu0 0
  %1858 = vmatprep.subr.bf16.mxu0 0
  %1859 = vmatpush1.bf16.msra.mxu0 0
  %1860 = vmatprep.subr.bf16.mxu0 0
  %1861 = vmatpush1.bf16.msra.mxu0 0
  %1862 = vmatprep.subr.bf16.mxu0 0
  %1863 = vmatpush1.bf16.msra.mxu0 0
  %1864 = vmatprep.subr.bf16.mxu0 0
  %1865 = vmatpush1.bf16.msra.mxu0 0
  %1866 = vmatprep.subr.bf16.mxu0 0
  %1867 = vmatpush1.bf16.msra.mxu0 0
  %1868 = vmatprep.subr.bf16.mxu0 0
  %1869 = vmatpush1.bf16.msra.mxu0 0
  %1870 = vmatprep.subr.bf16.mxu0 0
  %1871 = vmatpush1.bf16.msra.mxu0 0
  %1872 = vmatprep.subr.bf16.mxu0 0
  %1873 = vmatpush1.bf16.msra.mxu0 0
  %1874 = vmatprep.subr.bf16.mxu0 0
  %1875 = vmatpush1.bf16.msra.mxu0 0
  %1876 = vmatprep.subr.bf16.mxu0 0
  %1877 = vmatpush1.bf16.msra.mxu0 0
  %1878 = vmatprep.subr.bf16.mxu0 0
  %1879 = vmatpush1.bf16.msra.mxu0 0
  %1880 = vmatprep.mubr.bf16.mxu0 0
  %1881 = vmatmul.mubr.bf16.gmra.mrb[0].mxu0 %v1846
  %v1882 = vpop.f32.mrb[0].mxu0
  %v1883 = vadd.f32 %v1153, %v1882
  %v1884 = vpop.f32.mrb[0].mxu0
  %v1885 = vadd.f32 %v1157, %v1884
  %v1886 = vpop.f32.mrb[0].mxu0
  %v1887 = vpop.f32.mrb[0].mxu0
  %1888 = vdwg.mxu0
  %1889 = vmatprep.subr.bf16.mxu0 %v1197
  %1890 = vmatpush1.bf16.msra.mxu0 %v1196
  %1891 = vmatprep.subr.bf16.mxu0 %v1201
  %1892 = vmatpush1.bf16.msra.mxu0 %v1200
  %1893 = vmatprep.subr.bf16.mxu0 0
  %1894 = vmatpush1.bf16.msra.mxu0 0
  %1895 = vmatprep.subr.bf16.mxu0 0
  %1896 = vmatpush1.bf16.msra.mxu0 0
  %1897 = vmatprep.subr.bf16.mxu0 0
  %1898 = vmatpush1.bf16.msra.mxu0 0
  %1899 = vmatprep.subr.bf16.mxu0 0
  %1900 = vmatpush1.bf16.msra.mxu0 0
  %1901 = vmatprep.subr.bf16.mxu0 0
  %1902 = vmatpush1.bf16.msra.mxu0 0
  %1903 = vmatprep.subr.bf16.mxu0 0
  %1904 = vmatpush1.bf16.msra.mxu0 0
  %1905 = vmatprep.subr.bf16.mxu0 0
  %1906 = vmatpush1.bf16.msra.mxu0 0
  %1907 = vmatprep.subr.bf16.mxu0 0
  %1908 = vmatpush1.bf16.msra.mxu0 0
  %1909 = vmatprep.subr.bf16.mxu0 0
  %1910 = vmatpush1.bf16.msra.mxu0 0
  %1911 = vmatprep.subr.bf16.mxu0 0
  %1912 = vmatpush1.bf16.msra.mxu0 0
  %1913 = vmatprep.subr.bf16.mxu0 0
  %1914 = vmatpush1.bf16.msra.mxu0 0
  %1915 = vmatprep.subr.bf16.mxu0 0
  %1916 = vmatpush1.bf16.msra.mxu0 0
  %1917 = vmatprep.subr.bf16.mxu0 0
  %1918 = vmatpush1.bf16.msra.mxu0 0
  %1919 = vmatprep.subr.bf16.mxu0 0
  %1920 = vmatpush1.bf16.msra.mxu0 0
  %1921 = vmatprep.mubr.bf16.mxu0 0
  %1922 = vmatmul.mubr.bf16.gmra.mrb[0].mxu0 %v1846
  %v1923 = vpop.f32.mrb[0].mxu0
  %v1924 = vadd.f32 %v1161, %v1923
  %v1925 = vpop.f32.mrb[0].mxu0
  %v1926 = vadd.f32 %v1165, %v1925
  %v1927 = vpop.f32.mrb[0].mxu0
  %v1928 = vpop.f32.mrb[0].mxu0
  %1929 = vdwg.mxu0
  %v1930 = vsel %vm1296, %v1883, 0.0
  %v1931 = vrot.slane %v1930, 4
  %v1932 = vadd.f32 %v1930, %v1931
  %v1933 = vrot.slane %v1932, 2
  %v1934 = vadd.f32 %v1932, %v1933
  %v1935 = vrot.slane %v1934, 1
  %v1936 = vadd.f32 %v1934, %v1935
  %v1937 = vsel %vm1296, %v1885, 0.0
  %v1938 = vrot.slane %v1937, 4
  %v1939 = vadd.f32 %v1937, %v1938
  %v1940 = vrot.slane %v1939, 2
  %v1941 = vadd.f32 %v1939, %v1940
  %v1942 = vrot.slane %v1941, 1
  %v1943 = vadd.f32 %v1941, %v1942
  %v1944 = vsel %vm1296, %v1924, 0.0
  %v1945 = vrot.slane %v1944, 4
  %v1946 = vadd.f32 %v1944, %v1945
  %v1947 = vrot.slane %v1946, 2
  %v1948 = vadd.f32 %v1946, %v1947
  %v1949 = vrot.slane %v1948, 1
  %v1950 = vadd.f32 %v1948, %v1949
  %v1951 = vsel %vm1296, %v1926, 0.0
  %v1952 = vrot.slane %v1951, 4
  %v1953 = vadd.f32 %v1951, %v1952
  %v1954 = vrot.slane %v1953, 2
  %v1955 = vadd.f32 %v1953, %v1954
  %v1956 = vrot.slane %v1955, 1
  %v1957 = vadd.f32 %v1955, %v1956
  %v1958 = vmul.f32 %v1936, %v1325
  %v1959 = vmul.f32 %v1943, %v1325
  %v1960 = vmul.f32 %v1950, %v1325
  %v1961 = vmul.f32 %v1957, %v1325
  %v1962 = vsub.f32 %v1883, %v1958
  %v1963 = vsub.f32 %v1885, %v1959
  %v1964 = vsub.f32 %v1924, %v1960
  %v1965 = vsub.f32 %v1926, %v1961
  %v1966 = vmul.f32 %v1962, %v1962
  %v1967 = vmul.f32 %v1963, %v1963
  %v1968 = vmul.f32 %v1964, %v1964
  %v1969 = vmul.f32 %v1965, %v1965
  %v1970 = vsel %vm1296, %v1966, 0.0
  %v1971 = vrot.slane %v1970, 4
  %v1972 = vadd.f32 %v1970, %v1971
  %v1973 = vrot.slane %v1972, 2
  %v1974 = vadd.f32 %v1972, %v1973
  %v1975 = vrot.slane %v1974, 1
  %v1976 = vadd.f32 %v1974, %v1975
  %v1977 = vsel %vm1296, %v1967, 0.0
  %v1978 = vrot.slane %v1977, 4
  %v1979 = vadd.f32 %v1977, %v1978
  %v1980 = vrot.slane %v1979, 2
  %v1981 = vadd.f32 %v1979, %v1980
  %v1982 = vrot.slane %v1981, 1
  %v1983 = vadd.f32 %v1981, %v1982
  %v1984 = vsel %vm1296, %v1968, 0.0
  %v1985 = vrot.slane %v1984, 4
  %v1986 = vadd.f32 %v1984, %v1985
  %v1987 = vrot.slane %v1986, 2
  %v1988 = vadd.f32 %v1986, %v1987
  %v1989 = vrot.slane %v1988, 1
  %v1990 = vadd.f32 %v1988, %v1989
  %v1991 = vsel %vm1296, %v1969, 0.0
  %v1992 = vrot.slane %v1991, 4
  %v1993 = vadd.f32 %v1991, %v1992
  %v1994 = vrot.slane %v1993, 2
  %v1995 = vadd.f32 %v1993, %v1994
  %v1996 = vrot.slane %v1995, 1
  %v1997 = vadd.f32 %v1995, %v1996
  %v1998 = vmul.f32 %v1976, %v1325
  %v1999 = vmul.f32 %v1983, %v1325
  %v2000 = vmul.f32 %v1990, %v1325
  %v2001 = vmul.f32 %v1997, %v1325
  %v2002 = vadd.f32 %v1998, 1e-05
  %v2003 = vadd.f32 %v1999, 1e-05
  %v2004 = vadd.f32 %v2000, 1e-05
  %v2005 = vadd.f32 %v2001, 1e-05
  %v2006 = vrsqrt.pop %v2002
  %v2007 = vrsqrt.pop %v2003
  %v2008 = vrsqrt.pop %v2004
  %v2009 = vrsqrt.pop %v2005
  %v2010 = vmul.f32 %v1962, %v2006
  %v2011 = vmul.f32 %v1963, %v2007
  %v2012 = vmul.f32 %v1964, %v2008
  %v2013 = vmul.f32 %v1965, %v2009
  %v2014 = vmul.f32 %v2010, %v1386
  %v2015 = vmul.f32 %v2011, %v1390
  %v2016 = vmul.f32 %v2012, %v1394
  %v2017 = vmul.f32 %v2013, %v1398
  %v2018 = vadd.f32 %v2014, %v1411
  %v2019 = vadd.f32 %v2015, %v1415
  %v2020 = vadd.f32 %v2016, %v1419
  %v2021 = vadd.f32 %v2017, %v1423
  %v2022 = vmax.f32 %v2018, 0.0
  %v2023 = vmax.f32 %v2019, 0.0
  %v2024 = vmax.f32 %v2020, 0.0
  %v2025 = vmax.f32 %v2021, 0.0
  %v2026 = vpack.c.bf16 %v2022, %v2022
  %v2027 = vpack.c.bf16 %v2023, %v2023
  %v2028 = vpack.c.bf16 %v2024, %v2024
  %v2029 = vpack.c.bf16 %v2025, %v2025
  %2030 = vmatprep.subr.bf16.mxu0 0
  %2031 = vmatpush1.bf16.msra.mxu0 %v1574
  %2032 = vmatprep.subr.bf16.mxu0 0
  %2033 = vmatpush1.bf16.msra.mxu0 %v1575
  %2034 = vmatprep.subr.bf16.mxu0 0
  %2035 = vmatpush1.bf16.msra.mxu0 %v1576
  %2036 = vmatprep.subr.bf16.mxu0 0
  %2037 = vmatpush1.bf16.msra.mxu0 %v1577
  %2038 = vmatprep.subr.bf16.mxu0 0
  %2039 = vmatpush1.bf16.msra.mxu0 %v1578
  %2040 = vmatprep.subr.bf16.mxu0 0
  %2041 = vmatpush1.bf16.msra.mxu0 %v1579
  %2042 = vmatprep.subr.bf16.mxu0 0
  %2043 = vmatpush1.bf16.msra.mxu0 %v1580
  %2044 = vmatprep.subr.bf16.mxu0 0
  %2045 = vmatpush1.bf16.msra.mxu0 %v1581
  %2046 = vmatprep.subr.bf16.mxu0 0
  %2047 = vmatpush1.bf16.msra.mxu0 %v1582
  %2048 = vmatprep.subr.bf16.mxu0 0
  %2049 = vmatpush1.bf16.msra.mxu0 %v1583
  %2050 = vmatprep.subr.bf16.mxu0 0
  %2051 = vmatpush1.bf16.msra.mxu0 %v1584
  %2052 = vmatprep.subr.bf16.mxu0 0
  %2053 = vmatpush1.bf16.msra.mxu0 %v1585
  %2054 = vmatprep.subr.bf16.mxu0 0
  %2055 = vmatpush1.bf16.msra.mxu0 %v1586
  %2056 = vmatprep.subr.bf16.mxu0 0
  %2057 = vmatpush1.bf16.msra.mxu0 %v1587
  %2058 = vmatprep.subr.bf16.mxu0 0
  %2059 = vmatpush1.bf16.msra.mxu0 %v1588
  %2060 = vmatprep.subr.bf16.mxu0 0
  %2061 = vmatpush1.bf16.msra.mxu0 %v1589
  %2062 = vmatprep.mubr.bf16.mxu0 %v2027
  %2063 = vmatmul.mubr.bf16.gmra.mrb[0].mxu0 %v2026
  %v2064 = vpop.f32.mrb[0].mxu0
  %v2065 = vadd.f32 %v1444, %v2064
  %v2066 = vpop.f32.mrb[0].mxu0
  %v2067 = vpop.f32.mrb[0].mxu0
  %v2068 = vpop.f32.mrb[0].mxu0
  %2069 = vdwg.mxu0
  %2070 = vmatprep.subr.bf16.mxu0 0
  %2071 = vmatpush1.bf16.msra.mxu0 %v1590
  %2072 = vmatprep.subr.bf16.mxu0 0
  %2073 = vmatpush1.bf16.msra.mxu0 %v1591
  %2074 = vmatprep.subr.bf16.mxu0 0
  %2075 = vmatpush1.bf16.msra.mxu0 %v1592
  %2076 = vmatprep.subr.bf16.mxu0 0
  %2077 = vmatpush1.bf16.msra.mxu0 %v1593
  %2078 = vmatprep.subr.bf16.mxu0 0
  %2079 = vmatpush1.bf16.msra.mxu0 %v1594
  %2080 = vmatprep.subr.bf16.mxu0 0
  %2081 = vmatpush1.bf16.msra.mxu0 %v1595
  %2082 = vmatprep.subr.bf16.mxu0 0
  %2083 = vmatpush1.bf16.msra.mxu0 %v1596
  %2084 = vmatprep.subr.bf16.mxu0 0
  %2085 = vmatpush1.bf16.msra.mxu0 %v1597
  %2086 = vmatprep.subr.bf16.mxu0 0
  %2087 = vmatpush1.bf16.msra.mxu0 %v1598
  %2088 = vmatprep.subr.bf16.mxu0 0
  %2089 = vmatpush1.bf16.msra.mxu0 %v1599
  %2090 = vmatprep.subr.bf16.mxu0 0
  %2091 = vmatpush1.bf16.msra.mxu0 %v1600
  %2092 = vmatprep.subr.bf16.mxu0 0
  %2093 = vmatpush1.bf16.msra.mxu0 %v1601
  %2094 = vmatprep.subr.bf16.mxu0 0
  %2095 = vmatpush1.bf16.msra.mxu0 %v1602
  %2096 = vmatprep.subr.bf16.mxu0 0
  %2097 = vmatpush1.bf16.msra.mxu0 %v1603
  %2098 = vmatprep.subr.bf16.mxu0 0
  %2099 = vmatpush1.bf16.msra.mxu0 %v1604
  %2100 = vmatprep.subr.bf16.mxu0 0
  %2101 = vmatpush1.bf16.msra.mxu0 %v1605
  %2102 = vmatprep.mubr.bf16.mxu0 %v2029
  %2103 = vmatmul.mubr.bf16.gmra.mrb[0].mxu0 %v2028
  %v2104 = vpop.f32.mrb[0].mxu0
  %v2105 = vadd.f32 %v2065, %v2104
  %v2106 = vpop.f32.mrb[0].mxu0
  %v2107 = vpop.f32.mrb[0].mxu0
  %v2108 = vpop.f32.mrb[0].mxu0
  %2109 = vdwg.mxu0
  %v2110 = vsel %vm1718, %v2105, 0.0
  %v2111 = vrot.slane %v2110, 4
  %v2112 = vadd.f32 %v2110, %v2111
  %v2113 = vrot.slane %v2112, 2
  %v2114 = vadd.f32 %v2112, %v2113
  %v2115 = vrot.slane %v2114, 1
  %v2116 = vadd.f32 %v2114, %v2115
  %v2117 = vmul.f32 %v2116, %v1325
  %v2118 = vsub.f32 %v2105, %v2117
  %v2119 = vmul.f32 %v2118, %v2118
  %v2120 = vsel %vm1718, %v2119, 0.0
  %v2121 = vrot.slane %v2120, 4
  %v2122 = vadd.f32 %v2120, %v2121
  %v2123 = vrot.slane %v2122, 2
  %v2124 = vadd.f32 %v2122, %v2123
  %v2125 = vrot.slane %v2124, 1
  %v2126 = vadd.f32 %v2124, %v2125
  %v2127 = vmul.f32 %v2126, %v1325
  %v2128 = vadd.f32 %v2127, 1e-05
  %v2129 = vrsqrt.pop %v2128
  %v2130 = vmul.f32 %v2118, %v2129
  %v2131 = vmul.f32 %v2130, %v1744
  %v2132 = vadd.f32 %v2131, %v1751
  %v2133 = vmax.f32 %v2132, 0.0
  %v2136 = vunpack.c.l.s4 1983009808
  %v2137 = vunpack.c.0.s8 %v2136
  %v2138 = vlaneseq
  %v2139 = vshrl.u32 %v2138, 7
  %v2140 = vsub.s32 %v2137, %v2139
  %v2141 = vrot.slane %v2133, %v2140
  %v2142 = vcombine.high %v2141, %v2141
  %v2145 = vsel %vm1766, %v2141, -inf
  %v2146 = vrot.slane %v2145, 4
  %v2147 = vmax.f32 %v2145, %v2146
  %v2148 = vrot.slane %v2147, 2
  %v2149 = vmax.f32 %v2147, %v2148
  %v2150 = vrot.slane %v2149, 1
  %v2151 = vmax.f32 %v2149, %v2150
  %v2152 = vsel %vm1766, %v2142, -inf
  %v2153 = vrot.slane %v2152, 4
  %v2154 = vmax.f32 %v2152, %v2153
  %v2155 = vrot.slane %v2154, 2
  %v2156 = vmax.f32 %v2154, %v2155
  %v2157 = vrot.slane %v2156, 1
  %v2158 = vmax.f32 %v2156, %v2157
  %vm2161 = vcmask 1041409
  %v2162 = vsel %vm2161, %v1780, %v1773
  %vm2166 = vcmask 1043459
  %v2167 = vsel %vm2166, %v2158, %v2151
  %vm2169 = vcmask 1041408
  %v2170 = vsel %vm2169, %v2162, %v2167
  %2171 = vrot.lane.b32.xlu0 %v979, 96
  %v2172 = vpop.permute.xlu0 %2171
  %2175 = vrot.lane.b32.xlu0 %v2170, 16
  %v2176 = vpop.permute.xlu0 %2175
  %v2178 = vsel %vm278, %v2172, %v2176
  %v2179 = vpack.c.bf16 %v2178, %v2178
  %v2180 = vld [vmem:[%s31] sm:$0xf]
  %v2181 = vld [vmem:[%s31 + $0x4] sm:$0xf]
  %v2182 = vld [vmem:[%s31 + $0x8] sm:$0xf]
  %v2183 = vld [vmem:[%s31 + $0xc] sm:$0xf]
  %v2184 = vld [vmem:[%s31 + $0x10] sm:$0xf]
  %v2185 = vld [vmem:[%s31 + $0x14] sm:$0xf]
  %v2186 = vld [vmem:[%s31 + $0x18] sm:$0xf]
  %v2187 = vld [vmem:[%s31 + $0x1c] sm:$0xf]
  %v2188 = vld [vmem:[%s31 + $0x20] sm:$0xf]
  %v2189 = vld [vmem:[%s31 + $0x24] sm:$0xf]
  %v2190 = vld [vmem:[%s33] sm:$0x1]
  %v2192 = vlaneseq
  %v2193 = vshrl.u32 %v2192, 7
  %v2194 = vsub.s32 0, %v2193
  %v2195 = vrot.slane %v2190, %v2194
  %v2207 = vunpack.c.l.b16 %v2180
  %v2208 = vunpack.c.l.b16 %v2181
  %v2209 = vunpack.c.l.b16 %v2182
  %v2210 = vunpack.c.l.b16 %v2183
  %v2211 = vunpack.c.l.b16 %v2184
  %v2212 = vunpack.c.l.b16 %v2185
  %v2213 = vunpack.c.l.b16 %v2186
  %v2214 = vunpack.c.l.b16 %v2187
  %v2215 = vunpack.c.l.b16 %v2188
  %v2216 = vunpack.c.l.b16 %v2189
  %v2217 = vpack.c.b16 %v2208, %v2207
  %v2218 = vpack.c.b16 %v2210, %v2209
  %v2219 = vpack.c.b16 %v2212, %v2211
  %v2220 = vpack.c.b16 %v2214, %v2213
  %v2221 = vpack.c.b16 %v2216, %v2215
  %vm2227 = vcmask 654336
  %v2229 = vsel %vm2227, %v2179, 0
  %2231 = vmatprep.subr.bf16.mxu0 0
  %2232 = vmatpush1.bf16.msra.mxu0 %v2217
  %2233 = vmatprep.subr.bf16.mxu0 0
  %2234 = vmatpush1.bf16.msra.mxu0 %v2218
  %2235 = vmatprep.subr.bf16.mxu0 0
  %2236 = vmatpush1.bf16.msra.mxu0 %v2219
  %2237 = vmatprep.subr.bf16.mxu0 0
  %2238 = vmatpush1.bf16.msra.mxu0 %v2220
  %2239 = vmatprep.subr.bf16.mxu0 0
  %2240 = vmatpush1.bf16.msra.mxu0 %v2221
  %2241 = vmatprep.subr.bf16.mxu0 0
  %2242 = vmatpush1.bf16.msra.mxu0 0
  %2243 = vmatprep.subr.bf16.mxu0 0
  %2244 = vmatpush1.bf16.msra.mxu0 0
  %2245 = vmatprep.subr.bf16.mxu0 0
  %2246 = vmatpush1.bf16.msra.mxu0 0
  %2247 = vmatprep.subr.bf16.mxu0 0
  %2248 = vmatpush1.bf16.msra.mxu0 0
  %2249 = vmatprep.subr.bf16.mxu0 0
  %2250 = vmatpush1.bf16.msra.mxu0 0
  %2251 = vmatprep.subr.bf16.mxu0 0
  %2252 = vmatpush1.bf16.msra.mxu0 0
  %2253 = vmatprep.subr.bf16.mxu0 0
  %2254 = vmatpush1.bf16.msra.mxu0 0
  %2255 = vmatprep.subr.bf16.mxu0 0
  %2256 = vmatpush1.bf16.msra.mxu0 0
  %2257 = vmatprep.subr.bf16.mxu0 0
  %2258 = vmatpush1.bf16.msra.mxu0 0
  %2259 = vmatprep.subr.bf16.mxu0 0
  %2260 = vmatpush1.bf16.msra.mxu0 0
  %2261 = vmatprep.subr.bf16.mxu0 0
  %2262 = vmatpush1.bf16.msra.mxu0 0
  %2263 = vmatprep.mubr.bf16.mxu0 0
  %2264 = vmatmul.mubr.bf16.gmra.mrb[0].mxu0 %v2229
  %v2265 = vpop.f32.mrb[0].mxu0
  %v2266 = vadd.f32 %v2195, %v2265
  %v2267 = vpop.f32.mrb[0].mxu0
  %v2268 = vpop.f32.mrb[0].mxu0
  %v2269 = vpop.f32.mrb[0].mxu0
  %2270 = vdwg.mxu0
  %v2271 = vld [vmem:[%s35] sm:$0x1]
  %v2272 = vld [vmem:[%s37] sm:$0x1]
  %v2273 = vsel %vm1718, %v2266, 0.0
  %v2274 = vrot.slane %v2273, 4
  %v2275 = vadd.f32 %v2273, %v2274
  %v2276 = vrot.slane %v2275, 2
  %v2277 = vadd.f32 %v2275, %v2276
  %v2278 = vrot.slane %v2277, 1
  %v2279 = vadd.f32 %v2277, %v2278
  %v2280 = vmul.f32 %v2279, %v1325
  %v2281 = vsub.f32 %v2266, %v2280
  %v2282 = vmul.f32 %v2281, %v2281
  %v2283 = vsel %vm1718, %v2282, 0.0
  %v2284 = vrot.slane %v2283, 4
  %v2285 = vadd.f32 %v2283, %v2284
  %v2286 = vrot.slane %v2285, 2
  %v2287 = vadd.f32 %v2285, %v2286
  %v2288 = vrot.slane %v2287, 1
  %v2289 = vadd.f32 %v2287, %v2288
  %v2290 = vmul.f32 %v2289, %v1325
  %v2291 = vadd.f32 %v2290, 1e-05
  %v2292 = vrsqrt.pop %v2291
  %v2293 = vmul.f32 %v2281, %v2292
  %v2295 = vlaneseq
  %v2296 = vshrl.u32 %v2295, 7
  %v2297 = vsub.s32 0, %v2296
  %v2298 = vrot.slane %v2271, %v2297
  %v2300 = vmul.f32 %v2293, %v2298
  %v2302 = vlaneseq
  %v2303 = vshrl.u32 %v2302, 7
  %v2304 = vsub.s32 0, %v2303
  %v2305 = vrot.slane %v2272, %v2304
  %v2307 = vadd.f32 %v2300, %v2305
  %v2308 = vmax.f32 %v2307, 0.0
  %v2309 = vpack.c.bf16 %v2308, %v2308
  %v2310 = vld [vmem:[%s39] sm:$0xf]
  %v2311 = vld [vmem:[%s39 + $0x4] sm:$0xf]
  %v2312 = vld [vmem:[%s39 + $0x8] sm:$0xf]
  %v2313 = vld [vmem:[%s39 + $0xc] sm:$0xf]
  %v2314 = vld [vmem:[%s39 + $0x10] sm:$0xf]
  %v2315 = vld [vmem:[%s39 + $0x14] sm:$0xf]
  %v2316 = vld [vmem:[%s39 + $0x18] sm:$0xf]
  %v2317 = vld [vmem:[%s39 + $0x1c] sm:$0xf]
  %v2318 = vld [vmem:[%s41] sm:$0x1]
  %v2320 = vlaneseq
  %v2321 = vshrl.u32 %v2320, 7
  %v2322 = vsub.s32 0, %v2321
  %v2323 = vrot.slane %v2318, %v2322
  %v2333 = vunpack.c.l.b16 %v2310
  %v2334 = vunpack.c.l.b16 %v2311
  %v2335 = vunpack.c.l.b16 %v2312
  %v2336 = vunpack.c.l.b16 %v2313
  %v2337 = vunpack.c.l.b16 %v2314
  %v2338 = vunpack.c.l.b16 %v2315
  %v2339 = vunpack.c.l.b16 %v2316
  %v2340 = vunpack.c.l.b16 %v2317
  %v2341 = vpack.c.b16 %v2334, %v2333
  %v2342 = vpack.c.b16 %v2336, %v2335
  %v2343 = vpack.c.b16 %v2338, %v2337
  %v2344 = vpack.c.b16 %v2340, %v2339
  %vm2349 = vcmask 523264
  %v2351 = vsel %vm2349, %v2309, 0
  %2353 = vmatprep.subr.bf16.mxu0 0
  %2354 = vmatpush1.bf16.msra.mxu0 %v2341
  %2355 = vmatprep.subr.bf16.mxu0 0
  %2356 = vmatpush1.bf16.msra.mxu0 %v2342
  %2357 = vmatprep.subr.bf16.mxu0 0
  %2358 = vmatpush1.bf16.msra.mxu0 %v2343
  %2359 = vmatprep.subr.bf16.mxu0 0
  %2360 = vmatpush1.bf16.msra.mxu0 %v2344
  %2361 = vmatprep.subr.bf16.mxu0 0
  %2362 = vmatpush1.bf16.msra.mxu0 0
  %2363 = vmatprep.subr.bf16.mxu0 0
  %2364 = vmatpush1.bf16.msra.mxu0 0
  %2365 = vmatprep.subr.bf16.mxu0 0
  %2366 = vmatpush1.bf16.msra.mxu0 0
  %2367 = vmatprep.subr.bf16.mxu0 0
  %2368 = vmatpush1.bf16.msra.mxu0 0
  %2369 = vmatprep.subr.bf16.mxu0 0
  %2370 = vmatpush1.bf16.msra.mxu0 0
  %2371 = vmatprep.subr.bf16.mxu0 0
  %2372 = vmatpush1.bf16.msra.mxu0 0
  %2373 = vmatprep.subr.bf16.mxu0 0
  %2374 = vmatpush1.bf16.msra.mxu0 0
  %2375 = vmatprep.subr.bf16.mxu0 0
  %2376 = vmatpush1.bf16.msra.mxu0 0
  %2377 = vmatprep.subr.bf16.mxu0 0
  %2378 = vmatpush1.bf16.msra.mxu0 0
  %2379 = vmatprep.subr.bf16.mxu0 0
  %2380 = vmatpush1.bf16.msra.mxu0 0
  %2381 = vmatprep.subr.bf16.mxu0 0
  %2382 = vmatpush1.bf16.msra.mxu0 0
  %2383 = vmatprep.subr.bf16.mxu0 0
  %2384 = vmatpush1.bf16.msra.mxu0 0
  %2385 = vmatprep.mubr.bf16.mxu0 0
  %2386 = vmatmul.mubr.bf16.gmra.mrb[0].mxu0 %v2351
  %v2387 = vpop.f32.mrb[0].mxu0
  %v2388 = vadd.f32 %v2323, %v2387
  %v2389 = vpop.f32.mrb[0].mxu0
  %v2390 = vpop.f32.mrb[0].mxu0
  %v2391 = vpop.f32.mrb[0].mxu0
  %2392 = vdwg.mxu0
  %v2393 = vld [vmem:[%s43] sm:$0x1]
  %v2394 = vld [vmem:[%s45] sm:$0x1]
  %vm2395 = vcmask 257024
  %v2396 = vsel %vm2395, %v2388, 0.0
  %v2397 = vrot.slane %v2396, 4
  %v2398 = vadd.f32 %v2396, %v2397
  %v2399 = vrot.slane %v2398, 2
  %v2400 = vadd.f32 %v2398, %v2399
  %v2401 = vrot.slane %v2400, 1
  %v2402 = vadd.f32 %v2400, %v2401
  %v2403 = vmul.f32 %v2402, %v1325
  %v2404 = vsub.f32 %v2388, %v2403
  %v2405 = vmul.f32 %v2404, %v2404
  %v2406 = vsel %vm2395, %v2405, 0.0
  %v2407 = vrot.slane %v2406, 4
  %v2408 = vadd.f32 %v2406, %v2407
  %v2409 = vrot.slane %v2408, 2
  %v2410 = vadd.f32 %v2408, %v2409
  %v2411 = vrot.slane %v2410, 1
  %v2412 = vadd.f32 %v2410, %v2411
  %v2413 = vmul.f32 %v2412, %v1325
  %v2414 = vadd.f32 %v2413, 1e-05
  %v2415 = vrsqrt.pop %v2414
  %v2416 = vmul.f32 %v2404, %v2415
  %v2418 = vlaneseq
  %v2419 = vshrl.u32 %v2418, 7
  %v2420 = vsub.s32 0, %v2419
  %v2421 = vrot.slane %v2393, %v2420
  %v2423 = vmul.f32 %v2416, %v2421
  %v2425 = vlaneseq
  %v2426 = vshrl.u32 %v2425, 7
  %v2427 = vsub.s32 0, %v2426
  %v2428 = vrot.slane %v2394, %v2427
  %v2430 = vadd.f32 %v2423, %v2428
  %v2431 = vmax.f32 %v2430, 0.0
  %v2432 = vld [vmem:[%s47] sm:$0x3]
  %v2433 = vlaneseq
  %v2434 = vshrl.u32 %v2433, 7
  %v2435 = vsub.s32 0, %v2434
  %v2436 = vrot.slane %v2432, %v2435
  %v2437 = vmul.f32 %v174, %v2436
  %v2438 = vlaneseq
  %v2439 = vshrl.u32 %v2438, 7
  %v2440 = vsub.s32 1, %v2439
  %v2441 = vrot.slane %v2432, %v2440
  %v2442 = vmul.f32 %v218, %v2441
  %v2443 = vadd.f32 %v2437, %v2442
  %v2444 = vld [vmem:[%s51] sm:$0xff]
  %v2445 = vld [vmem:[%s51 + $0x8] sm:$0xff]
  %v2446 = vld [vmem:[%s51 + $0x10] sm:$0xff]
  %v2447 = vld [vmem:[%s51 + $0x18] sm:$0xff]
  %v2449 = vsel %vm1210, %v2431, 0
  %2451 = vmatprep.subr.mxu0 0.0
  %2452 = vmatpush1.msra.mxu0 %v2444
  %2453 = vmatprep.subr.mxu0 0.0
  %2454 = vmatpush1.msra.mxu0 %v2445
  %2455 = vmatprep.subr.mxu0 0.0
  %2456 = vmatpush1.msra.mxu0 %v2446
  %2457 = vmatprep.subr.mxu0 0.0
  %2458 = vmatpush1.msra.mxu0 %v2447
  %2459 = vmatprep.subr.mxu0 0.0
  %2460 = vmatpush1.msra.mxu0 0.0
  %2461 = vmatprep.subr.mxu0 0.0
  %2462 = vmatpush1.msra.mxu0 0.0
  %2463 = vmatprep.subr.mxu0 0.0
  %2464 = vmatpush1.msra.mxu0 0.0
  %2465 = vmatprep.subr.mxu0 0.0
  %2466 = vmatpush1.msra.mxu0 0.0
  %2467 = vmatprep.subr.mxu0 0.0
  %2468 = vmatpush1.msra.mxu0 0.0
  %2469 = vmatprep.subr.mxu0 0.0
  %2470 = vmatpush1.msra.mxu0 0.0
  %2471 = vmatprep.subr.mxu0 0.0
  %2472 = vmatpush1.msra.mxu0 0.0
  %2473 = vmatprep.subr.mxu0 0.0
  %2474 = vmatpush1.msra.mxu0 0.0
  %2475 = vmatprep.subr.mxu0 0.0
  %2476 = vmatpush1.msra.mxu0 0.0
  %2477 = vmatprep.subr.mxu0 0.0
  %2478 = vmatpush1.msra.mxu0 0.0
  %2479 = vmatprep.subr.mxu0 0.0
  %2480 = vmatpush1.msra.mxu0 0.0
  %2481 = vmatprep.subr.mxu0 0.0
  %2482 = vmatpush1.msra.mxu0 0.0
  %2483 = vmatprep.subr.mxu0 0.0
  %2484 = vmatpush1.msra.mxu0 0.0
  %2485 = vmatprep.subr.mxu0 0.0
  %2486 = vmatpush1.msra.mxu0 0.0
  %2487 = vmatprep.subr.mxu0 0.0
  %2488 = vmatpush1.msra.mxu0 0.0
  %2489 = vmatprep.subr.mxu0 0.0
  %2490 = vmatpush1.msra.mxu0 0.0
  %2491 = vmatprep.subr.mxu0 0.0
  %2492 = vmatpush1.msra.mxu0 0.0
  %2493 = vmatprep.subr.mxu0 0.0
  %2494 = vmatpush1.msra.mxu0 0.0
  %2495 = vmatprep.subr.mxu0 0.0
  %2496 = vmatpush1.msra.mxu0 0.0
  %2497 = vmatprep.subr.mxu0 0.0
  %2498 = vmatpush1.msra.mxu0 0.0
  %2499 = vmatprep.subr.mxu0 0.0
  %2500 = vmatpush1.msra.mxu0 0.0
  %2501 = vmatprep.subr.mxu0 0.0
  %2502 = vmatpush1.msra.mxu0 0.0
  %2503 = vmatprep.subr.mxu0 0.0
  %2504 = vmatpush1.msra.mxu0 0.0
  %2505 = vmatprep.subr.mxu0 0.0
  %2506 = vmatpush1.msra.mxu0 0.0
  %2507 = vmatprep.subr.mxu0 0.0
  %2508 = vmatpush1.msra.mxu0 0.0
  %2509 = vmatprep.subr.mxu0 0.0
  %2510 = vmatpush1.msra.mxu0 0.0
  %2511 = vmatprep.subr.mxu0 0.0
  %2512 = vmatpush1.msra.mxu0 0.0
  %2513 = vmatprep.subr.mxu0 0.0
  %2514 = vmatpush1.msra.mxu0 0.0
  %2515 = vmatprep.mubr.f32.mxu0 0.0
  %2516 = vmatmul.mubr.f32.gmra.mrb[0].mxu0 %v2449
  %v2517 = vpop.f32.mrb[0].mxu0
  %v2518 = vadd.f32 0.0, %v2517
  %v2519 = vpop.f32.mrb[0].mxu0
  %2520 = vdwg.mxu0
  %v2521 = vadd.f32 %v2443, %v2518
  %v2522 = vld [vmem:[%s49] sm:$0x1]
  %v2524 = vlaneseq
  %v2525 = vshrl.u32 %v2524, 7
  %v2526 = vsub.s32 0, %v2525
  %v2527 = vrot.slane %v2522, %v2526
  %v2529 = vadd.f32 %v2521, %v2527
  %v2530 = vxor.u32 %v2529, 2147483648
  %v2531 = vmul.f32 %v2530, 1.442695
  %v2532 = vpow.pop %v2531
  %v2533 = vadd.f32 %v2532, 1.0
  %v2534 = vrcp.pop %v2533
  %v2535 = vmul.f32 1.0, %v2534
  %v2536 = vtanh.pop %v2529
  %2538 = vrot.lane.b32.xlu0 %v2536, 32
  %v2539 = vpop.permute.xlu0 %2538
  %v2541 = vmul.f32 %v2535, %v2539
  %v2542 = vtanh.pop %v2541
  %2544 = vrot.lane.b32.xlu0 %v2542, 64
  %v2545 = vpop.permute.xlu0 %2544
  %v2547 = vmul.f32 %v2535, %v2545
  %v2548 = vld [vmem:[%s53] sm:$0xff]
  %v2549 = vld [vmem:[%s53 + $0x8] sm:$0xff]
  %v2550 = vld [vmem:[%s53 + $0x10] sm:$0xff]
  %v2551 = vld [vmem:[%s53 + $0x18] sm:$0xff]
  %v2552 = vld [vmem:[%s55] sm:$0x1]
  %v2554 = vlaneseq
  %v2555 = vshrl.u32 %v2554, 7
  %v2556 = vsub.s32 0, %v2555
  %v2557 = vrot.slane %v2552, %v2556
  %2560 = vrot.lane.b32.xlu0 %v2547, 64
  %v2561 = vpop.permute.xlu0 %2560
  %v2562 = vsel %vm1210, %v2561, 0
  %2564 = vmatprep.subr.mxu0 0.0
  %2565 = vmatpush1.msra.mxu0 %v2548
  %2566 = vmatprep.subr.mxu0 0.0
  %2567 = vmatpush1.msra.mxu0 %v2549
  %2568 = vmatprep.subr.mxu0 0.0
  %2569 = vmatpush1.msra.mxu0 %v2550
  %2570 = vmatprep.subr.mxu0 0.0
  %2571 = vmatpush1.msra.mxu0 %v2551
  %2572 = vmatprep.subr.mxu0 0.0
  %2573 = vmatpush1.msra.mxu0 0.0
  %2574 = vmatprep.subr.mxu0 0.0
  %2575 = vmatpush1.msra.mxu0 0.0
  %2576 = vmatprep.subr.mxu0 0.0
  %2577 = vmatpush1.msra.mxu0 0.0
  %2578 = vmatprep.subr.mxu0 0.0
  %2579 = vmatpush1.msra.mxu0 0.0
  %2580 = vmatprep.subr.mxu0 0.0
  %2581 = vmatpush1.msra.mxu0 0.0
  %2582 = vmatprep.subr.mxu0 0.0
  %2583 = vmatpush1.msra.mxu0 0.0
  %2584 = vmatprep.subr.mxu0 0.0
  %2585 = vmatpush1.msra.mxu0 0.0
  %2586 = vmatprep.subr.mxu0 0.0
  %2587 = vmatpush1.msra.mxu0 0.0
  %2588 = vmatprep.subr.mxu0 0.0
  %2589 = vmatpush1.msra.mxu0 0.0
  %2590 = vmatprep.subr.mxu0 0.0
  %2591 = vmatpush1.msra.mxu0 0.0
  %2592 = vmatprep.subr.mxu0 0.0
  %2593 = vmatpush1.msra.mxu0 0.0
  %2594 = vmatprep.subr.mxu0 0.0
  %2595 = vmatpush1.msra.mxu0 0.0
  %2596 = vmatprep.subr.mxu0 0.0
  %2597 = vmatpush1.msra.mxu0 0.0
  %2598 = vmatprep.subr.mxu0 0.0
  %2599 = vmatpush1.msra.mxu0 0.0
  %2600 = vmatprep.subr.mxu0 0.0
  %2601 = vmatpush1.msra.mxu0 0.0
  %2602 = vmatprep.subr.mxu0 0.0
  %2603 = vmatpush1.msra.mxu0 0.0
  %2604 = vmatprep.subr.mxu0 0.0
  %2605 = vmatpush1.msra.mxu0 0.0
  %2606 = vmatprep.subr.mxu0 0.0
  %2607 = vmatpush1.msra.mxu0 0.0
  %2608 = vmatprep.subr.mxu0 0.0
  %2609 = vmatpush1.msra.mxu0 0.0
  %2610 = vmatprep.subr.mxu0 0.0
  %2611 = vmatpush1.msra.mxu0 0.0
  %2612 = vmatprep.subr.mxu0 0.0
  %2613 = vmatpush1.msra.mxu0 0.0
  %2614 = vmatprep.subr.mxu0 0.0
  %2615 = vmatpush1.msra.mxu0 0.0
  %2616 = vmatprep.subr.mxu0 0.0
  %2617 = vmatpush1.msra.mxu0 0.0
  %2618 = vmatprep.subr.mxu0 0.0
  %2619 = vmatpush1.msra.mxu0 0.0
  %2620 = vmatprep.subr.mxu0 0.0
  %2621 = vmatpush1.msra.mxu0 0.0
  %2622 = vmatprep.subr.mxu0 0.0
  %2623 = vmatpush1.msra.mxu0 0.0
  %2624 = vmatprep.subr.mxu0 0.0
  %2625 = vmatpush1.msra.mxu0 0.0
  %2626 = vmatprep.subr.mxu0 0.0
  %2627 = vmatpush1.msra.mxu0 0.0
  %2628 = vmatprep.mubr.f32.mxu0 0.0
  %2629 = vmatmul.mubr.f32.gmra.mrb[0].mxu0 %v2562
  %v2630 = vpop.f32.mrb[0].mxu0
  %v2631 = vadd.f32 %v2557, %v2630
  %v2632 = vpop.f32.mrb[0].mxu0
  %2633 = vdwg.mxu0
  %v2634 = vxor.u32 %v2631, 2147483648
  %v2635 = vmul.f32 %v2634, 1.442695
  %v2636 = vpow.pop %v2635
  %v2637 = vadd.f32 %v2636, 1.0
  %v2638 = vrcp.pop %v2637
  %v2639 = vmul.f32 1.0, %v2638
  %v2640 = vtanh.pop %v2631
  %2642 = vrot.lane.b32.xlu0 %v2541, 32
  %v2643 = vpop.permute.xlu0 %2642
  %v2645 = vmul.f32 %v2639, %v2643
  %2647 = vrot.lane.b32.xlu0 %v2640, 32
  %v2648 = vpop.permute.xlu0 %2647
  %v2650 = vmul.f32 %v2639, %v2648
  %2652 = vrot.lane.b32.xlu0 %v2650, 32
  %v2653 = vpop.permute.xlu0 %2652
  %v2655 = vadd.f32 %v2645, %v2653
  %v2656 = vtanh.pop %v2655
  %2658 = vrot.lane.b32.xlu0 %v2656, 32
  %v2659 = vpop.permute.xlu0 %2658
  %v2661 = vmul.f32 %v2639, %v2659
  %2663 = vrot.lane.b32.xlu0 %v2661, 64
  %v2664 = vpop.permute.xlu0 %2663
  %v2665 = vsel %vm1210, %v2664, 0
  %2667 = vmatprep.subr.mxu0 0.0
  %2668 = vmatpush1.msra.mxu0 %v2548
  %2669 = vmatprep.subr.mxu0 0.0
  %2670 = vmatpush1.msra.mxu0 %v2549
  %2671 = vmatprep.subr.mxu0 0.0
  %2672 = vmatpush1.msra.mxu0 %v2550
  %2673 = vmatprep.subr.mxu0 0.0
  %2674 = vmatpush1.msra.mxu0 %v2551
  %2675 = vmatprep.subr.mxu0 0.0
  %2676 = vmatpush1.msra.mxu0 0.0
  %2677 = vmatprep.subr.mxu0 0.0
  %2678 = vmatpush1.msra.mxu0 0.0
  %2679 = vmatprep.subr.mxu0 0.0
  %2680 = vmatpush1.msra.mxu0 0.0
  %2681 = vmatprep.subr.mxu0 0.0
  %2682 = vmatpush1.msra.mxu0 0.0
  %2683 = vmatprep.subr.mxu0 0.0
  %2684 = vmatpush1.msra.mxu0 0.0
  %2685 = vmatprep.subr.mxu0 0.0
  %2686 = vmatpush1.msra.mxu0 0.0
  %2687 = vmatprep.subr.mxu0 0.0
  %2688 = vmatpush1.msra.mxu0 0.0
  %2689 = vmatprep.subr.mxu0 0.0
  %2690 = vmatpush1.msra.mxu0 0.0
  %2691 = vmatprep.subr.mxu0 0.0
  %2692 = vmatpush1.msra.mxu0 0.0
  %2693 = vmatprep.subr.mxu0 0.0
  %2694 = vmatpush1.msra.mxu0 0.0
  %2695 = vmatprep.subr.mxu0 0.0
  %2696 = vmatpush1.msra.mxu0 0.0
  %2697 = vmatprep.subr.mxu0 0.0
  %2698 = vmatpush1.msra.mxu0 0.0
  %2699 = vmatprep.subr.mxu0 0.0
  %2700 = vmatpush1.msra.mxu0 0.0
  %2701 = vmatprep.subr.mxu0 0.0
  %2702 = vmatpush1.msra.mxu0 0.0
  %2703 = vmatprep.subr.mxu0 0.0
  %2704 = vmatpush1.msra.mxu0 0.0
  %2705 = vmatprep.subr.mxu0 0.0
  %2706 = vmatpush1.msra.mxu0 0.0
  %2707 = vmatprep.subr.mxu0 0.0
  %2708 = vmatpush1.msra.mxu0 0.0
  %2709 = vmatprep.subr.mxu0 0.0
  %2710 = vmatpush1.msra.mxu0 0.0
  %2711 = vmatprep.subr.mxu0 0.0
  %2712 = vmatpush1.msra.mxu0 0.0
  %2713 = vmatprep.subr.mxu0 0.0
  %2714 = vmatpush1.msra.mxu0 0.0
  %2715 = vmatprep.subr.mxu0 0.0
  %2716 = vmatpush1.msra.mxu0 0.0
  %2717 = vmatprep.subr.mxu0 0.0
  %2718 = vmatpush1.msra.mxu0 0.0
  %2719 = vmatprep.subr.mxu0 0.0
  %2720 = vmatpush1.msra.mxu0 0.0
  %2721 = vmatprep.subr.mxu0 0.0
  %2722 = vmatpush1.msra.mxu0 0.0
  %2723 = vmatprep.subr.mxu0 0.0
  %2724 = vmatpush1.msra.mxu0 0.0
  %2725 = vmatprep.subr.mxu0 0.0
  %2726 = vmatpush1.msra.mxu0 0.0
  %2727 = vmatprep.subr.mxu0 0.0
  %2728 = vmatpush1.msra.mxu0 0.0
  %2729 = vmatprep.subr.mxu0 0.0
  %2730 = vmatpush1.msra.mxu0 0.0
  %2731 = vmatprep.mubr.f32.mxu0 0.0
  %2732 = vmatmul.mubr.f32.gmra.mrb[0].mxu0 %v2665
  %v2733 = vpop.f32.mrb[0].mxu0
  %v2734 = vadd.f32 %v2557, %v2733
  %v2735 = vpop.f32.mrb[0].mxu0
  %2736 = vdwg.mxu0
  %v2737 = vxor.u32 %v2734, 2147483648
  %v2738 = vmul.f32 %v2737, 1.442695
  %v2739 = vpow.pop %v2738
  %v2740 = vadd.f32 %v2739, 1.0
  %v2741 = vrcp.pop %v2740
  %v2742 = vmul.f32 1.0, %v2741
  %v2743 = vtanh.pop %v2734
  %v2744 = vmul.f32 %v2742, %v2655
  %2746 = vrot.lane.b32.xlu0 %v2743, 32
  %v2747 = vpop.permute.xlu0 %2746
  %v2749 = vmul.f32 %v2742, %v2747
  %2751 = vrot.lane.b32.xlu0 %v2749, 32
  %v2752 = vpop.permute.xlu0 %2751
  %v2754 = vadd.f32 %v2744, %v2752
  %v2755 = vtanh.pop %v2754
  %2757 = vrot.lane.b32.xlu0 %v2755, 32
  %v2758 = vpop.permute.xlu0 %2757
  %v2760 = vmul.f32 %v2742, %v2758
  %2762 = vrot.lane.b32.xlu0 %v2760, 64
  %v2763 = vpop.permute.xlu0 %2762
  %v2764 = vsel %vm1210, %v2763, 0
  %2766 = vmatprep.subr.mxu0 0.0
  %2767 = vmatpush1.msra.mxu0 %v2548
  %2768 = vmatprep.subr.mxu0 0.0
  %2769 = vmatpush1.msra.mxu0 %v2549
  %2770 = vmatprep.subr.mxu0 0.0
  %2771 = vmatpush1.msra.mxu0 %v2550
  %2772 = vmatprep.subr.mxu0 0.0
  %2773 = vmatpush1.msra.mxu0 %v2551
  %2774 = vmatprep.subr.mxu0 0.0
  %2775 = vmatpush1.msra.mxu0 0.0
  %2776 = vmatprep.subr.mxu0 0.0
  %2777 = vmatpush1.msra.mxu0 0.0
  %2778 = vmatprep.subr.mxu0 0.0
  %2779 = vmatpush1.msra.mxu0 0.0
  %2780 = vmatprep.subr.mxu0 0.0
  %2781 = vmatpush1.msra.mxu0 0.0
  %2782 = vmatprep.subr.mxu0 0.0
  %2783 = vmatpush1.msra.mxu0 0.0
  %2784 = vmatprep.subr.mxu0 0.0
  %2785 = vmatpush1.msra.mxu0 0.0
  %2786 = vmatprep.subr.mxu0 0.0
  %2787 = vmatpush1.msra.mxu0 0.0
  %2788 = vmatprep.subr.mxu0 0.0
  %2789 = vmatpush1.msra.mxu0 0.0
  %2790 = vmatprep.subr.mxu0 0.0
  %2791 = vmatpush1.msra.mxu0 0.0
  %2792 = vmatprep.subr.mxu0 0.0
  %2793 = vmatpush1.msra.mxu0 0.0
  %2794 = vmatprep.subr.mxu0 0.0
  %2795 = vmatpush1.msra.mxu0 0.0
  %2796 = vmatprep.subr.mxu0 0.0
  %2797 = vmatpush1.msra.mxu0 0.0
  %2798 = vmatprep.subr.mxu0 0.0
  %2799 = vmatpush1.msra.mxu0 0.0
  %2800 = vmatprep.subr.mxu0 0.0
  %2801 = vmatpush1.msra.mxu0 0.0
  %2802 = vmatprep.subr.mxu0 0.0
  %2803 = vmatpush1.msra.mxu0 0.0
  %2804 = vmatprep.subr.mxu0 0.0
  %2805 = vmatpush1.msra.mxu0 0.0
  %2806 = vmatprep.subr.mxu0 0.0
  %2807 = vmatpush1.msra.mxu0 0.0
  %2808 = vmatprep.subr.mxu0 0.0
  %2809 = vmatpush1.msra.mxu0 0.0
  %2810 = vmatprep.subr.mxu0 0.0
  %2811 = vmatpush1.msra.mxu0 0.0
  %2812 = vmatprep.subr.mxu0 0.0
  %2813 = vmatpush1.msra.mxu0 0.0
  %2814 = vmatprep.subr.mxu0 0.0
  %2815 = vmatpush1.msra.mxu0 0.0
  %2816 = vmatprep.subr.mxu0 0.0
  %2817 = vmatpush1.msra.mxu0 0.0
  %2818 = vmatprep.subr.mxu0 0.0
  %2819 = vmatpush1.msra.mxu0 0.0
  %2820 = vmatprep.subr.mxu0 0.0
  %2821 = vmatpush1.msra.mxu0 0.0
  %2822 = vmatprep.subr.mxu0 0.0
  %2823 = vmatpush1.msra.mxu0 0.0
  %2824 = vmatprep.subr.mxu0 0.0
  %2825 = vmatpush1.msra.mxu0 0.0
  %2826 = vmatprep.subr.mxu0 0.0
  %2827 = vmatpush1.msra.mxu0 0.0
  %2828 = vmatprep.subr.mxu0 0.0
  %2829 = vmatpush1.msra.mxu0 0.0
  %2830 = vmatprep.mubr.f32.mxu0 0.0
  %2831 = vmatmul.mubr.f32.gmra.mrb[0].mxu0 %v2764
  %v2832 = vpop.f32.mrb[0].mxu0
  %v2833 = vadd.f32 %v2557, %v2832
  %v2834 = vpop.f32.mrb[0].mxu0
  %2835 = vdwg.mxu0
  %v2836 = vxor.u32 %v2833, 2147483648
  %v2837 = vmul.f32 %v2836, 1.442695
  %v2838 = vpow.pop %v2837
  %v2839 = vadd.f32 %v2838, 1.0
  %v2840 = vrcp.pop %v2839
  %v2841 = vmul.f32 1.0, %v2840
  %v2842 = vtanh.pop %v2833
  %v2843 = vmul.f32 %v2841, %v2754
  %2845 = vrot.lane.b32.xlu0 %v2842, 32
  %v2846 = vpop.permute.xlu0 %2845
  %v2848 = vmul.f32 %v2841, %v2846
  %2850 = vrot.lane.b32.xlu0 %v2848, 32
  %v2851 = vpop.permute.xlu0 %2850
  %v2853 = vadd.f32 %v2843, %v2851
  %v2854 = vtanh.pop %v2853
  %2856 = vrot.lane.b32.xlu0 %v2854, 32
  %v2857 = vpop.permute.xlu0 %2856
  %v2859 = vmul.f32 %v2841, %v2857
  %2861 = vrot.lane.b32.xlu0 %v2859, 64
  %v2862 = vpop.permute.xlu0 %2861
  %v2863 = vsel %vm1210, %v2862, 0
  %2865 = vmatprep.subr.mxu0 0.0
  %2866 = vmatpush1.msra.mxu0 %v2548
  %2867 = vmatprep.subr.mxu0 0.0
  %2868 = vmatpush1.msra.mxu0 %v2549
  %2869 = vmatprep.subr.mxu0 0.0
  %2870 = vmatpush1.msra.mxu0 %v2550
  %2871 = vmatprep.subr.mxu0 0.0
  %2872 = vmatpush1.msra.mxu0 %v2551
  %2873 = vmatprep.subr.mxu0 0.0
  %2874 = vmatpush1.msra.mxu0 0.0
  %2875 = vmatprep.subr.mxu0 0.0
  %2876 = vmatpush1.msra.mxu0 0.0
  %2877 = vmatprep.subr.mxu0 0.0
  %2878 = vmatpush1.msra.mxu0 0.0
  %2879 = vmatprep.subr.mxu0 0.0
  %2880 = vmatpush1.msra.mxu0 0.0
  %2881 = vmatprep.subr.mxu0 0.0
  %2882 = vmatpush1.msra.mxu0 0.0
  %2883 = vmatprep.subr.mxu0 0.0
  %2884 = vmatpush1.msra.mxu0 0.0
  %2885 = vmatprep.subr.mxu0 0.0
  %2886 = vmatpush1.msra.mxu0 0.0
  %2887 = vmatprep.subr.mxu0 0.0
  %2888 = vmatpush1.msra.mxu0 0.0
  %2889 = vmatprep.subr.mxu0 0.0
  %2890 = vmatpush1.msra.mxu0 0.0
  %2891 = vmatprep.subr.mxu0 0.0
  %2892 = vmatpush1.msra.mxu0 0.0
  %2893 = vmatprep.subr.mxu0 0.0
  %2894 = vmatpush1.msra.mxu0 0.0
  %2895 = vmatprep.subr.mxu0 0.0
  %2896 = vmatpush1.msra.mxu0 0.0
  %2897 = vmatprep.subr.mxu0 0.0
  %2898 = vmatpush1.msra.mxu0 0.0
  %2899 = vmatprep.subr.mxu0 0.0
  %2900 = vmatpush1.msra.mxu0 0.0
  %2901 = vmatprep.subr.mxu0 0.0
  %2902 = vmatpush1.msra.mxu0 0.0
  %2903 = vmatprep.subr.mxu0 0.0
  %2904 = vmatpush1.msra.mxu0 0.0
  %2905 = vmatprep.subr.mxu0 0.0
  %2906 = vmatpush1.msra.mxu0 0.0
  %2907 = vmatprep.subr.mxu0 0.0
  %2908 = vmatpush1.msra.mxu0 0.0
  %2909 = vmatprep.subr.mxu0 0.0
  %2910 = vmatpush1.msra.mxu0 0.0
  %2911 = vmatprep.subr.mxu0 0.0
  %2912 = vmatpush1.msra.mxu0 0.0
  %2913 = vmatprep.subr.mxu0 0.0
  %2914 = vmatpush1.msra.mxu0 0.0
  %2915 = vmatprep.subr.mxu0 0.0
  %2916 = vmatpush1.msra.mxu0 0.0
  %2917 = vmatprep.subr.mxu0 0.0
  %2918 = vmatpush1.msra.mxu0 0.0
  %2919 = vmatprep.subr.mxu0 0.0
  %2920 = vmatpush1.msra.mxu0 0.0
  %2921 = vmatprep.subr.mxu0 0.0
  %2922 = vmatpush1.msra.mxu0 0.0
  %2923 = vmatprep.subr.mxu0 0.0
  %2924 = vmatpush1.msra.mxu0 0.0
  %2925 = vmatprep.subr.mxu0 0.0
  %2926 = vmatpush1.msra.mxu0 0.0
  %2927 = vmatprep.subr.mxu0 0.0
  %2928 = vmatpush1.msra.mxu0 0.0
  %2929 = vmatprep.mubr.f32.mxu0 0.0
  %2930 = vmatmul.mubr.f32.gmra.mrb[0].mxu0 %v2863
  %v2931 = vpop.f32.mrb[0].mxu0
  %v2932 = vadd.f32 %v2557, %v2931
  %v2933 = vpop.f32.mrb[0].mxu0
  %2934 = vdwg.mxu0
  %v2935 = vxor.u32 %v2932, 2147483648
  %v2936 = vmul.f32 %v2935, 1.442695
  %v2937 = vpow.pop %v2936
  %v2938 = vadd.f32 %v2937, 1.0
  %v2939 = vrcp.pop %v2938
  %v2940 = vmul.f32 1.0, %v2939
  %v2941 = vtanh.pop %v2932
  %v2942 = vmul.f32 %v2940, %v2853
  %2944 = vrot.lane.b32.xlu0 %v2941, 32
  %v2945 = vpop.permute.xlu0 %2944
  %v2947 = vmul.f32 %v2940, %v2945
  %2949 = vrot.lane.b32.xlu0 %v2947, 32
  %v2950 = vpop.permute.xlu0 %2949
  %v2952 = vadd.f32 %v2942, %v2950
  %v2953 = vtanh.pop %v2952
  %2955 = vrot.lane.b32.xlu0 %v2953, 32
  %v2956 = vpop.permute.xlu0 %2955
  %v2958 = vmul.f32 %v2940, %v2956
  %2960 = vrot.lane.b32.xlu0 %v2958, 64
  %v2961 = vpop.permute.xlu0 %2960
  %v2962 = vsel %vm1210, %v2961, 0
  %2964 = vmatprep.subr.mxu0 0.0
  %2965 = vmatpush1.msra.mxu0 %v2548
  %2966 = vmatprep.subr.mxu0 0.0
  %2967 = vmatpush1.msra.mxu0 %v2549
  %2968 = vmatprep.subr.mxu0 0.0
  %2969 = vmatpush1.msra.mxu0 %v2550
  %2970 = vmatprep.subr.mxu0 0.0
  %2971 = vmatpush1.msra.mxu0 %v2551
  %2972 = vmatprep.subr.mxu0 0.0
  %2973 = vmatpush1.msra.mxu0 0.0
  %2974 = vmatprep.subr.mxu0 0.0
  %2975 = vmatpush1.msra.mxu0 0.0
  %2976 = vmatprep.subr.mxu0 0.0
  %2977 = vmatpush1.msra.mxu0 0.0
  %2978 = vmatprep.subr.mxu0 0.0
  %2979 = vmatpush1.msra.mxu0 0.0
  %2980 = vmatprep.subr.mxu0 0.0
  %2981 = vmatpush1.msra.mxu0 0.0
  %2982 = vmatprep.subr.mxu0 0.0
  %2983 = vmatpush1.msra.mxu0 0.0
  %2984 = vmatprep.subr.mxu0 0.0
  %2985 = vmatpush1.msra.mxu0 0.0
  %2986 = vmatprep.subr.mxu0 0.0
  %2987 = vmatpush1.msra.mxu0 0.0
  %2988 = vmatprep.subr.mxu0 0.0
  %2989 = vmatpush1.msra.mxu0 0.0
  %2990 = vmatprep.subr.mxu0 0.0
  %2991 = vmatpush1.msra.mxu0 0.0
  %2992 = vmatprep.subr.mxu0 0.0
  %2993 = vmatpush1.msra.mxu0 0.0
  %2994 = vmatprep.subr.mxu0 0.0
  %2995 = vmatpush1.msra.mxu0 0.0
  %2996 = vmatprep.subr.mxu0 0.0
  %2997 = vmatpush1.msra.mxu0 0.0
  %2998 = vmatprep.subr.mxu0 0.0
  %2999 = vmatpush1.msra.mxu0 0.0
  %3000 = vmatprep.subr.mxu0 0.0
  %3001 = vmatpush1.msra.mxu0 0.0
  %3002 = vmatprep.subr.mxu0 0.0
  %3003 = vmatpush1.msra.mxu0 0.0
  %3004 = vmatprep.subr.mxu0 0.0
  %3005 = vmatpush1.msra.mxu0 0.0
  %3006 = vmatprep.subr.mxu0 0.0
  %3007 = vmatpush1.msra.mxu0 0.0
  %3008 = vmatprep.subr.mxu0 0.0
  %3009 = vmatpush1.msra.mxu0 0.0
  %3010 = vmatprep.subr.mxu0 0.0
  %3011 = vmatpush1.msra.mxu0 0.0
  %3012 = vmatprep.subr.mxu0 0.0
  %3013 = vmatpush1.msra.mxu0 0.0
  %3014 = vmatprep.subr.mxu0 0.0
  %3015 = vmatpush1.msra.mxu0 0.0
  %3016 = vmatprep.subr.mxu0 0.0
  %3017 = vmatpush1.msra.mxu0 0.0
  %3018 = vmatprep.subr.mxu0 0.0
  %3019 = vmatpush1.msra.mxu0 0.0
  %3020 = vmatprep.subr.mxu0 0.0
  %3021 = vmatpush1.msra.mxu0 0.0
  %3022 = vmatprep.subr.mxu0 0.0
  %3023 = vmatpush1.msra.mxu0 0.0
  %3024 = vmatprep.subr.mxu0 0.0
  %3025 = vmatpush1.msra.mxu0 0.0
  %3026 = vmatprep.subr.mxu0 0.0
  %3027 = vmatpush1.msra.mxu0 0.0
  %3028 = vmatprep.mubr.f32.mxu0 0.0
  %3029 = vmatmul.mubr.f32.gmra.mrb[0].mxu0 %v2962
  %v3030 = vpop.f32.mrb[0].mxu0
  %v3031 = vadd.f32 %v2557, %v3030
  %v3032 = vpop.f32.mrb[0].mxu0
  %3033 = vdwg.mxu0
  %v3034 = vxor.u32 %v3031, 2147483648
  %v3035 = vmul.f32 %v3034, 1.442695
  %v3036 = vpow.pop %v3035
  %v3037 = vadd.f32 %v3036, 1.0
  %v3038 = vrcp.pop %v3037
  %v3039 = vmul.f32 1.0, %v3038
  %v3040 = vtanh.pop %v3031
  %v3041 = vmul.f32 %v3039, %v2952
  %3043 = vrot.lane.b32.xlu0 %v3040, 32
  %v3044 = vpop.permute.xlu0 %3043
  %v3046 = vmul.f32 %v3039, %v3044
  %3048 = vrot.lane.b32.xlu0 %v3046, 32
  %v3049 = vpop.permute.xlu0 %3048
  %v3051 = vadd.f32 %v3041, %v3049
  %v3052 = vtanh.pop %v3051
  %3054 = vrot.lane.b32.xlu0 %v3052, 32
  %v3055 = vpop.permute.xlu0 %3054
  %v3057 = vmul.f32 %v3039, %v3055
  %3059 = vrot.lane.b32.xlu0 %v3057, 64
  %v3060 = vpop.permute.xlu0 %3059
  %v3061 = vsel %vm1210, %v3060, 0
  %3063 = vmatprep.subr.mxu0 0.0
  %3064 = vmatpush1.msra.mxu0 %v2548
  %3065 = vmatprep.subr.mxu0 0.0
  %3066 = vmatpush1.msra.mxu0 %v2549
  %3067 = vmatprep.subr.mxu0 0.0
  %3068 = vmatpush1.msra.mxu0 %v2550
  %3069 = vmatprep.subr.mxu0 0.0
  %3070 = vmatpush1.msra.mxu0 %v2551
  %3071 = vmatprep.subr.mxu0 0.0
  %3072 = vmatpush1.msra.mxu0 0.0
  %3073 = vmatprep.subr.mxu0 0.0
  %3074 = vmatpush1.msra.mxu0 0.0
  %3075 = vmatprep.subr.mxu0 0.0
  %3076 = vmatpush1.msra.mxu0 0.0
  %3077 = vmatprep.subr.mxu0 0.0
  %3078 = vmatpush1.msra.mxu0 0.0
  %3079 = vmatprep.subr.mxu0 0.0
  %3080 = vmatpush1.msra.mxu0 0.0
  %3081 = vmatprep.subr.mxu0 0.0
  %3082 = vmatpush1.msra.mxu0 0.0
  %3083 = vmatprep.subr.mxu0 0.0
  %3084 = vmatpush1.msra.mxu0 0.0
  %3085 = vmatprep.subr.mxu0 0.0
  %3086 = vmatpush1.msra.mxu0 0.0
  %3087 = vmatprep.subr.mxu0 0.0
  %3088 = vmatpush1.msra.mxu0 0.0
  %3089 = vmatprep.subr.mxu0 0.0
  %3090 = vmatpush1.msra.mxu0 0.0
  %3091 = vmatprep.subr.mxu0 0.0
  %3092 = vmatpush1.msra.mxu0 0.0
  %3093 = vmatprep.subr.mxu0 0.0
  %3094 = vmatpush1.msra.mxu0 0.0
  %3095 = vmatprep.subr.mxu0 0.0
  %3096 = vmatpush1.msra.mxu0 0.0
  %3097 = vmatprep.subr.mxu0 0.0
  %3098 = vmatpush1.msra.mxu0 0.0
  %3099 = vmatprep.subr.mxu0 0.0
  %3100 = vmatpush1.msra.mxu0 0.0
  %3101 = vmatprep.subr.mxu0 0.0
  %3102 = vmatpush1.msra.mxu0 0.0
  %3103 = vmatprep.subr.mxu0 0.0
  %3104 = vmatpush1.msra.mxu0 0.0
  %3105 = vmatprep.subr.mxu0 0.0
  %3106 = vmatpush1.msra.mxu0 0.0
  %3107 = vmatprep.subr.mxu0 0.0
  %3108 = vmatpush1.msra.mxu0 0.0
  %3109 = vmatprep.subr.mxu0 0.0
  %3110 = vmatpush1.msra.mxu0 0.0
  %3111 = vmatprep.subr.mxu0 0.0
  %3112 = vmatpush1.msra.mxu0 0.0
  %3113 = vmatprep.subr.mxu0 0.0
  %3114 = vmatpush1.msra.mxu0 0.0
  %3115 = vmatprep.subr.mxu0 0.0
  %3116 = vmatpush1.msra.mxu0 0.0
  %3117 = vmatprep.subr.mxu0 0.0
  %3118 = vmatpush1.msra.mxu0 0.0
  %3119 = vmatprep.subr.mxu0 0.0
  %3120 = vmatpush1.msra.mxu0 0.0
  %3121 = vmatprep.subr.mxu0 0.0
  %3122 = vmatpush1.msra.mxu0 0.0
  %3123 = vmatprep.subr.mxu0 0.0
  %3124 = vmatpush1.msra.mxu0 0.0
  %3125 = vmatprep.subr.mxu0 0.0
  %3126 = vmatpush1.msra.mxu0 0.0
  %3127 = vmatprep.mubr.f32.mxu0 0.0
  %3128 = vmatmul.mubr.f32.gmra.mrb[0].mxu0 %v3061
  %v3129 = vpop.f32.mrb[0].mxu0
  %v3130 = vadd.f32 %v2557, %v3129
  %v3131 = vpop.f32.mrb[0].mxu0
  %3132 = vdwg.mxu0
  %v3133 = vxor.u32 %v3130, 2147483648
  %v3134 = vmul.f32 %v3133, 1.442695
  %v3135 = vpow.pop %v3134
  %v3136 = vadd.f32 %v3135, 1.0
  %v3137 = vrcp.pop %v3136
  %v3138 = vmul.f32 1.0, %v3137
  %v3139 = vtanh.pop %v3130
  %v3140 = vmul.f32 %v3138, %v3051
  %3142 = vrot.lane.b32.xlu0 %v3139, 32
  %v3143 = vpop.permute.xlu0 %3142
  %v3145 = vmul.f32 %v3138, %v3143
  %3147 = vrot.lane.b32.xlu0 %v3145, 32
  %v3148 = vpop.permute.xlu0 %3147
  %v3150 = vadd.f32 %v3140, %v3148
  %v3151 = vtanh.pop %v3150
  %3153 = vrot.lane.b32.xlu0 %v3151, 32
  %v3154 = vpop.permute.xlu0 %3153
  %v3156 = vmul.f32 %v3138, %v3154
  %3158 = vrot.lane.b32.xlu0 %v3156, 64
  %v3159 = vpop.permute.xlu0 %3158
  %v3160 = vsel %vm1210, %v3159, 0
  %3162 = vmatprep.subr.mxu0 0.0
  %3163 = vmatpush1.msra.mxu0 %v2548
  %3164 = vmatprep.subr.mxu0 0.0
  %3165 = vmatpush1.msra.mxu0 %v2549
  %3166 = vmatprep.subr.mxu0 0.0
  %3167 = vmatpush1.msra.mxu0 %v2550
  %3168 = vmatprep.subr.mxu0 0.0
  %3169 = vmatpush1.msra.mxu0 %v2551
  %3170 = vmatprep.subr.mxu0 0.0
  %3171 = vmatpush1.msra.mxu0 0.0
  %3172 = vmatprep.subr.mxu0 0.0
  %3173 = vmatpush1.msra.mxu0 0.0
  %3174 = vmatprep.subr.mxu0 0.0
  %3175 = vmatpush1.msra.mxu0 0.0
  %3176 = vmatprep.subr.mxu0 0.0
  %3177 = vmatpush1.msra.mxu0 0.0
  %3178 = vmatprep.subr.mxu0 0.0
  %3179 = vmatpush1.msra.mxu0 0.0
  %3180 = vmatprep.subr.mxu0 0.0
  %3181 = vmatpush1.msra.mxu0 0.0
  %3182 = vmatprep.subr.mxu0 0.0
  %3183 = vmatpush1.msra.mxu0 0.0
  %3184 = vmatprep.subr.mxu0 0.0
  %3185 = vmatpush1.msra.mxu0 0.0
  %3186 = vmatprep.subr.mxu0 0.0
  %3187 = vmatpush1.msra.mxu0 0.0
  %3188 = vmatprep.subr.mxu0 0.0
  %3189 = vmatpush1.msra.mxu0 0.0
  %3190 = vmatprep.subr.mxu0 0.0
  %3191 = vmatpush1.msra.mxu0 0.0
  %3192 = vmatprep.subr.mxu0 0.0
  %3193 = vmatpush1.msra.mxu0 0.0
  %3194 = vmatprep.subr.mxu0 0.0
  %3195 = vmatpush1.msra.mxu0 0.0
  %3196 = vmatprep.subr.mxu0 0.0
  %3197 = vmatpush1.msra.mxu0 0.0
  %3198 = vmatprep.subr.mxu0 0.0
  %3199 = vmatpush1.msra.mxu0 0.0
  %3200 = vmatprep.subr.mxu0 0.0
  %3201 = vmatpush1.msra.mxu0 0.0
  %3202 = vmatprep.subr.mxu0 0.0
  %3203 = vmatpush1.msra.mxu0 0.0
  %3204 = vmatprep.subr.mxu0 0.0
  %3205 = vmatpush1.msra.mxu0 0.0
  %3206 = vmatprep.subr.mxu0 0.0
  %3207 = vmatpush1.msra.mxu0 0.0
  %3208 = vmatprep.subr.mxu0 0.0
  %3209 = vmatpush1.msra.mxu0 0.0
  %3210 = vmatprep.subr.mxu0 0.0
  %3211 = vmatpush1.msra.mxu0 0.0
  %3212 = vmatprep.subr.mxu0 0.0
  %3213 = vmatpush1.msra.mxu0 0.0
  %3214 = vmatprep.subr.mxu0 0.0
  %3215 = vmatpush1.msra.mxu0 0.0
  %3216 = vmatprep.subr.mxu0 0.0
  %3217 = vmatpush1.msra.mxu0 0.0
  %3218 = vmatprep.subr.mxu0 0.0
  %3219 = vmatpush1.msra.mxu0 0.0
  %3220 = vmatprep.subr.mxu0 0.0
  %3221 = vmatpush1.msra.mxu0 0.0
  %3222 = vmatprep.subr.mxu0 0.0
  %3223 = vmatpush1.msra.mxu0 0.0
  %3224 = vmatprep.subr.mxu0 0.0
  %3225 = vmatpush1.msra.mxu0 0.0
  %3226 = vmatprep.mubr.f32.mxu0 0.0
  %3227 = vmatmul.mubr.f32.gmra.mrb[0].mxu0 %v3160
  %v3228 = vpop.f32.mrb[0].mxu0
  %v3229 = vadd.f32 %v2557, %v3228
  %v3230 = vpop.f32.mrb[0].mxu0
  %3231 = vdwg.mxu0
  %v3232 = vxor.u32 %v3229, 2147483648
  %v3233 = vmul.f32 %v3232, 1.442695
  %v3234 = vpow.pop %v3233
  %v3235 = vadd.f32 %v3234, 1.0
  %v3236 = vrcp.pop %v3235
  %v3237 = vmul.f32 1.0, %v3236
  %v3238 = vtanh.pop %v3229
  %v3239 = vmul.f32 %v3237, %v3150
  %3241 = vrot.lane.b32.xlu0 %v3238, 32
  %v3242 = vpop.permute.xlu0 %3241
  %v3244 = vmul.f32 %v3237, %v3242
  %3246 = vrot.lane.b32.xlu0 %v3244, 32
  %v3247 = vpop.permute.xlu0 %3246
  %v3249 = vadd.f32 %v3239, %v3247
  %v3250 = vtanh.pop %v3249
  %3252 = vrot.lane.b32.xlu0 %v3250, 32
  %v3253 = vpop.permute.xlu0 %3252
  %v3255 = vmul.f32 %v3237, %v3253
  %v3256 = vrot.slane %v2661, 4
  %v3258 = vrot.slane %v2859, 4
  %v3260 = vrot.slane %v3057, 4
  %v3263 = vrot.slane %v3255, 4
  %v3265 = vsel %vm1296, %v2547, %v3256
  %v3266 = vsel %vm1296, %v2760, %v3258
  %v3267 = vsel %vm1296, %v2958, %v3260
  %v3268 = vsel %vm1296, %v3156, %v3263
  %v3269 = vld [vmem:[%s57] sm:$0xff]
  %v3270 = vld [vmem:[%s57 + $0x8] sm:$0xff]
  %v3271 = vld [vmem:[%s57 + $0x10] sm:$0xff]
  %v3272 = vld [vmem:[%s57 + $0x18] sm:$0xff]
  %v3273 = vld [vmem:[%s59] sm:$0x1]
  %v3275 = vlaneseq
  %v3276 = vshrl.u32 %v3275, 7
  %v3277 = vsub.s32 0, %v3276
  %v3278 = vrot.slane %v3273, %v3277
  %3284 = vrot.lane.b32.xlu0 %v3265, 64
  %v3285 = vpop.permute.xlu0 %3284
  %3286 = vrot.lane.b32.xlu0 %v3266, 64
  %v3287 = vpop.permute.xlu0 %3286
  %3288 = vrot.lane.b32.xlu0 %v3267, 64
  %v3289 = vpop.permute.xlu0 %3288
  %3290 = vrot.lane.b32.xlu0 %v3268, 64
  %v3291 = vpop.permute.xlu0 %3290
  %v3292 = vsel %vm1210, %v3285, 0
  %v3294 = vsel %vm1210, %v3287, 0
  %v3296 = vsel %vm1210, %v3289, 0
  %v3298 = vsel %vm1210, %v3291, 0
  %3300 = vmatprep.subr.mxu0 0.0
  %3301 = vmatpush1.msra.mxu0 %v3269
  %3302 = vmatprep.subr.mxu0 0.0
  %3303 = vmatpush1.msra.mxu0 %v3270
  %3304 = vmatprep.subr.mxu0 0.0
  %3305 = vmatpush1.msra.mxu0 %v3271
  %3306 = vmatprep.subr.mxu0 0.0
  %3307 = vmatpush1.msra.mxu0 %v3272
  %3308 = vmatprep.subr.mxu0 0.0
  %3309 = vmatpush1.msra.mxu0 0.0
  %3310 = vmatprep.subr.mxu0 0.0
  %3311 = vmatpush1.msra.mxu0 0.0
  %3312 = vmatprep.subr.mxu0 0.0
  %3313 = vmatpush1.msra.mxu0 0.0
  %3314 = vmatprep.subr.mxu0 0.0
  %3315 = vmatpush1.msra.mxu0 0.0
  %3316 = vmatprep.subr.mxu0 0.0
  %3317 = vmatpush1.msra.mxu0 0.0
  %3318 = vmatprep.subr.mxu0 0.0
  %3319 = vmatpush1.msra.mxu0 0.0
  %3320 = vmatprep.subr.mxu0 0.0
  %3321 = vmatpush1.msra.mxu0 0.0
  %3322 = vmatprep.subr.mxu0 0.0
  %3323 = vmatpush1.msra.mxu0 0.0
  %3324 = vmatprep.subr.mxu0 0.0
  %3325 = vmatpush1.msra.mxu0 0.0
  %3326 = vmatprep.subr.mxu0 0.0
  %3327 = vmatpush1.msra.mxu0 0.0
  %3328 = vmatprep.subr.mxu0 0.0
  %3329 = vmatpush1.msra.mxu0 0.0
  %3330 = vmatprep.subr.mxu0 0.0
  %3331 = vmatpush1.msra.mxu0 0.0
  %3332 = vmatprep.subr.mxu0 0.0
  %3333 = vmatpush1.msra.mxu0 0.0
  %3334 = vmatprep.subr.mxu0 0.0
  %3335 = vmatpush1.msra.mxu0 0.0
  %3336 = vmatprep.subr.mxu0 0.0
  %3337 = vmatpush1.msra.mxu0 0.0
  %3338 = vmatprep.subr.mxu0 0.0
  %3339 = vmatpush1.msra.mxu0 0.0
  %3340 = vmatprep.subr.mxu0 0.0
  %3341 = vmatpush1.msra.mxu0 0.0
  %3342 = vmatprep.subr.mxu0 0.0
  %3343 = vmatpush1.msra.mxu0 0.0
  %3344 = vmatprep.subr.mxu0 0.0
  %3345 = vmatpush1.msra.mxu0 0.0
  %3346 = vmatprep.subr.mxu0 0.0
  %3347 = vmatpush1.msra.mxu0 0.0
  %3348 = vmatprep.subr.mxu0 0.0
  %3349 = vmatpush1.msra.mxu0 0.0
  %3350 = vmatprep.subr.mxu0 0.0
  %3351 = vmatpush1.msra.mxu0 0.0
  %3352 = vmatprep.subr.mxu0 0.0
  %3353 = vmatpush1.msra.mxu0 0.0
  %3354 = vmatprep.subr.mxu0 0.0
  %3355 = vmatpush1.msra.mxu0 0.0
  %3356 = vmatprep.subr.mxu0 0.0
  %3357 = vmatpush1.msra.mxu0 0.0
  %3358 = vmatprep.subr.mxu0 0.0
  %3359 = vmatpush1.msra.mxu0 0.0
  %3360 = vmatprep.subr.mxu0 0.0
  %3361 = vmatpush1.msra.mxu0 0.0
  %3362 = vmatprep.subr.mxu0 0.0
  %3363 = vmatpush1.msra.mxu0 0.0
  %3364 = vmatprep.mubr.f32.mxu0 0.0
  %3365 = vmatmul.mubr.f32.gmra.mrb[0].mxu0 %v3292
  %v3366 = vpop.f32.mrb[0].mxu0
  %v3367 = vadd.f32 %v3278, %v3366
  %v3368 = vpop.f32.mrb[0].mxu0
  %3369 = vmatprep.mubr.f32.mxu0 0.0
  %3370 = vmatmul.mubr.f32.gmra.mrb[0].mxu0 %v3294
  %v3371 = vpop.f32.mrb[0].mxu0
  %v3372 = vadd.f32 %v3278, %v3371
  %v3373 = vpop.f32.mrb[0].mxu0
  %3374 = vmatprep.mubr.f32.mxu0 0.0
  %3375 = vmatmul.mubr.f32.gmra.mrb[0].mxu0 %v3296
  %v3376 = vpop.f32.mrb[0].mxu0
  %v3377 = vadd.f32 %v3278, %v3376
  %v3378 = vpop.f32.mrb[0].mxu0
  %3379 = vmatprep.mubr.f32.mxu0 0.0
  %3380 = vmatmul.mubr.f32.gmra.mrb[0].mxu0 %v3298
  %v3381 = vpop.f32.mrb[0].mxu0
  %v3382 = vadd.f32 %v3278, %v3381
  %v3383 = vpop.f32.mrb[0].mxu0
  %3384 = vdwg.mxu0
  %vm3385 = vcmask 15360
  %3386 = vst.msk [vmem:[%s61] sm:$0xff] %vm3385, %v3367
  %3387 = vst.msk [vmem:[%s61 + $0x8] sm:$0xff] %vm3385, %v3372
  %3388 = vst.msk [vmem:[%s61 + $0x10] sm:$0xff] %vm3385, %v3377
  %3389 = vst.msk [vmem:[%s61 + $0x18] sm:$0xff] %vm3385, %v3382
  // Predicated region
  $region122: #{_traj_gen_jit.1} parent=0 // pred_check
    _
  $region123: #{_traj_gen_jit.1} parent=0 // pred_check_branch
    %3391 = sbr.rel (0) target = $region125
  $region124: #{_traj_gen_jit.1} parent=0 // pred_region
    _
  $region125: #{_traj_gen_jit.1} parent=0 // pred_fallthru
    _
  // Predicated region
  $region126: #{_traj_gen_jit.1} parent=0 // pred_check
    _
  $region127: #{_traj_gen_jit.1} parent=0 // pred_check_branch
    %3393 = sbr.rel (0) target = $region129
  $region128: #{_traj_gen_jit.1} parent=0 // pred_region
    _
  $region129: #{_traj_gen_jit.1} parent=0 // pred_fallthru
    _

</llo_original>
